<compile_context>
chip_gen: v7x
topology: tpu7x:2x2x1
jax: 0.10.0
libtpu: 0.0.40
codegen_flags: <defaults>
</compile_context>

<pallas_src>
import math
from functools import partial

import jax
import jax.numpy as jnp
from jax import lax
from jax.experimental import pallas as pl
from jax.experimental.pallas import tpu as pltpu


# ------------------------------ fused kernel ------------------------------- #

def convnext_block_kernel(x_ref, dww_ref, dwb_ref, g_ref, beta_ref,
                          w1_ref, b1_ref, w2_ref, b2_ref, gamma_ref,
                          o_ref, pad_ref, *, H, W, C, TH, eps):
    # x_ref   : (1, H, W, C)       full image (NHWC), re-used across row strips
    # dww_ref : (7, 7, C)          depthwise weights ; dwb_ref: (1, C) bias
    # g/beta  : (1, C)             LayerNorm scale / shift
    # w1/b1   : (C, 4C) / (1, 4C)  pw_conv1 ;  w2/b2: (4C, C) / (1, C) pw_conv2
    # gamma   : (1, C)             layer scale
    # o_ref   : (1, TH, W, C)      output row strip
    # pad_ref : (H+6, W+6, C) f32  VMEM scratch: zero-padded image, built at strip 0
    s = pl.program_id(1)

    # ---- build the zero-padded image in VMEM once per image (strip 0) ----
    @pl.when(s == 0)
    def _():
        pad_ref[...] = jnp.zeros((H + 6, W + 6, C), jnp.float32)
        pad_ref[pl.ds(3, H), pl.ds(3, W), :] = x_ref[0].astype(jnp.float32)

    h0 = pl.multiple_of(s * TH, TH)

    # ---- depthwise 7x7 conv for this row strip (stays in VMEM / vregs) ----
    acc = jnp.zeros((TH, W, C), jnp.float32)
    for dx in range(7):
        # one sublane-shifted slab load per dx (7 total, instead of 49 shifted slices)
        slab = pad_ref[pl.ds(h0, TH + 6), pl.ds(dx, W), :]        # (TH+6, W, C)
        for dy in range(7):
            # dy slices are free major-axis selections of the slab
            acc = acc + slab[dy:dy + TH] * dww_ref[dy, dx, :].astype(jnp.float32)
    dw = acc + dwb_ref[0].astype(jnp.float32)                     # (TH, W, C)

    # ---- LayerNorm (channels_last) + MLP (C -> 4C -> C) + GELU + layer scale ----
    rows = dw.reshape(TH * W, C)                                  # leading-dim merge only
    mu = jnp.mean(rows, axis=-1, keepdims=True)
    var = jnp.mean((rows - mu) ** 2, axis=-1, keepdims=True)
    xn = (rows - mu) * lax.rsqrt(var + eps)
    xn = xn * g_ref[0].astype(jnp.float32) + beta_ref[0].astype(jnp.float32)

    # TODO(synk): at production dims (C >= 96) on v6e/v7x, cast xn/h and w1/w2 to bf16
    # (keep preferred_element_type=f32) for 2-4x MXU throughput; f32 kept here so the
    # toy test matches the f32 reference at tight tolerance.
    h = jnp.dot(xn, w1_ref[...].astype(jnp.float32),
                preferred_element_type=jnp.float32) + b1_ref[0].astype(jnp.float32)
    # exact (erf) GELU — matches torch.nn.GELU() default
    h = 0.5 * h * (1.0 + lax.erf(h * jnp.float32(1.0 / math.sqrt(2.0))))
    y = jnp.dot(h, w2_ref[...].astype(jnp.float32),
                preferred_element_type=jnp.float32) + b2_ref[0].astype(jnp.float32)
    y = y * gamma_ref[0].astype(jnp.float32)

    # This module literally does `x = x + self.drop_path(x)` AFTER overwriting x
    # (drop_path == Identity), so the returned value is 2 * y.
    o_ref[0] = (2.0 * y).reshape(TH, W, C).astype(o_ref.dtype)


# -------------------------------- wrapper ---------------------------------- #

def _pick_row_tile(H, target=8):
    th = min(target, H)
    while H % th:
        th -= 1
    return th


def convnext_block(x_nchw, params, *, eps=1e-6, row_tile=8):
    N, C, H, W = x_nchw.shape
    # NCHW -> NHWC at the module boundary (channel goes on the lane axis in-kernel).
    x = jnp.transpose(x_nchw, (0, 2, 3, 1))
    TH = _pick_row_tile(H, row_tile)
    S = H // TH

    out = pl.pallas_call(
        partial(convnext_block_kernel, H=H, W=W, C=C, TH=TH, eps=eps),
        out_shape=jax.ShapeDtypeStruct((N, H, W, C), x.dtype),
        grid_spec=pltpu.PrefetchScalarGridSpec(
            num_scalar_prefetch=0,
            grid=(N, S),
            in_specs=[
                # full image; same block index across strips -> DMA'd once per image
                pl.BlockSpec((1, H, W, C), lambda n, s: (n, 0, 0, 0)),
                pl.BlockSpec((7, 7, C), lambda n, s: (0, 0, 0)),      # dw weights
                pl.BlockSpec((1, C), lambda n, s: (0, 0)),            # dw bias
                pl.BlockSpec((1, C), lambda n, s: (0, 0)),            # ln weight
                pl.BlockSpec((1, C), lambda n, s: (0, 0)),            # ln bias
                pl.BlockSpec((C, 4 * C), lambda n, s: (0, 0)),        # w1 (C,4C)
                pl.BlockSpec((1, 4 * C), lambda n, s: (0, 0)),        # b1
                pl.BlockSpec((4 * C, C), lambda n, s: (0, 0)),        # w2 (4C,C)
                pl.BlockSpec((1, C), lambda n, s: (0, 0)),            # b2
                pl.BlockSpec((1, C), lambda n, s: (0, 0)),            # gamma
            ],
            out_specs=pl.BlockSpec((1, TH, W, C), lambda n, s: (n, s, 0, 0)),
            scratch_shapes=[pltpu.VMEM((H + 6, W + 6, C), jnp.float32)],
        ),
        compiler_params=pltpu.CompilerParams(
            # batch axis may split across cores; strip axis stays sequential so the
            # per-image padded scratch built at s == 0 remains valid for s > 0.
            dimension_semantics=("parallel", "arbitrary")),
    )(x, params["dw_w"], params["dw_b"], params["ln_g"], params["ln_b"],
      params["w1"], params["b1"], params["w2"], params["b2"], params["gamma"])

    return jnp.transpose(out, (0, 3, 1, 2))            # NHWC -> NCHW


# --------------------------- pure-JAX reference ---------------------------- #

def reference(x_nchw, params, eps=1e-6):
    N, C, H, W = x_nchw.shape
    x = jnp.transpose(x_nchw, (0, 2, 3, 1))
    rhs = params["dw_w"][:, :, None, :]                # (7,7,1,C) HWIO, depthwise
    dw = lax.conv_general_dilated(
        x, rhs, window_strides=(1, 1), padding=((3, 3), (3, 3)),
        dimension_numbers=("NHWC", "HWIO", "NHWC"),
        feature_group_count=C) + params["dw_b"][0]
    mu = dw.mean(-1, keepdims=True)
    var = ((dw - mu) ** 2).mean(-1, keepdims=True)
    xn = (dw - mu) / jnp.sqrt(var + eps) * params["ln_g"][0] + params["ln_b"][0]
    h = xn @ params["w1"] + params["b1"][0]
    h = 0.5 * h * (1.0 + lax.erf(h / jnp.sqrt(jnp.float32(2.0))))
    y = h @ params["w2"] + params["b2"][0]
    y = y * params["gamma"][0]
    out = 2.0 * y
    return jnp.transpose(out, (0, 3, 1, 2))


# --------------------------------- main ------------------------------------ #

if __name__ == "__main__":
    N, C, H, W = 2, 16, 16, 16
    layer_scale_init_value = 1e-6

    key = jax.random.PRNGKey(0)
    k = jax.random.split(key, 8)
    x = jax.random.normal(k[0], (N, C, H, W), jnp.float32)

    params = {
        # depthwise conv: torch weight (C,1,7,7) stored here as (7,7,C)
        "dw_w": 0.1 * jax.random.normal(k[1], (7, 7, C), jnp.float32),
        "dw_b": 0.1 * jax.random.normal(k[2], (1, C), jnp.float32),
        # LayerNorm
        "ln_g": jnp.ones((1, C), jnp.float32),
        "ln_b": jnp.zeros((1, C), jnp.float32),
        # pw_conv1: torch Linear(dim, 4*dim) weight (4C,C) stored transposed (C,4C)
        "w1": 0.1 * jax.random.normal(k[3], (C, 4 * C), jnp.float32),
        "b1": 0.1 * jax.random.normal(k[4], (1, 4 * C), jnp.float32),
        # pw_conv2: torch Linear(4*dim, dim) weight (C,4C) stored transposed (4C,C)
        "w2": 0.1 * jax.random.normal(k[5], (4 * C, C), jnp.float32),
        "b2": 0.1 * jax.random.normal(k[6], (1, C), jnp.float32),
        # layer scale gamma (init exactly as in the module)
        "gamma": layer_scale_init_value * jnp.ones((1, C), jnp.float32),
    }

    out = jax.block_until_ready(convnext_block(x, params))
    ref = jax.block_until_ready(reference(x, params))

    assert out.shape == (N, C, H, W)
    assert bool(jnp.allclose(out, ref, rtol=1e-4, atol=1e-8)), "mismatch vs reference"

    print("KERNEL_OK")
</pallas_src>

<mosaic_0001>
module attributes {stable_mosaic.version = 11 : i64} {
  func.func @convnext_block_kernel(%arg0: i32, %arg1: i32, %arg2: memref<1x16x16x16xf32, #tpu.memory_space<vmem>>, %arg3: memref<7x7x16xf32, #tpu.memory_space<vmem>>, %arg4: memref<1x16xf32, #tpu.memory_space<vmem>>, %arg5: memref<1x16xf32, #tpu.memory_space<vmem>>, %arg6: memref<1x16xf32, #tpu.memory_space<vmem>>, %arg7: memref<16x64xf32, #tpu.memory_space<vmem>>, %arg8: memref<1x64xf32, #tpu.memory_space<vmem>>, %arg9: memref<64x16xf32, #tpu.memory_space<vmem>>, %arg10: memref<1x16xf32, #tpu.memory_space<vmem>>, %arg11: memref<1x16xf32, #tpu.memory_space<vmem>>, %arg12: memref<1x8x16x16xf32, #tpu.memory_space<vmem>>, %arg13: memref<22x22x16xf32, #tpu.memory_space<vmem>>) attributes {dimension_semantics = [#tpu.dimension_semantics<parallel>, #tpu.dimension_semantics<arbitrary>], iteration_bounds = array<i64: 2, 2>, scalar_prefetch = 0 : i64, scratch_operands = 1 : i64, tpu.core_type = #tpu.core_type<tc>, window_params = [{transform_indices = @transform_0, window_bounds = array<i64: 1, 16, 16, 16>}, {pipeline_mode = #tpu.pipeline_mode<synchronous>, transform_indices = @transform_1, window_bounds = array<i64: 7, 7, 16>}, {pipeline_mode = #tpu.pipeline_mode<synchronous>, transform_indices = @transform_2, window_bounds = array<i64: 1, 16>}, {pipeline_mode = #tpu.pipeline_mode<synchronous>, transform_indices = @transform_3, window_bounds = array<i64: 1, 16>}, {pipeline_mode = #tpu.pipeline_mode<synchronous>, transform_indices = @transform_4, window_bounds = array<i64: 1, 16>}, {pipeline_mode = #tpu.pipeline_mode<synchronous>, transform_indices = @transform_5, window_bounds = array<i64: 16, 64>}, {pipeline_mode = #tpu.pipeline_mode<synchronous>, transform_indices = @transform_6, window_bounds = array<i64: 1, 64>}, {pipeline_mode = #tpu.pipeline_mode<synchronous>, transform_indices = @transform_7, window_bounds = array<i64: 64, 16>}, {pipeline_mode = #tpu.pipeline_mode<synchronous>, transform_indices = @transform_8, window_bounds = array<i64: 1, 16>}, {pipeline_mode = #tpu.pipeline_mode<synchronous>, transform_indices = @transform_9, window_bounds = array<i64: 1, 16>}, {transform_indices = @transform_10, window_bounds = array<i64: 1, 8, 16, 16>}]} {
    %c0_i32 = arith.constant 0 : i32
    %0 = arith.cmpi eq, %arg1, %c0_i32 : i32
    %1 = arith.extui %0 : i1 to i32
    %c0_i32_0 = arith.constant 0 : i32
    %2 = arith.cmpi ne, %1, %c0_i32_0 : i32
    scf.if %2 {
      %cst_186 = arith.constant 0.000000e+00 : f32
      %430 = vector.broadcast %cst_186 : f32 to vector<22x22x16xf32>
      %c0_187 = arith.constant 0 : index
      %c0_188 = arith.constant 0 : index
      %c0_189 = arith.constant 0 : index
      %431 = vector.load %arg13[%c0_187, %c0_188, %c0_189] : memref<22x22x16xf32, #tpu.memory_space<vmem>>, vector<22x22x16xf32>
      tpu.vector_store %arg13[%c0_187, %c0_188, %c0_189], %430 {strides = array<i32>} : memref<22x22x16xf32, #tpu.memory_space<vmem>>, vector<22x22x16xf32>,
      %c0_190 = arith.constant 0 : index
      %c0_191 = arith.constant 0 : index
      %c0_192 = arith.constant 0 : index
      %c0_193 = arith.constant 0 : index
      %432 = vector.load %arg2[%c0_190, %c0_191, %c0_192, %c0_193] : memref<1x16x16x16xf32, #tpu.memory_space<vmem>>, vector<1x16x16x16xf32>
      %433 = vector.shape_cast %432 : vector<1x16x16x16xf32> to vector<16x16x16xf32>
      %c3_194 = arith.constant 3 : index
      %c3_195 = arith.constant 3 : index
      %c0_196 = arith.constant 0 : index
      %434 = vector.load %arg13[%c3_194, %c3_195, %c0_196] : memref<22x22x16xf32, #tpu.memory_space<vmem>>, vector<16x16x16xf32>
      tpu.vector_store %arg13[%c3_194, %c3_195, %c0_196], %433 {strides = array<i32>} : memref<22x22x16xf32, #tpu.memory_space<vmem>>, vector<16x16x16xf32>,
    } else {
    }
    %c8_i32 = arith.constant 8 : i32
    %3 = arith.muli %arg1, %c8_i32 : i32
    %4 = tpu.assume_multiple %3, 8 : i32
    %cst = arith.constant 0.000000e+00 : f32
    %5 = vector.broadcast %cst : f32 to vector<8x16x16xf32>
    %6 = arith.index_cast %4 : i32 to index
    %c0 = arith.constant 0 : index
    %c0_1 = arith.constant 0 : index
    %7 = vector.load %arg13[%6, %c0, %c0_1] : memref<22x22x16xf32, #tpu.memory_space<vmem>>, vector<14x16x16xf32>
    %8 = vector.extract_strided_slice %7 {offsets = [0, 0, 0], sizes = [8, 16, 16], strides = [1, 1, 1]} : vector<14x16x16xf32> to vector<8x16x16xf32>
    %c0_2 = arith.constant 0 : index
    %c0_3 = arith.constant 0 : index
    %c0_4 = arith.constant 0 : index
    %9 = vector.load %arg3[%c0_2, %c0_3, %c0_4] : memref<7x7x16xf32, #tpu.memory_space<vmem>>, vector<1x1x16xf32>
    %10 = vector.shape_cast %9 : vector<1x1x16xf32> to vector<16xf32>
    %11 = vector.shape_cast %10 : vector<16xf32> to vector<1x1x16xf32>
    %12 = vector.broadcast %11 : vector<1x1x16xf32> to vector<8x16x16xf32>
    %13 = arith.mulf %8, %12 : vector<8x16x16xf32>
    %14 = arith.addf %5, %13 : vector<8x16x16xf32>
    %15 = vector.extract_strided_slice %7 {offsets = [1, 0, 0], sizes = [8, 16, 16], strides = [1, 1, 1]} : vector<14x16x16xf32> to vector<8x16x16xf32>
    %c1 = arith.constant 1 : index
    %c0_5 = arith.constant 0 : index
    %c0_6 = arith.constant 0 : index
    %16 = vector.load %arg3[%c1, %c0_5, %c0_6] : memref<7x7x16xf32, #tpu.memory_space<vmem>>, vector<1x1x16xf32>
    %17 = vector.shape_cast %16 : vector<1x1x16xf32> to vector<16xf32>
    %18 = vector.shape_cast %17 : vector<16xf32> to vector<1x1x16xf32>
    %19 = vector.broadcast %18 : vector<1x1x16xf32> to vector<8x16x16xf32>
    %20 = arith.mulf %15, %19 : vector<8x16x16xf32>
    %21 = arith.addf %14, %20 : vector<8x16x16xf32>
    %22 = vector.extract_strided_slice %7 {offsets = [2, 0, 0], sizes = [8, 16, 16], strides = [1, 1, 1]} : vector<14x16x16xf32> to vector<8x16x16xf32>
    %c2 = arith.constant 2 : index
    %c0_7 = arith.constant 0 : index
    %c0_8 = arith.constant 0 : index
    %23 = vector.load %arg3[%c2, %c0_7, %c0_8] : memref<7x7x16xf32, #tpu.memory_space<vmem>>, vector<1x1x16xf32>
    %24 = vector.shape_cast %23 : vector<1x1x16xf32> to vector<16xf32>
    %25 = vector.shape_cast %24 : vector<16xf32> to vector<1x1x16xf32>
    %26 = vector.broadcast %25 : vector<1x1x16xf32> to vector<8x16x16xf32>
    %27 = arith.mulf %22, %26 : vector<8x16x16xf32>
    %28 = arith.addf %21, %27 : vector<8x16x16xf32>
    %29 = vector.extract_strided_slice %7 {offsets = [3, 0, 0], sizes = [8, 16, 16], strides = [1, 1, 1]} : vector<14x16x16xf32> to vector<8x16x16xf32>
    %c3 = arith.constant 3 : index
    %c0_9 = arith.constant 0 : index
    %c0_10 = arith.constant 0 : index
    %30 = vector.load %arg3[%c3, %c0_9, %c0_10] : memref<7x7x16xf32, #tpu.memory_space<vmem>>, vector<1x1x16xf32>
    %31 = vector.shape_cast %30 : vector<1x1x16xf32> to vector<16xf32>
    %32 = vector.shape_cast %31 : vector<16xf32> to vector<1x1x16xf32>
    %33 = vector.broadcast %32 : vector<1x1x16xf32> to vector<8x16x16xf32>
    %34 = arith.mulf %29, %33 : vector<8x16x16xf32>
    %35 = arith.addf %28, %34 : vector<8x16x16xf32>
    %36 = vector.extract_strided_slice %7 {offsets = [4, 0, 0], sizes = [8, 16, 16], strides = [1, 1, 1]} : vector<14x16x16xf32> to vector<8x16x16xf32>
    %c4 = arith.constant 4 : index
    %c0_11 = arith.constant 0 : index
    %c0_12 = arith.constant 0 : index
    %37 = vector.load %arg3[%c4, %c0_11, %c0_12] : memref<7x7x16xf32, #tpu.memory_space<vmem>>, vector<1x1x16xf32>
    %38 = vector.shape_cast %37 : vector<1x1x16xf32> to vector<16xf32>
    %39 = vector.shape_cast %38 : vector<16xf32> to vector<1x1x16xf32>
    %40 = vector.broadcast %39 : vector<1x1x16xf32> to vector<8x16x16xf32>
    %41 = arith.mulf %36, %40 : vector<8x16x16xf32>
    %42 = arith.addf %35, %41 : vector<8x16x16xf32>
    %43 = vector.extract_strided_slice %7 {offsets = [5, 0, 0], sizes = [8, 16, 16], strides = [1, 1, 1]} : vector<14x16x16xf32> to vector<8x16x16xf32>
    %c5 = arith.constant 5 : index
    %c0_13 = arith.constant 0 : index
    %c0_14 = arith.constant 0 : index
    %44 = vector.load %arg3[%c5, %c0_13, %c0_14] : memref<7x7x16xf32, #tpu.memory_space<vmem>>, vector<1x1x16xf32>
    %45 = vector.shape_cast %44 : vector<1x1x16xf32> to vector<16xf32>
    %46 = vector.shape_cast %45 : vector<16xf32> to vector<1x1x16xf32>
    %47 = vector.broadcast %46 : vector<1x1x16xf32> to vector<8x16x16xf32>
    %48 = arith.mulf %43, %47 : vector<8x16x16xf32>
    %49 = arith.addf %42, %48 : vector<8x16x16xf32>
    %50 = vector.extract_strided_slice %7 {offsets = [6, 0, 0], sizes = [8, 16, 16], strides = [1, 1, 1]} : vector<14x16x16xf32> to vector<8x16x16xf32>
    %c6 = arith.constant 6 : index
    %c0_15 = arith.constant 0 : index
    %c0_16 = arith.constant 0 : index
    %51 = vector.load %arg3[%c6, %c0_15, %c0_16] : memref<7x7x16xf32, #tpu.memory_space<vmem>>, vector<1x1x16xf32>
    %52 = vector.shape_cast %51 : vector<1x1x16xf32> to vector<16xf32>
    %53 = vector.shape_cast %52 : vector<16xf32> to vector<1x1x16xf32>
    %54 = vector.broadcast %53 : vector<1x1x16xf32> to vector<8x16x16xf32>
    %55 = arith.mulf %50, %54 : vector<8x16x16xf32>
    %56 = arith.addf %49, %55 : vector<8x16x16xf32>
    %57 = arith.index_cast %4 : i32 to index
    %c1_17 = arith.constant 1 : index
    %c0_18 = arith.constant 0 : index
    %58 = vector.load %arg13[%57, %c1_17, %c0_18] : memref<22x22x16xf32, #tpu.memory_space<vmem>>, vector<14x16x16xf32>
    %59 = vector.extract_strided_slice %58 {offsets = [0, 0, 0], sizes = [8, 16, 16], strides = [1, 1, 1]} : vector<14x16x16xf32> to vector<8x16x16xf32>
    %c0_19 = arith.constant 0 : index
    %c1_20 = arith.constant 1 : index
    %c0_21 = arith.constant 0 : index
    %60 = vector.load %arg3[%c0_19, %c1_20, %c0_21] : memref<7x7x16xf32, #tpu.memory_space<vmem>>, vector<1x1x16xf32>
    %61 = vector.shape_cast %60 : vector<1x1x16xf32> to vector<16xf32>
    %62 = vector.shape_cast %61 : vector<16xf32> to vector<1x1x16xf32>
    %63 = vector.broadcast %62 : vector<1x1x16xf32> to vector<8x16x16xf32>
    %64 = arith.mulf %59, %63 : vector<8x16x16xf32>
    %65 = arith.addf %56, %64 : vector<8x16x16xf32>
    %66 = vector.extract_strided_slice %58 {offsets = [1, 0, 0], sizes = [8, 16, 16], strides = [1, 1, 1]} : vector<14x16x16xf32> to vector<8x16x16xf32>
    %c1_22 = arith.constant 1 : index
    %c1_23 = arith.constant 1 : index
    %c0_24 = arith.constant 0 : index
    %67 = vector.load %arg3[%c1_22, %c1_23, %c0_24] : memref<7x7x16xf32, #tpu.memory_space<vmem>>, vector<1x1x16xf32>
    %68 = vector.shape_cast %67 : vector<1x1x16xf32> to vector<16xf32>
    %69 = vector.shape_cast %68 : vector<16xf32> to vector<1x1x16xf32>
    %70 = vector.broadcast %69 : vector<1x1x16xf32> to vector<8x16x16xf32>
    %71 = arith.mulf %66, %70 : vector<8x16x16xf32>
    %72 = arith.addf %65, %71 : vector<8x16x16xf32>
    %73 = vector.extract_strided_slice %58 {offsets = [2, 0, 0], sizes = [8, 16, 16], strides = [1, 1, 1]} : vector<14x16x16xf32> to vector<8x16x16xf32>
    %c2_25 = arith.constant 2 : index
    %c1_26 = arith.constant 1 : index
    %c0_27 = arith.constant 0 : index
    %74 = vector.load %arg3[%c2_25, %c1_26, %c0_27] : memref<7x7x16xf32, #tpu.memory_space<vmem>>, vector<1x1x16xf32>
    %75 = vector.shape_cast %74 : vector<1x1x16xf32> to vector<16xf32>
    %76 = vector.shape_cast %75 : vector<16xf32> to vector<1x1x16xf32>
    %77 = vector.broadcast %76 : vector<1x1x16xf32> to vector<8x16x16xf32>
    %78 = arith.mulf %73, %77 : vector<8x16x16xf32>
    %79 = arith.addf %72, %78 : vector<8x16x16xf32>
    %80 = vector.extract_strided_slice %58 {offsets = [3, 0, 0], sizes = [8, 16, 16], strides = [1, 1, 1]} : vector<14x16x16xf32> to vector<8x16x16xf32>
    %c3_28 = arith.constant 3 : index
    %c1_29 = arith.constant 1 : index
    %c0_30 = arith.constant 0 : index
    %81 = vector.load %arg3[%c3_28, %c1_29, %c0_30] : memref<7x7x16xf32, #tpu.memory_space<vmem>>, vector<1x1x16xf32>
    %82 = vector.shape_cast %81 : vector<1x1x16xf32> to vector<16xf32>
    %83 = vector.shape_cast %82 : vector<16xf32> to vector<1x1x16xf32>
    %84 = vector.broadcast %83 : vector<1x1x16xf32> to vector<8x16x16xf32>
    %85 = arith.mulf %80, %84 : vector<8x16x16xf32>
    %86 = arith.addf %79, %85 : vector<8x16x16xf32>
    %87 = vector.extract_strided_slice %58 {offsets = [4, 0, 0], sizes = [8, 16, 16], strides = [1, 1, 1]} : vector<14x16x16xf32> to vector<8x16x16xf32>
    %c4_31 = arith.constant 4 : index
    %c1_32 = arith.constant 1 : index
    %c0_33 = arith.constant 0 : index
    %88 = vector.load %arg3[%c4_31, %c1_32, %c0_33] : memref<7x7x16xf32, #tpu.memory_space<vmem>>, vector<1x1x16xf32>
    %89 = vector.shape_cast %88 : vector<1x1x16xf32> to vector<16xf32>
    %90 = vector.shape_cast %89 : vector<16xf32> to vector<1x1x16xf32>
    %91 = vector.broadcast %90 : vector<1x1x16xf32> to vector<8x16x16xf32>
    %92 = arith.mulf %87, %91 : vector<8x16x16xf32>
    %93 = arith.addf %86, %92 : vector<8x16x16xf32>
    %94 = vector.extract_strided_slice %58 {offsets = [5, 0, 0], sizes = [8, 16, 16], strides = [1, 1, 1]} : vector<14x16x16xf32> to vector<8x16x16xf32>
    %c5_34 = arith.constant 5 : index
    %c1_35 = arith.constant 1 : index
    %c0_36 = arith.constant 0 : index
    %95 = vector.load %arg3[%c5_34, %c1_35, %c0_36] : memref<7x7x16xf32, #tpu.memory_space<vmem>>, vector<1x1x16xf32>
    %96 = vector.shape_cast %95 : vector<1x1x16xf32> to vector<16xf32>
    %97 = vector.shape_cast %96 : vector<16xf32> to vector<1x1x16xf32>
    %98 = vector.broadcast %97 : vector<1x1x16xf32> to vector<8x16x16xf32>
    %99 = arith.mulf %94, %98 : vector<8x16x16xf32>
    %100 = arith.addf %93, %99 : vector<8x16x16xf32>
    %101 = vector.extract_strided_slice %58 {offsets = [6, 0, 0], sizes = [8, 16, 16], strides = [1, 1, 1]} : vector<14x16x16xf32> to vector<8x16x16xf32>
    %c6_37 = arith.constant 6 : index
    %c1_38 = arith.constant 1 : index
    %c0_39 = arith.constant 0 : index
    %102 = vector.load %arg3[%c6_37, %c1_38, %c0_39] : memref<7x7x16xf32, #tpu.memory_space<vmem>>, vector<1x1x16xf32>
    %103 = vector.shape_cast %102 : vector<1x1x16xf32> to vector<16xf32>
    %104 = vector.shape_cast %103 : vector<16xf32> to vector<1x1x16xf32>
    %105 = vector.broadcast %104 : vector<1x1x16xf32> to vector<8x16x16xf32>
    %106 = arith.mulf %101, %105 : vector<8x16x16xf32>
    %107 = arith.addf %100, %106 : vector<8x16x16xf32>
    %108 = arith.index_cast %4 : i32 to index
    %c2_40 = arith.constant 2 : index
    %c0_41 = arith.constant 0 : index
    %109 = vector.load %arg13[%108, %c2_40, %c0_41] : memref<22x22x16xf32, #tpu.memory_space<vmem>>, vector<14x16x16xf32>
    %110 = vector.extract_strided_slice %109 {offsets = [0, 0, 0], sizes = [8, 16, 16], strides = [1, 1, 1]} : vector<14x16x16xf32> to vector<8x16x16xf32>
    %c0_42 = arith.constant 0 : index
    %c2_43 = arith.constant 2 : index
    %c0_44 = arith.constant 0 : index
    %111 = vector.load %arg3[%c0_42, %c2_43, %c0_44] : memref<7x7x16xf32, #tpu.memory_space<vmem>>, vector<1x1x16xf32>
    %112 = vector.shape_cast %111 : vector<1x1x16xf32> to vector<16xf32>
    %113 = vector.shape_cast %112 : vector<16xf32> to vector<1x1x16xf32>
    %114 = vector.broadcast %113 : vector<1x1x16xf32> to vector<8x16x16xf32>
    %115 = arith.mulf %110, %114 : vector<8x16x16xf32>
    %116 = arith.addf %107, %115 : vector<8x16x16xf32>
    %117 = vector.extract_strided_slice %109 {offsets = [1, 0, 0], sizes = [8, 16, 16], strides = [1, 1, 1]} : vector<14x16x16xf32> to vector<8x16x16xf32>
    %c1_45 = arith.constant 1 : index
    %c2_46 = arith.constant 2 : index
    %c0_47 = arith.constant 0 : index
    %118 = vector.load %arg3[%c1_45, %c2_46, %c0_47] : memref<7x7x16xf32, #tpu.memory_space<vmem>>, vector<1x1x16xf32>
    %119 = vector.shape_cast %118 : vector<1x1x16xf32> to vector<16xf32>
    %120 = vector.shape_cast %119 : vector<16xf32> to vector<1x1x16xf32>
    %121 = vector.broadcast %120 : vector<1x1x16xf32> to vector<8x16x16xf32>
    %122 = arith.mulf %117, %121 : vector<8x16x16xf32>
    %123 = arith.addf %116, %122 : vector<8x16x16xf32>
    %124 = vector.extract_strided_slice %109 {offsets = [2, 0, 0], sizes = [8, 16, 16], strides = [1, 1, 1]} : vector<14x16x16xf32> to vector<8x16x16xf32>
    %c2_48 = arith.constant 2 : index
    %c2_49 = arith.constant 2 : index
    %c0_50 = arith.constant 0 : index
    %125 = vector.load %arg3[%c2_48, %c2_49, %c0_50] : memref<7x7x16xf32, #tpu.memory_space<vmem>>, vector<1x1x16xf32>
    %126 = vector.shape_cast %125 : vector<1x1x16xf32> to vector<16xf32>
    %127 = vector.shape_cast %126 : vector<16xf32> to vector<1x1x16xf32>
    %128 = vector.broadcast %127 : vector<1x1x16xf32> to vector<8x16x16xf32>
    %129 = arith.mulf %124, %128 : vector<8x16x16xf32>
    %130 = arith.addf %123, %129 : vector<8x16x16xf32>
    %131 = vector.extract_strided_slice %109 {offsets = [3, 0, 0], sizes = [8, 16, 16], strides = [1, 1, 1]} : vector<14x16x16xf32> to vector<8x16x16xf32>
    %c3_51 = arith.constant 3 : index
    %c2_52 = arith.constant 2 : index
    %c0_53 = arith.constant 0 : index
    %132 = vector.load %arg3[%c3_51, %c2_52, %c0_53] : memref<7x7x16xf32, #tpu.memory_space<vmem>>, vector<1x1x16xf32>
    %133 = vector.shape_cast %132 : vector<1x1x16xf32> to vector<16xf32>
    %134 = vector.shape_cast %133 : vector<16xf32> to vector<1x1x16xf32>
    %135 = vector.broadcast %134 : vector<1x1x16xf32> to vector<8x16x16xf32>
    %136 = arith.mulf %131, %135 : vector<8x16x16xf32>
    %137 = arith.addf %130, %136 : vector<8x16x16xf32>
    %138 = vector.extract_strided_slice %109 {offsets = [4, 0, 0], sizes = [8, 16, 16], strides = [1, 1, 1]} : vector<14x16x16xf32> to vector<8x16x16xf32>
    %c4_54 = arith.constant 4 : index
    %c2_55 = arith.constant 2 : index
    %c0_56 = arith.constant 0 : index
    %139 = vector.load %arg3[%c4_54, %c2_55, %c0_56] : memref<7x7x16xf32, #tpu.memory_space<vmem>>, vector<1x1x16xf32>
    %140 = vector.shape_cast %139 : vector<1x1x16xf32> to vector<16xf32>
    %141 = vector.shape_cast %140 : vector<16xf32> to vector<1x1x16xf32>
    %142 = vector.broadcast %141 : vector<1x1x16xf32> to vector<8x16x16xf32>
    %143 = arith.mulf %138, %142 : vector<8x16x16xf32>
    %144 = arith.addf %137, %143 : vector<8x16x16xf32>
    %145 = vector.extract_strided_slice %109 {offsets = [5, 0, 0], sizes = [8, 16, 16], strides = [1, 1, 1]} : vector<14x16x16xf32> to vector<8x16x16xf32>
    %c5_57 = arith.constant 5 : index
    %c2_58 = arith.constant 2 : index
    %c0_59 = arith.constant 0 : index
    %146 = vector.load %arg3[%c5_57, %c2_58, %c0_59] : memref<7x7x16xf32, #tpu.memory_space<vmem>>, vector<1x1x16xf32>
    %147 = vector.shape_cast %146 : vector<1x1x16xf32> to vector<16xf32>
    %148 = vector.shape_cast %147 : vector<16xf32> to vector<1x1x16xf32>
    %149 = vector.broadcast %148 : vector<1x1x16xf32> to vector<8x16x16xf32>
    %150 = arith.mulf %145, %149 : vector<8x16x16xf32>
    %151 = arith.addf %144, %150 : vector<8x16x16xf32>
    %152 = vector.extract_strided_slice %109 {offsets = [6, 0, 0], sizes = [8, 16, 16], strides = [1, 1, 1]} : vector<14x16x16xf32> to vector<8x16x16xf32>
    %c6_60 = arith.constant 6 : index
    %c2_61 = arith.constant 2 : index
    %c0_62 = arith.constant 0 : index
    %153 = vector.load %arg3[%c6_60, %c2_61, %c0_62] : memref<7x7x16xf32, #tpu.memory_space<vmem>>, vector<1x1x16xf32>
    %154 = vector.shape_cast %153 : vector<1x1x16xf32> to vector<16xf32>
    %155 = vector.shape_cast %154 : vector<16xf32> to vector<1x1x16xf32>
    %156 = vector.broadcast %155 : vector<1x1x16xf32> to vector<8x16x16xf32>
    %157 = arith.mulf %152, %156 : vector<8x16x16xf32>
    %158 = arith.addf %151, %157 : vector<8x16x16xf32>
    %159 = arith.index_cast %4 : i32 to index
    %c3_63 = arith.constant 3 : index
    %c0_64 = arith.constant 0 : index
    %160 = vector.load %arg13[%159, %c3_63, %c0_64] : memref<22x22x16xf32, #tpu.memory_space<vmem>>, vector<14x16x16xf32>
    %161 = vector.extract_strided_slice %160 {offsets = [0, 0, 0], sizes = [8, 16, 16], strides = [1, 1, 1]} : vector<14x16x16xf32> to vector<8x16x16xf32>
    %c0_65 = arith.constant 0 : index
    %c3_66 = arith.constant 3 : index
    %c0_67 = arith.constant 0 : index
    %162 = vector.load %arg3[%c0_65, %c3_66, %c0_67] : memref<7x7x16xf32, #tpu.memory_space<vmem>>, vector<1x1x16xf32>
    %163 = vector.shape_cast %162 : vector<1x1x16xf32> to vector<16xf32>
    %164 = vector.shape_cast %163 : vector<16xf32> to vector<1x1x16xf32>
    %165 = vector.broadcast %164 : vector<1x1x16xf32> to vector<8x16x16xf32>
    %166 = arith.mulf %161, %165 : vector<8x16x16xf32>
    %167 = arith.addf %158, %166 : vector<8x16x16xf32>
    %168 = vector.extract_strided_slice %160 {offsets = [1, 0, 0], sizes = [8, 16, 16], strides = [1, 1, 1]} : vector<14x16x16xf32> to vector<8x16x16xf32>
    %c1_68 = arith.constant 1 : index
    %c3_69 = arith.constant 3 : index
    %c0_70 = arith.constant 0 : index
    %169 = vector.load %arg3[%c1_68, %c3_69, %c0_70] : memref<7x7x16xf32, #tpu.memory_space<vmem>>, vector<1x1x16xf32>
    %170 = vector.shape_cast %169 : vector<1x1x16xf32> to vector<16xf32>
    %171 = vector.shape_cast %170 : vector<16xf32> to vector<1x1x16xf32>
    %172 = vector.broadcast %171 : vector<1x1x16xf32> to vector<8x16x16xf32>
    %173 = arith.mulf %168, %172 : vector<8x16x16xf32>
    %174 = arith.addf %167, %173 : vector<8x16x16xf32>
    %175 = vector.extract_strided_slice %160 {offsets = [2, 0, 0], sizes = [8, 16, 16], strides = [1, 1, 1]} : vector<14x16x16xf32> to vector<8x16x16xf32>
    %c2_71 = arith.constant 2 : index
    %c3_72 = arith.constant 3 : index
    %c0_73 = arith.constant 0 : index
    %176 = vector.load %arg3[%c2_71, %c3_72, %c0_73] : memref<7x7x16xf32, #tpu.memory_space<vmem>>, vector<1x1x16xf32>
    %177 = vector.shape_cast %176 : vector<1x1x16xf32> to vector<16xf32>
    %178 = vector.shape_cast %177 : vector<16xf32> to vector<1x1x16xf32>
    %179 = vector.broadcast %178 : vector<1x1x16xf32> to vector<8x16x16xf32>
    %180 = arith.mulf %175, %179 : vector<8x16x16xf32>
    %181 = arith.addf %174, %180 : vector<8x16x16xf32>
    %182 = vector.extract_strided_slice %160 {offsets = [3, 0, 0], sizes = [8, 16, 16], strides = [1, 1, 1]} : vector<14x16x16xf32> to vector<8x16x16xf32>
    %c3_74 = arith.constant 3 : index
    %c3_75 = arith.constant 3 : index
    %c0_76 = arith.constant 0 : index
    %183 = vector.load %arg3[%c3_74, %c3_75, %c0_76] : memref<7x7x16xf32, #tpu.memory_space<vmem>>, vector<1x1x16xf32>
    %184 = vector.shape_cast %183 : vector<1x1x16xf32> to vector<16xf32>
    %185 = vector.shape_cast %184 : vector<16xf32> to vector<1x1x16xf32>
    %186 = vector.broadcast %185 : vector<1x1x16xf32> to vector<8x16x16xf32>
    %187 = arith.mulf %182, %186 : vector<8x16x16xf32>
    %188 = arith.addf %181, %187 : vector<8x16x16xf32>
    %189 = vector.extract_strided_slice %160 {offsets = [4, 0, 0], sizes = [8, 16, 16], strides = [1, 1, 1]} : vector<14x16x16xf32> to vector<8x16x16xf32>
    %c4_77 = arith.constant 4 : index
    %c3_78 = arith.constant 3 : index
    %c0_79 = arith.constant 0 : index
    %190 = vector.load %arg3[%c4_77, %c3_78, %c0_79] : memref<7x7x16xf32, #tpu.memory_space<vmem>>, vector<1x1x16xf32>
    %191 = vector.shape_cast %190 : vector<1x1x16xf32> to vector<16xf32>
    %192 = vector.shape_cast %191 : vector<16xf32> to vector<1x1x16xf32>
    %193 = vector.broadcast %192 : vector<1x1x16xf32> to vector<8x16x16xf32>
    %194 = arith.mulf %189, %193 : vector<8x16x16xf32>
    %195 = arith.addf %188, %194 : vector<8x16x16xf32>
    %196 = vector.extract_strided_slice %160 {offsets = [5, 0, 0], sizes = [8, 16, 16], strides = [1, 1, 1]} : vector<14x16x16xf32> to vector<8x16x16xf32>
    %c5_80 = arith.constant 5 : index
    %c3_81 = arith.constant 3 : index
    %c0_82 = arith.constant 0 : index
    %197 = vector.load %arg3[%c5_80, %c3_81, %c0_82] : memref<7x7x16xf32, #tpu.memory_space<vmem>>, vector<1x1x16xf32>
    %198 = vector.shape_cast %197 : vector<1x1x16xf32> to vector<16xf32>
    %199 = vector.shape_cast %198 : vector<16xf32> to vector<1x1x16xf32>
    %200 = vector.broadcast %199 : vector<1x1x16xf32> to vector<8x16x16xf32>
    %201 = arith.mulf %196, %200 : vector<8x16x16xf32>
    %202 = arith.addf %195, %201 : vector<8x16x16xf32>
    %203 = vector.extract_strided_slice %160 {offsets = [6, 0, 0], sizes = [8, 16, 16], strides = [1, 1, 1]} : vector<14x16x16xf32> to vector<8x16x16xf32>
    %c6_83 = arith.constant 6 : index
    %c3_84 = arith.constant 3 : index
    %c0_85 = arith.constant 0 : index
    %204 = vector.load %arg3[%c6_83, %c3_84, %c0_85] : memref<7x7x16xf32, #tpu.memory_space<vmem>>, vector<1x1x16xf32>
    %205 = vector.shape_cast %204 : vector<1x1x16xf32> to vector<16xf32>
    %206 = vector.shape_cast %205 : vector<16xf32> to vector<1x1x16xf32>
    %207 = vector.broadcast %206 : vector<1x1x16xf32> to vector<8x16x16xf32>
    %208 = arith.mulf %203, %207 : vector<8x16x16xf32>
    %209 = arith.addf %202, %208 : vector<8x16x16xf32>
    %210 = arith.index_cast %4 : i32 to index
    %c4_86 = arith.constant 4 : index
    %c0_87 = arith.constant 0 : index
    %211 = vector.load %arg13[%210, %c4_86, %c0_87] : memref<22x22x16xf32, #tpu.memory_space<vmem>>, vector<14x16x16xf32>
    %212 = vector.extract_strided_slice %211 {offsets = [0, 0, 0], sizes = [8, 16, 16], strides = [1, 1, 1]} : vector<14x16x16xf32> to vector<8x16x16xf32>
    %c0_88 = arith.constant 0 : index
    %c4_89 = arith.constant 4 : index
    %c0_90 = arith.constant 0 : index
    %213 = vector.load %arg3[%c0_88, %c4_89, %c0_90] : memref<7x7x16xf32, #tpu.memory_space<vmem>>, vector<1x1x16xf32>
    %214 = vector.shape_cast %213 : vector<1x1x16xf32> to vector<16xf32>
    %215 = vector.shape_cast %214 : vector<16xf32> to vector<1x1x16xf32>
    %216 = vector.broadcast %215 : vector<1x1x16xf32> to vector<8x16x16xf32>
    %217 = arith.mulf %212, %216 : vector<8x16x16xf32>
    %218 = arith.addf %209, %217 : vector<8x16x16xf32>
    %219 = vector.extract_strided_slice %211 {offsets = [1, 0, 0], sizes = [8, 16, 16], strides = [1, 1, 1]} : vector<14x16x16xf32> to vector<8x16x16xf32>
    %c1_91 = arith.constant 1 : index
    %c4_92 = arith.constant 4 : index
    %c0_93 = arith.constant 0 : index
    %220 = vector.load %arg3[%c1_91, %c4_92, %c0_93] : memref<7x7x16xf32, #tpu.memory_space<vmem>>, vector<1x1x16xf32>
    %221 = vector.shape_cast %220 : vector<1x1x16xf32> to vector<16xf32>
    %222 = vector.shape_cast %221 : vector<16xf32> to vector<1x1x16xf32>
    %223 = vector.broadcast %222 : vector<1x1x16xf32> to vector<8x16x16xf32>
    %224 = arith.mulf %219, %223 : vector<8x16x16xf32>
    %225 = arith.addf %218, %224 : vector<8x16x16xf32>
    %226 = vector.extract_strided_slice %211 {offsets = [2, 0, 0], sizes = [8, 16, 16], strides = [1, 1, 1]} : vector<14x16x16xf32> to vector<8x16x16xf32>
    %c2_94 = arith.constant 2 : index
    %c4_95 = arith.constant 4 : index
    %c0_96 = arith.constant 0 : index
    %227 = vector.load %arg3[%c2_94, %c4_95, %c0_96] : memref<7x7x16xf32, #tpu.memory_space<vmem>>, vector<1x1x16xf32>
    %228 = vector.shape_cast %227 : vector<1x1x16xf32> to vector<16xf32>
    %229 = vector.shape_cast %228 : vector<16xf32> to vector<1x1x16xf32>
    %230 = vector.broadcast %229 : vector<1x1x16xf32> to vector<8x16x16xf32>
    %231 = arith.mulf %226, %230 : vector<8x16x16xf32>
    %232 = arith.addf %225, %231 : vector<8x16x16xf32>
    %233 = vector.extract_strided_slice %211 {offsets = [3, 0, 0], sizes = [8, 16, 16], strides = [1, 1, 1]} : vector<14x16x16xf32> to vector<8x16x16xf32>
    %c3_97 = arith.constant 3 : index
    %c4_98 = arith.constant 4 : index
    %c0_99 = arith.constant 0 : index
    %234 = vector.load %arg3[%c3_97, %c4_98, %c0_99] : memref<7x7x16xf32, #tpu.memory_space<vmem>>, vector<1x1x16xf32>
    %235 = vector.shape_cast %234 : vector<1x1x16xf32> to vector<16xf32>
    %236 = vector.shape_cast %235 : vector<16xf32> to vector<1x1x16xf32>
    %237 = vector.broadcast %236 : vector<1x1x16xf32> to vector<8x16x16xf32>
    %238 = arith.mulf %233, %237 : vector<8x16x16xf32>
    %239 = arith.addf %232, %238 : vector<8x16x16xf32>
    %240 = vector.extract_strided_slice %211 {offsets = [4, 0, 0], sizes = [8, 16, 16], strides = [1, 1, 1]} : vector<14x16x16xf32> to vector<8x16x16xf32>
    %c4_100 = arith.constant 4 : index
    %c4_101 = arith.constant 4 : index
    %c0_102 = arith.constant 0 : index
    %241 = vector.load %arg3[%c4_100, %c4_101, %c0_102] : memref<7x7x16xf32, #tpu.memory_space<vmem>>, vector<1x1x16xf32>
    %242 = vector.shape_cast %241 : vector<1x1x16xf32> to vector<16xf32>
    %243 = vector.shape_cast %242 : vector<16xf32> to vector<1x1x16xf32>
    %244 = vector.broadcast %243 : vector<1x1x16xf32> to vector<8x16x16xf32>
    %245 = arith.mulf %240, %244 : vector<8x16x16xf32>
    %246 = arith.addf %239, %245 : vector<8x16x16xf32>
    %247 = vector.extract_strided_slice %211 {offsets = [5, 0, 0], sizes = [8, 16, 16], strides = [1, 1, 1]} : vector<14x16x16xf32> to vector<8x16x16xf32>
    %c5_103 = arith.constant 5 : index
    %c4_104 = arith.constant 4 : index
    %c0_105 = arith.constant 0 : index
    %248 = vector.load %arg3[%c5_103, %c4_104, %c0_105] : memref<7x7x16xf32, #tpu.memory_space<vmem>>, vector<1x1x16xf32>
    %249 = vector.shape_cast %248 : vector<1x1x16xf32> to vector<16xf32>
    %250 = vector.shape_cast %249 : vector<16xf32> to vector<1x1x16xf32>
    %251 = vector.broadcast %250 : vector<1x1x16xf32> to vector<8x16x16xf32>
    %252 = arith.mulf %247, %251 : vector<8x16x16xf32>
    %253 = arith.addf %246, %252 : vector<8x16x16xf32>
    %254 = vector.extract_strided_slice %211 {offsets = [6, 0, 0], sizes = [8, 16, 16], strides = [1, 1, 1]} : vector<14x16x16xf32> to vector<8x16x16xf32>
    %c6_106 = arith.constant 6 : index
    %c4_107 = arith.constant 4 : index
    %c0_108 = arith.constant 0 : index
    %255 = vector.load %arg3[%c6_106, %c4_107, %c0_108] : memref<7x7x16xf32, #tpu.memory_space<vmem>>, vector<1x1x16xf32>
    %256 = vector.shape_cast %255 : vector<1x1x16xf32> to vector<16xf32>
    %257 = vector.shape_cast %256 : vector<16xf32> to vector<1x1x16xf32>
    %258 = vector.broadcast %257 : vector<1x1x16xf32> to vector<8x16x16xf32>
    %259 = arith.mulf %254, %258 : vector<8x16x16xf32>
    %260 = arith.addf %253, %259 : vector<8x16x16xf32>
    %261 = arith.index_cast %4 : i32 to index
    %c5_109 = arith.constant 5 : index
    %c0_110 = arith.constant 0 : index
    %262 = vector.load %arg13[%261, %c5_109, %c0_110] : memref<22x22x16xf32, #tpu.memory_space<vmem>>, vector<14x16x16xf32>
    %263 = vector.extract_strided_slice %262 {offsets = [0, 0, 0], sizes = [8, 16, 16], strides = [1, 1, 1]} : vector<14x16x16xf32> to vector<8x16x16xf32>
    %c0_111 = arith.constant 0 : index
    %c5_112 = arith.constant 5 : index
    %c0_113 = arith.constant 0 : index
    %264 = vector.load %arg3[%c0_111, %c5_112, %c0_113] : memref<7x7x16xf32, #tpu.memory_space<vmem>>, vector<1x1x16xf32>
    %265 = vector.shape_cast %264 : vector<1x1x16xf32> to vector<16xf32>
    %266 = vector.shape_cast %265 : vector<16xf32> to vector<1x1x16xf32>
    %267 = vector.broadcast %266 : vector<1x1x16xf32> to vector<8x16x16xf32>
    %268 = arith.mulf %263, %267 : vector<8x16x16xf32>
    %269 = arith.addf %260, %268 : vector<8x16x16xf32>
    %270 = vector.extract_strided_slice %262 {offsets = [1, 0, 0], sizes = [8, 16, 16], strides = [1, 1, 1]} : vector<14x16x16xf32> to vector<8x16x16xf32>
    %c1_114 = arith.constant 1 : index
    %c5_115 = arith.constant 5 : index
    %c0_116 = arith.constant 0 : index
    %271 = vector.load %arg3[%c1_114, %c5_115, %c0_116] : memref<7x7x16xf32, #tpu.memory_space<vmem>>, vector<1x1x16xf32>
    %272 = vector.shape_cast %271 : vector<1x1x16xf32> to vector<16xf32>
    %273 = vector.shape_cast %272 : vector<16xf32> to vector<1x1x16xf32>
    %274 = vector.broadcast %273 : vector<1x1x16xf32> to vector<8x16x16xf32>
    %275 = arith.mulf %270, %274 : vector<8x16x16xf32>
    %276 = arith.addf %269, %275 : vector<8x16x16xf32>
    %277 = vector.extract_strided_slice %262 {offsets = [2, 0, 0], sizes = [8, 16, 16], strides = [1, 1, 1]} : vector<14x16x16xf32> to vector<8x16x16xf32>
    %c2_117 = arith.constant 2 : index
    %c5_118 = arith.constant 5 : index
    %c0_119 = arith.constant 0 : index
    %278 = vector.load %arg3[%c2_117, %c5_118, %c0_119] : memref<7x7x16xf32, #tpu.memory_space<vmem>>, vector<1x1x16xf32>
    %279 = vector.shape_cast %278 : vector<1x1x16xf32> to vector<16xf32>
    %280 = vector.shape_cast %279 : vector<16xf32> to vector<1x1x16xf32>
    %281 = vector.broadcast %280 : vector<1x1x16xf32> to vector<8x16x16xf32>
    %282 = arith.mulf %277, %281 : vector<8x16x16xf32>
    %283 = arith.addf %276, %282 : vector<8x16x16xf32>
    %284 = vector.extract_strided_slice %262 {offsets = [3, 0, 0], sizes = [8, 16, 16], strides = [1, 1, 1]} : vector<14x16x16xf32> to vector<8x16x16xf32>
    %c3_120 = arith.constant 3 : index
    %c5_121 = arith.constant 5 : index
    %c0_122 = arith.constant 0 : index
    %285 = vector.load %arg3[%c3_120, %c5_121, %c0_122] : memref<7x7x16xf32, #tpu.memory_space<vmem>>, vector<1x1x16xf32>
    %286 = vector.shape_cast %285 : vector<1x1x16xf32> to vector<16xf32>
    %287 = vector.shape_cast %286 : vector<16xf32> to vector<1x1x16xf32>
    %288 = vector.broadcast %287 : vector<1x1x16xf32> to vector<8x16x16xf32>
    %289 = arith.mulf %284, %288 : vector<8x16x16xf32>
    %290 = arith.addf %283, %289 : vector<8x16x16xf32>
    %291 = vector.extract_strided_slice %262 {offsets = [4, 0, 0], sizes = [8, 16, 16], strides = [1, 1, 1]} : vector<14x16x16xf32> to vector<8x16x16xf32>
    %c4_123 = arith.constant 4 : index
    %c5_124 = arith.constant 5 : index
    %c0_125 = arith.constant 0 : index
    %292 = vector.load %arg3[%c4_123, %c5_124, %c0_125] : memref<7x7x16xf32, #tpu.memory_space<vmem>>, vector<1x1x16xf32>
    %293 = vector.shape_cast %292 : vector<1x1x16xf32> to vector<16xf32>
    %294 = vector.shape_cast %293 : vector<16xf32> to vector<1x1x16xf32>
    %295 = vector.broadcast %294 : vector<1x1x16xf32> to vector<8x16x16xf32>
    %296 = arith.mulf %291, %295 : vector<8x16x16xf32>
    %297 = arith.addf %290, %296 : vector<8x16x16xf32>
    %298 = vector.extract_strided_slice %262 {offsets = [5, 0, 0], sizes = [8, 16, 16], strides = [1, 1, 1]} : vector<14x16x16xf32> to vector<8x16x16xf32>
    %c5_126 = arith.constant 5 : index
    %c5_127 = arith.constant 5 : index
    %c0_128 = arith.constant 0 : index
    %299 = vector.load %arg3[%c5_126, %c5_127, %c0_128] : memref<7x7x16xf32, #tpu.memory_space<vmem>>, vector<1x1x16xf32>
    %300 = vector.shape_cast %299 : vector<1x1x16xf32> to vector<16xf32>
    %301 = vector.shape_cast %300 : vector<16xf32> to vector<1x1x16xf32>
    %302 = vector.broadcast %301 : vector<1x1x16xf32> to vector<8x16x16xf32>
    %303 = arith.mulf %298, %302 : vector<8x16x16xf32>
    %304 = arith.addf %297, %303 : vector<8x16x16xf32>
    %305 = vector.extract_strided_slice %262 {offsets = [6, 0, 0], sizes = [8, 16, 16], strides = [1, 1, 1]} : vector<14x16x16xf32> to vector<8x16x16xf32>
    %c6_129 = arith.constant 6 : index
    %c5_130 = arith.constant 5 : index
    %c0_131 = arith.constant 0 : index
    %306 = vector.load %arg3[%c6_129, %c5_130, %c0_131] : memref<7x7x16xf32, #tpu.memory_space<vmem>>, vector<1x1x16xf32>
    %307 = vector.shape_cast %306 : vector<1x1x16xf32> to vector<16xf32>
    %308 = vector.shape_cast %307 : vector<16xf32> to vector<1x1x16xf32>
    %309 = vector.broadcast %308 : vector<1x1x16xf32> to vector<8x16x16xf32>
    %310 = arith.mulf %305, %309 : vector<8x16x16xf32>
    %311 = arith.addf %304, %310 : vector<8x16x16xf32>
    %312 = arith.index_cast %4 : i32 to index
    %c6_132 = arith.constant 6 : index
    %c0_133 = arith.constant 0 : index
    %313 = vector.load %arg13[%312, %c6_132, %c0_133] : memref<22x22x16xf32, #tpu.memory_space<vmem>>, vector<14x16x16xf32>
    %314 = vector.extract_strided_slice %313 {offsets = [0, 0, 0], sizes = [8, 16, 16], strides = [1, 1, 1]} : vector<14x16x16xf32> to vector<8x16x16xf32>
    %c0_134 = arith.constant 0 : index
    %c6_135 = arith.constant 6 : index
    %c0_136 = arith.constant 0 : index
    %315 = vector.load %arg3[%c0_134, %c6_135, %c0_136] : memref<7x7x16xf32, #tpu.memory_space<vmem>>, vector<1x1x16xf32>
    %316 = vector.shape_cast %315 : vector<1x1x16xf32> to vector<16xf32>
    %317 = vector.shape_cast %316 : vector<16xf32> to vector<1x1x16xf32>
    %318 = vector.broadcast %317 : vector<1x1x16xf32> to vector<8x16x16xf32>
    %319 = arith.mulf %314, %318 : vector<8x16x16xf32>
    %320 = arith.addf %311, %319 : vector<8x16x16xf32>
    %321 = vector.extract_strided_slice %313 {offsets = [1, 0, 0], sizes = [8, 16, 16], strides = [1, 1, 1]} : vector<14x16x16xf32> to vector<8x16x16xf32>
    %c1_137 = arith.constant 1 : index
    %c6_138 = arith.constant 6 : index
    %c0_139 = arith.constant 0 : index
    %322 = vector.load %arg3[%c1_137, %c6_138, %c0_139] : memref<7x7x16xf32, #tpu.memory_space<vmem>>, vector<1x1x16xf32>
    %323 = vector.shape_cast %322 : vector<1x1x16xf32> to vector<16xf32>
    %324 = vector.shape_cast %323 : vector<16xf32> to vector<1x1x16xf32>
    %325 = vector.broadcast %324 : vector<1x1x16xf32> to vector<8x16x16xf32>
    %326 = arith.mulf %321, %325 : vector<8x16x16xf32>
    %327 = arith.addf %320, %326 : vector<8x16x16xf32>
    %328 = vector.extract_strided_slice %313 {offsets = [2, 0, 0], sizes = [8, 16, 16], strides = [1, 1, 1]} : vector<14x16x16xf32> to vector<8x16x16xf32>
    %c2_140 = arith.constant 2 : index
    %c6_141 = arith.constant 6 : index
    %c0_142 = arith.constant 0 : index
    %329 = vector.load %arg3[%c2_140, %c6_141, %c0_142] : memref<7x7x16xf32, #tpu.memory_space<vmem>>, vector<1x1x16xf32>
    %330 = vector.shape_cast %329 : vector<1x1x16xf32> to vector<16xf32>
    %331 = vector.shape_cast %330 : vector<16xf32> to vector<1x1x16xf32>
    %332 = vector.broadcast %331 : vector<1x1x16xf32> to vector<8x16x16xf32>
    %333 = arith.mulf %328, %332 : vector<8x16x16xf32>
    %334 = arith.addf %327, %333 : vector<8x16x16xf32>
    %335 = vector.extract_strided_slice %313 {offsets = [3, 0, 0], sizes = [8, 16, 16], strides = [1, 1, 1]} : vector<14x16x16xf32> to vector<8x16x16xf32>
    %c3_143 = arith.constant 3 : index
    %c6_144 = arith.constant 6 : index
    %c0_145 = arith.constant 0 : index
    %336 = vector.load %arg3[%c3_143, %c6_144, %c0_145] : memref<7x7x16xf32, #tpu.memory_space<vmem>>, vector<1x1x16xf32>
    %337 = vector.shape_cast %336 : vector<1x1x16xf32> to vector<16xf32>
    %338 = vector.shape_cast %337 : vector<16xf32> to vector<1x1x16xf32>
    %339 = vector.broadcast %338 : vector<1x1x16xf32> to vector<8x16x16xf32>
    %340 = arith.mulf %335, %339 : vector<8x16x16xf32>
    %341 = arith.addf %334, %340 : vector<8x16x16xf32>
    %342 = vector.extract_strided_slice %313 {offsets = [4, 0, 0], sizes = [8, 16, 16], strides = [1, 1, 1]} : vector<14x16x16xf32> to vector<8x16x16xf32>
    %c4_146 = arith.constant 4 : index
    %c6_147 = arith.constant 6 : index
    %c0_148 = arith.constant 0 : index
    %343 = vector.load %arg3[%c4_146, %c6_147, %c0_148] : memref<7x7x16xf32, #tpu.memory_space<vmem>>, vector<1x1x16xf32>
    %344 = vector.shape_cast %343 : vector<1x1x16xf32> to vector<16xf32>
    %345 = vector.shape_cast %344 : vector<16xf32> to vector<1x1x16xf32>
    %346 = vector.broadcast %345 : vector<1x1x16xf32> to vector<8x16x16xf32>
    %347 = arith.mulf %342, %346 : vector<8x16x16xf32>
    %348 = arith.addf %341, %347 : vector<8x16x16xf32>
    %349 = vector.extract_strided_slice %313 {offsets = [5, 0, 0], sizes = [8, 16, 16], strides = [1, 1, 1]} : vector<14x16x16xf32> to vector<8x16x16xf32>
    %c5_149 = arith.constant 5 : index
    %c6_150 = arith.constant 6 : index
    %c0_151 = arith.constant 0 : index
    %350 = vector.load %arg3[%c5_149, %c6_150, %c0_151] : memref<7x7x16xf32, #tpu.memory_space<vmem>>, vector<1x1x16xf32>
    %351 = vector.shape_cast %350 : vector<1x1x16xf32> to vector<16xf32>
    %352 = vector.shape_cast %351 : vector<16xf32> to vector<1x1x16xf32>
    %353 = vector.broadcast %352 : vector<1x1x16xf32> to vector<8x16x16xf32>
    %354 = arith.mulf %349, %353 : vector<8x16x16xf32>
    %355 = arith.addf %348, %354 : vector<8x16x16xf32>
    %356 = vector.extract_strided_slice %313 {offsets = [6, 0, 0], sizes = [8, 16, 16], strides = [1, 1, 1]} : vector<14x16x16xf32> to vector<8x16x16xf32>
    %c6_152 = arith.constant 6 : index
    %c6_153 = arith.constant 6 : index
    %c0_154 = arith.constant 0 : index
    %357 = vector.load %arg3[%c6_152, %c6_153, %c0_154] : memref<7x7x16xf32, #tpu.memory_space<vmem>>, vector<1x1x16xf32>
    %358 = vector.shape_cast %357 : vector<1x1x16xf32> to vector<16xf32>
    %359 = vector.shape_cast %358 : vector<16xf32> to vector<1x1x16xf32>
    %360 = vector.broadcast %359 : vector<1x1x16xf32> to vector<8x16x16xf32>
    %361 = arith.mulf %356, %360 : vector<8x16x16xf32>
    %362 = arith.addf %355, %361 : vector<8x16x16xf32>
    %c0_155 = arith.constant 0 : index
    %c0_156 = arith.constant 0 : index
    %363 = vector.load %arg4[%c0_155, %c0_156] : memref<1x16xf32, #tpu.memory_space<vmem>>, vector<1x16xf32>
    %364 = vector.shape_cast %363 : vector<1x16xf32> to vector<16xf32>
    %365 = vector.shape_cast %364 : vector<16xf32> to vector<1x1x16xf32>
    %366 = vector.broadcast %365 : vector<1x1x16xf32> to vector<8x16x16xf32>
    %367 = arith.addf %362, %366 : vector<8x16x16xf32>
    %368 = vector.shape_cast %367 : vector<8x16x16xf32> to vector<128x16xf32>
    %cst_157 = arith.constant dense<0.000000e+00> : vector<128xf32>
    %369 = vector.multi_reduction <add>, %368, %cst_157 [1] : vector<128x16xf32> to vector<128xf32>
    %370 = vector.shape_cast %369 : vector<128xf32> to vector<128x1xf32>
    %cst_158 = arith.constant 1.600000e+01 : f32
    %371 = vector.broadcast %cst_158 : f32 to vector<128x1xf32>
    %372 = arith.divf %370, %371 : vector<128x1xf32>
    %373 = vector.broadcast %372 : vector<128x1xf32> to vector<128x16xf32>
    %374 = arith.subf %368, %373 : vector<128x16xf32>
    %375 = arith.mulf %374, %374 : vector<128x16xf32>
    %cst_159 = arith.constant dense<0.000000e+00> : vector<128xf32>
    %376 = vector.multi_reduction <add>, %375, %cst_159 [1] : vector<128x16xf32> to vector<128xf32>
    %377 = vector.shape_cast %376 : vector<128xf32> to vector<128x1xf32>
    %cst_160 = arith.constant 1.600000e+01 : f32
    %378 = vector.broadcast %cst_160 : f32 to vector<128x1xf32>
    %379 = arith.divf %377, %378 : vector<128x1xf32>
    %380 = vector.broadcast %372 : vector<128x1xf32> to vector<128x16xf32>
    %381 = arith.subf %368, %380 : vector<128x16xf32>
    %cst_161 = arith.constant 9.99999997E-7 : f32
    %382 = vector.broadcast %cst_161 : f32 to vector<128x1xf32>
    %383 = arith.addf %379, %382 : vector<128x1xf32>
    %384 = math.rsqrt %383 : vector<128x1xf32>
    %385 = vector.broadcast %384 : vector<128x1xf32> to vector<128x16xf32>
    %386 = arith.mulf %381, %385 : vector<128x16xf32>
    %c0_162 = arith.constant 0 : index
    %c0_163 = arith.constant 0 : index
    %387 = vector.load %arg5[%c0_162, %c0_163] : memref<1x16xf32, #tpu.memory_space<vmem>>, vector<1x16xf32>
    %388 = vector.shape_cast %387 : vector<1x16xf32> to vector<16xf32>
    %389 = vector.shape_cast %388 : vector<16xf32> to vector<1x16xf32>
    %390 = vector.broadcast %389 : vector<1x16xf32> to vector<128x16xf32>
    %391 = arith.mulf %386, %390 : vector<128x16xf32>
    %c0_164 = arith.constant 0 : index
    %c0_165 = arith.constant 0 : index
    %392 = vector.load %arg6[%c0_164, %c0_165] : memref<1x16xf32, #tpu.memory_space<vmem>>, vector<1x16xf32>
    %393 = vector.shape_cast %392 : vector<1x16xf32> to vector<16xf32>
    %394 = vector.shape_cast %393 : vector<16xf32> to vector<1x16xf32>
    %395 = vector.broadcast %394 : vector<1x16xf32> to vector<128x16xf32>
    %396 = arith.addf %391, %395 : vector<128x16xf32>
    %c0_166 = arith.constant 0 : index
    %c0_167 = arith.constant 0 : index
    %397 = vector.load %arg7[%c0_166, %c0_167] : memref<16x64xf32, #tpu.memory_space<vmem>>, vector<16x64xf32>
    %cst_168 = arith.constant dense<0.000000e+00> : vector<128x64xf32>
    %398 = tpu.matmul %396, %397, %cst_168 {dimension_numbers = #tpu.dot_dimension_numbers<[1], [0], [0], [1], [0, 0, 1, 1], [], []>} : vector<128x16xf32>, vector<16x64xf32>, vector<128x64xf32> -> vector<128x64xf32>
    %c0_169 = arith.constant 0 : index
    %c0_170 = arith.constant 0 : index
    %399 = vector.load %arg8[%c0_169, %c0_170] : memref<1x64xf32, #tpu.memory_space<vmem>>, vector<1x64xf32>
    %400 = vector.shape_cast %399 : vector<1x64xf32> to vector<64xf32>
    %401 = vector.shape_cast %400 : vector<64xf32> to vector<1x64xf32>
    %402 = vector.broadcast %401 : vector<1x64xf32> to vector<128x64xf32>
    %403 = arith.addf %398, %402 : vector<128x64xf32>
    %cst_171 = arith.constant 5.000000e-01 : f32
    %404 = vector.broadcast %cst_171 : f32 to vector<128x64xf32>
    %405 = arith.mulf %404, %403 : vector<128x64xf32>
    %cst_172 = arith.constant 0.707106769 : f32
    %406 = vector.broadcast %cst_172 : f32 to vector<128x64xf32>
    %407 = arith.mulf %403, %406 : vector<128x64xf32>
    %408 = math.erf %407 : vector<128x64xf32>
    %cst_173 = arith.constant 1.000000e+00 : f32
    %409 = vector.broadcast %cst_173 : f32 to vector<128x64xf32>
    %410 = arith.addf %409, %408 : vector<128x64xf32>
    %411 = arith.mulf %405, %410 : vector<128x64xf32>
    %c0_174 = arith.constant 0 : index
    %c0_175 = arith.constant 0 : index
    %412 = vector.load %arg9[%c0_174, %c0_175] : memref<64x16xf32, #tpu.memory_space<vmem>>, vector<64x16xf32>
    %cst_176 = arith.constant dense<0.000000e+00> : vector<128x16xf32>
    %413 = tpu.matmul %411, %412, %cst_176 {dimension_numbers = #tpu.dot_dimension_numbers<[1], [0], [0], [1], [0, 0, 1, 1], [], []>} : vector<128x64xf32>, vector<64x16xf32>, vector<128x16xf32> -> vector<128x16xf32>
    %c0_177 = arith.constant 0 : index
    %c0_178 = arith.constant 0 : index
    %414 = vector.load %arg10[%c0_177, %c0_178] : memref<1x16xf32, #tpu.memory_space<vmem>>, vector<1x16xf32>
    %415 = vector.shape_cast %414 : vector<1x16xf32> to vector<16xf32>
    %416 = vector.shape_cast %415 : vector<16xf32> to vector<1x16xf32>
    %417 = vector.broadcast %416 : vector<1x16xf32> to vector<128x16xf32>
    %418 = arith.addf %413, %417 : vector<128x16xf32>
    %c0_179 = arith.constant 0 : index
    %c0_180 = arith.constant 0 : index
    %419 = vector.load %arg11[%c0_179, %c0_180] : memref<1x16xf32, #tpu.memory_space<vmem>>, vector<1x16xf32>
    %420 = vector.shape_cast %419 : vector<1x16xf32> to vector<16xf32>
    %421 = vector.shape_cast %420 : vector<16xf32> to vector<1x16xf32>
    %422 = vector.broadcast %421 : vector<1x16xf32> to vector<128x16xf32>
    %423 = arith.mulf %418, %422 : vector<128x16xf32>
    %cst_181 = arith.constant 2.000000e+00 : f32
    %424 = vector.broadcast %cst_181 : f32 to vector<128x16xf32>
    %425 = arith.mulf %424, %423 : vector<128x16xf32>
    %426 = vector.shape_cast %425 : vector<128x16xf32> to vector<8x16x16xf32>
    %c0_182 = arith.constant 0 : index
    %c0_183 = arith.constant 0 : index
    %c0_184 = arith.constant 0 : index
    %c0_185 = arith.constant 0 : index
    %427 = vector.load %arg12[%c0_182, %c0_183, %c0_184, %c0_185] : memref<1x8x16x16xf32, #tpu.memory_space<vmem>>, vector<1x8x16x16xf32>
    %428 = vector.shape_cast %427 : vector<1x8x16x16xf32> to vector<8x16x16xf32>
    %429 = vector.shape_cast %426 : vector<8x16x16xf32> to vector<1x8x16x16xf32>
    tpu.vector_store %arg12[%c0_182, %c0_183, %c0_184, %c0_185], %429 {strides = array<i32>} : memref<1x8x16x16xf32, #tpu.memory_space<vmem>>, vector<1x8x16x16xf32>,
    return
  }
  func.func @transform_0(%arg0: i32, %arg1: i32) -> (i32, i32, i32, i32) {
    %c0_i32 = arith.constant 0 : i32
    %c0_i32_0 = arith.constant 0 : i32
    %c0_i32_1 = arith.constant 0 : i32
    %c0_i32_2 = arith.constant 0 : i32
    return %arg0, %c0_i32, %c0_i32_0, %c0_i32_1 : i32, i32, i32, i32
  }
  func.func @transform_1(%arg0: i32, %arg1: i32) -> (i32, i32, i32) {
    %c0_i32 = arith.constant 0 : i32
    %c0_i32_0 = arith.constant 0 : i32
    %c0_i32_1 = arith.constant 0 : i32
    %c0_i32_2 = arith.constant 0 : i32
    return %c0_i32, %c0_i32_0, %c0_i32_1 : i32, i32, i32
  }
  func.func @transform_2(%arg0: i32, %arg1: i32) -> (i32, i32) {
    %c0_i32 = arith.constant 0 : i32
    %c0_i32_0 = arith.constant 0 : i32
    %c0_i32_1 = arith.constant 0 : i32
    return %c0_i32, %c0_i32_0 : i32, i32
  }
  func.func @transform_3(%arg0: i32, %arg1: i32) -> (i32, i32) {
    %c0_i32 = arith.constant 0 : i32
    %c0_i32_0 = arith.constant 0 : i32
    %c0_i32_1 = arith.constant 0 : i32
    return %c0_i32, %c0_i32_0 : i32, i32
  }
  func.func @transform_4(%arg0: i32, %arg1: i32) -> (i32, i32) {
    %c0_i32 = arith.constant 0 : i32
    %c0_i32_0 = arith.constant 0 : i32
    %c0_i32_1 = arith.constant 0 : i32
    return %c0_i32, %c0_i32_0 : i32, i32
  }
  func.func @transform_5(%arg0: i32, %arg1: i32) -> (i32, i32) {
    %c0_i32 = arith.constant 0 : i32
    %c0_i32_0 = arith.constant 0 : i32
    %c0_i32_1 = arith.constant 0 : i32
    return %c0_i32, %c0_i32_0 : i32, i32
  }
  func.func @transform_6(%arg0: i32, %arg1: i32) -> (i32, i32) {
    %c0_i32 = arith.constant 0 : i32
    %c0_i32_0 = arith.constant 0 : i32
    %c0_i32_1 = arith.constant 0 : i32
    return %c0_i32, %c0_i32_0 : i32, i32
  }
  func.func @transform_7(%arg0: i32, %arg1: i32) -> (i32, i32) {
    %c0_i32 = arith.constant 0 : i32
    %c0_i32_0 = arith.constant 0 : i32
    %c0_i32_1 = arith.constant 0 : i32
    return %c0_i32, %c0_i32_0 : i32, i32
  }
  func.func @transform_8(%arg0: i32, %arg1: i32) -> (i32, i32) {
    %c0_i32 = arith.constant 0 : i32
    %c0_i32_0 = arith.constant 0 : i32
    %c0_i32_1 = arith.constant 0 : i32
    return %c0_i32, %c0_i32_0 : i32, i32
  }
  func.func @transform_9(%arg0: i32, %arg1: i32) -> (i32, i32) {
    %c0_i32 = arith.constant 0 : i32
    %c0_i32_0 = arith.constant 0 : i32
    %c0_i32_1 = arith.constant 0 : i32
    return %c0_i32, %c0_i32_0 : i32, i32
  }
  func.func @transform_10(%arg0: i32, %arg1: i32) -> (i32, i32, i32, i32) {
    %c0_i32 = arith.constant 0 : i32
    %c0_i32_0 = arith.constant 0 : i32
    %c0_i32_1 = arith.constant 0 : i32
    return %arg0, %arg1, %c0_i32, %c0_i32_0 : i32, i32, i32, i32
  }
}

</mosaic_0001>

<llo_original>
// kernel: tpu_custom_call.1
$region0: #{tpu_custom_call.1}
  #allocation0 [shape = 'u32[]', space=smem, size = 0x4, offset = 0x4, fixed_abs, tag = 'smem constant byte address 0x4 - core index']
  #allocation1 [shape = 'u32[144,128]{1,0:T(1,128)}', space=vmem, size = 0x12000, scoped, tag = 'internal scratch']
  #allocation2 [shape = 'f32[22,22,16]{2,1,0:T(8,128)}', space=vmem, size = 0x42000, scoped, tag = 'scratch operand']
  %s0 = inlined_call_operand.hbm [shape: f32[2,16,16,16], index: 0, kind: input, shape index: {}]
  %s1 = inlined_call_operand.vmem [shape: f32[7,7,16], index: 1, kind: input, shape index: {}]
  %s2 = inlined_call_operand.vmem [shape: f32[1,16], index: 2, kind: input, shape index: {}]
  %s3 = inlined_call_operand.vmem [shape: f32[1,16], index: 3, kind: input, shape index: {}]
  %s4 = inlined_call_operand.vmem [shape: f32[1,16], index: 4, kind: input, shape index: {}]
  %s5 = inlined_call_operand.vmem [shape: f32[16,64], index: 5, kind: input, shape index: {}]
  %s6 = inlined_call_operand.vmem [shape: f32[1,64], index: 6, kind: input, shape index: {}]
  %s7 = inlined_call_operand.vmem [shape: f32[64,16], index: 7, kind: input, shape index: {}]
  %s8 = inlined_call_operand.vmem [shape: f32[1,16], index: 8, kind: input, shape index: {}]
  %s9 = inlined_call_operand.vmem [shape: f32[1,16], index: 9, kind: input, shape index: {}]
  %s10 = inlined_call_operand.hbm [shape: f32[2,16,16,16], index: 10, kind: output, shape index: {}]
  %s11 = sld [smem:[#allocation0]]
  $region81: #{tpu_custom_call.1} parent=0
    _
  %s13 = ssub.s32 1, %s11
  %s14 = scalar_select 0, %s13, %s11
  $region1: #{tpu_custom_call.1} parent=0
    #allocation3 [shape = 'u8[262144]{0}', space=vmem, size = 0x40000, scoped, tag = 'input window, operand 0']
    #allocation4 [shape = 's32[2]{0}', space=sflag, size = 0x8, scoped, tag = 'scoped memory for tpu_custom_call.1']
    #allocation5 [shape = 's32[2]{0}', space=sflag, size = 0x8, scoped, tag = 'scoped memory for tpu_custom_call.1']
    #allocation6 [shape = 'u8[131072]{0}', space=vmem, size = 0x20000, scoped, tag = 'output window, operand 0']
    %15 = vsyncpa [#allocation4], 0
    %s16 = scalar_lea.sflag [#allocation4], 1
    %17 = vsyncpa %s16, 0
    %18 = vsyncpa [#allocation5], 0
    %s19 = scalar_lea.sflag [#allocation5], 1
    %20 = vsyncpa %s19, 0
    loop: start=0, step=1, limit=6
    $region2: #{tpu_custom_call.1} parent=1 // loop_pre_header
      _
    $region3: #{tpu_custom_call.1} parent=1 // loop_header
      %s22 = sphi 0, %s26
      %p23 = scmp.ge.s32.totalorder %s22, 6
      %s29 = sphi 0, %s41
      %s30 = sphi 0, %s37
      %s31 = sphi 0, %s29
      %s32 = sphi 0, %s30
      %s33 = sphi 0, %s31
      %s34 = sphi 0, %s32
      %s44 = sphi 0, %s46
      %s47 = sphi 0, %s44
      %s48 = sphi 0, %s47
      %s64 = sphi 0, %s48
      %s68 = sphi 0, %s68
      %s70 = sphi 0, %s68
      %s71 = sphi 0, %s70
      %s85 = sphi 0, %s71
      %s89 = sphi 0, %s89
      %s91 = sphi 0, %s89
      %s92 = sphi 0, %s91
      %s106 = sphi 0, %s92
      %s110 = sphi 0, %s110
      %s112 = sphi 0, %s110
      %s113 = sphi 0, %s112
      %s127 = sphi 0, %s113
      %s131 = sphi 0, %s131
      %s133 = sphi 0, %s131
      %s134 = sphi 0, %s133
      %s148 = sphi 0, %s134
      %s152 = sphi 0, %s152
      %s154 = sphi 0, %s152
      %s155 = sphi 0, %s154
      %s169 = sphi 0, %s155
      %s173 = sphi 0, %s173
      %s175 = sphi 0, %s173
      %s176 = sphi 0, %s175
      %s190 = sphi 0, %s176
      %s194 = sphi 0, %s194
      %s196 = sphi 0, %s194
      %s197 = sphi 0, %s196
      %s211 = sphi 0, %s197
      %s215 = sphi 0, %s215
      %s217 = sphi 0, %s215
      %s218 = sphi 0, %s217
      %s232 = sphi 0, %s218
      %s236 = sphi 0, %s236
      %s238 = sphi 0, %s236
      %s239 = sphi 0, %s238
      %s253 = sphi 0, %s239
      %s261 = sphi 0, %s263
      %s264 = sphi 0, %s261
      %s265 = sphi 0, %s264
      %s281 = sphi 0, %s265
    $region4: #{tpu_custom_call.1} parent=1 // loop_header_branch
      %25 = sbr.rel (%p23) target = $region8
    $region5: #{tpu_custom_call.1} parent=1 // loop_body
      %s27 = ssub.s32 %s22, 1
      %s28 = ssub.s32 %s22, 2
      %s35 = sadd.s32 1, %s30
      %p36 = scmp.ge.s32.totalorder %s35, 2
      %s37 = scalar_select %p36, 0, %s35
      %s38 = sadd.s32 1, %s29
      %s39 = scalar_select %p36, %s38, %s29
      %p40 = scmp.ge.s32.totalorder %s39, 2
      %s41 = scalar_select %p40, 0, %s39
      %s42 = ssub.s32 %s29, %s41
      %p43 = scmp.eq.s32.totalorder %s42, 0
      %s45 = sadd.s32 %s44, 1
      %s46 = scalar_select %p43, %s44, %s45
      %p49 = pneg %p43
      %p50 = scmp.eq.s32.totalorder %s22, 3
      %p51 = por %p49, %p50
      %p52 = scmp.ne.s32.totalorder %s44, %s47
      %p53 = scmp.eq.s32.totalorder %s22, 0
      %p54 = por %p52, %p53
      %p55 = scmp.ne.s32.totalorder %s44, %s47
      %p56 = scmp.eq.s32.totalorder %s27, 3
      %p57 = por %p55, %p56
      %p58 = scmp.ne.s32.totalorder %s47, %s48
      %p59 = scmp.eq.s32.totalorder %s27, 0
      %p60 = por %p58, %p59
      %p61 = scmp.ne.s32.totalorder %s47, %s48
      %p62 = scmp.eq.s32.totalorder %s28, 3
      %p63 = por %p61, %p62
      %p65 = scmp.ne.s32.totalorder %s48, %s64
      %p66 = scmp.eq.s32.totalorder %s28, 0
      %p67 = por %p65, %p66
      %s69 = sadd.s32 %s68, 1
      %p72 = scmp.eq.s32.totalorder %s22, 3
      %p73 = scmp.ne.s32.totalorder %s68, %s70
      %p74 = scmp.eq.s32.totalorder %s22, 0
      %p75 = por %p73, %p74
      %p76 = scmp.ne.s32.totalorder %s68, %s70
      %p77 = scmp.eq.s32.totalorder %s27, 3
      %p78 = por %p76, %p77
      %p79 = scmp.ne.s32.totalorder %s70, %s71
      %p80 = scmp.eq.s32.totalorder %s27, 0
      %p81 = por %p79, %p80
      %p82 = scmp.ne.s32.totalorder %s70, %s71
      %p83 = scmp.eq.s32.totalorder %s28, 3
      %p84 = por %p82, %p83
      %p86 = scmp.ne.s32.totalorder %s71, %s85
      %p87 = scmp.eq.s32.totalorder %s28, 0
      %p88 = por %p86, %p87
      %s90 = sadd.s32 %s89, 1
      %p93 = scmp.eq.s32.totalorder %s22, 3
      %p94 = scmp.ne.s32.totalorder %s89, %s91
      %p95 = scmp.eq.s32.totalorder %s22, 0
      %p96 = por %p94, %p95
      %p97 = scmp.ne.s32.totalorder %s89, %s91
      %p98 = scmp.eq.s32.totalorder %s27, 3
      %p99 = por %p97, %p98
      %p100 = scmp.ne.s32.totalorder %s91, %s92
      %p101 = scmp.eq.s32.totalorder %s27, 0
      %p102 = por %p100, %p101
      %p103 = scmp.ne.s32.totalorder %s91, %s92
      %p104 = scmp.eq.s32.totalorder %s28, 3
      %p105 = por %p103, %p104
      %p107 = scmp.ne.s32.totalorder %s92, %s106
      %p108 = scmp.eq.s32.totalorder %s28, 0
      %p109 = por %p107, %p108
      %s111 = sadd.s32 %s110, 1
      %p114 = scmp.eq.s32.totalorder %s22, 3
      %p115 = scmp.ne.s32.totalorder %s110, %s112
      %p116 = scmp.eq.s32.totalorder %s22, 0
      %p117 = por %p115, %p116
      %p118 = scmp.ne.s32.totalorder %s110, %s112
      %p119 = scmp.eq.s32.totalorder %s27, 3
      %p120 = por %p118, %p119
      %p121 = scmp.ne.s32.totalorder %s112, %s113
      %p122 = scmp.eq.s32.totalorder %s27, 0
      %p123 = por %p121, %p122
      %p124 = scmp.ne.s32.totalorder %s112, %s113
      %p125 = scmp.eq.s32.totalorder %s28, 3
      %p126 = por %p124, %p125
      %p128 = scmp.ne.s32.totalorder %s113, %s127
      %p129 = scmp.eq.s32.totalorder %s28, 0
      %p130 = por %p128, %p129
      %s132 = sadd.s32 %s131, 1
      %p135 = scmp.eq.s32.totalorder %s22, 3
      %p136 = scmp.ne.s32.totalorder %s131, %s133
      %p137 = scmp.eq.s32.totalorder %s22, 0
      %p138 = por %p136, %p137
      %p139 = scmp.ne.s32.totalorder %s131, %s133
      %p140 = scmp.eq.s32.totalorder %s27, 3
      %p141 = por %p139, %p140
      %p142 = scmp.ne.s32.totalorder %s133, %s134
      %p143 = scmp.eq.s32.totalorder %s27, 0
      %p144 = por %p142, %p143
      %p145 = scmp.ne.s32.totalorder %s133, %s134
      %p146 = scmp.eq.s32.totalorder %s28, 3
      %p147 = por %p145, %p146
      %p149 = scmp.ne.s32.totalorder %s134, %s148
      %p150 = scmp.eq.s32.totalorder %s28, 0
      %p151 = por %p149, %p150
      %s153 = sadd.s32 %s152, 1
      %p156 = scmp.eq.s32.totalorder %s22, 3
      %p157 = scmp.ne.s32.totalorder %s152, %s154
      %p158 = scmp.eq.s32.totalorder %s22, 0
      %p159 = por %p157, %p158
      %p160 = scmp.ne.s32.totalorder %s152, %s154
      %p161 = scmp.eq.s32.totalorder %s27, 3
      %p162 = por %p160, %p161
      %p163 = scmp.ne.s32.totalorder %s154, %s155
      %p164 = scmp.eq.s32.totalorder %s27, 0
      %p165 = por %p163, %p164
      %p166 = scmp.ne.s32.totalorder %s154, %s155
      %p167 = scmp.eq.s32.totalorder %s28, 3
      %p168 = por %p166, %p167
      %p170 = scmp.ne.s32.totalorder %s155, %s169
      %p171 = scmp.eq.s32.totalorder %s28, 0
      %p172 = por %p170, %p171
      %s174 = sadd.s32 %s173, 1
      %p177 = scmp.eq.s32.totalorder %s22, 3
      %p178 = scmp.ne.s32.totalorder %s173, %s175
      %p179 = scmp.eq.s32.totalorder %s22, 0
      %p180 = por %p178, %p179
      %p181 = scmp.ne.s32.totalorder %s173, %s175
      %p182 = scmp.eq.s32.totalorder %s27, 3
      %p183 = por %p181, %p182
      %p184 = scmp.ne.s32.totalorder %s175, %s176
      %p185 = scmp.eq.s32.totalorder %s27, 0
      %p186 = por %p184, %p185
      %p187 = scmp.ne.s32.totalorder %s175, %s176
      %p188 = scmp.eq.s32.totalorder %s28, 3
      %p189 = por %p187, %p188
      %p191 = scmp.ne.s32.totalorder %s176, %s190
      %p192 = scmp.eq.s32.totalorder %s28, 0
      %p193 = por %p191, %p192
      %s195 = sadd.s32 %s194, 1
      %p198 = scmp.eq.s32.totalorder %s22, 3
      %p199 = scmp.ne.s32.totalorder %s194, %s196
      %p200 = scmp.eq.s32.totalorder %s22, 0
      %p201 = por %p199, %p200
      %p202 = scmp.ne.s32.totalorder %s194, %s196
      %p203 = scmp.eq.s32.totalorder %s27, 3
      %p204 = por %p202, %p203
      %p205 = scmp.ne.s32.totalorder %s196, %s197
      %p206 = scmp.eq.s32.totalorder %s27, 0
      %p207 = por %p205, %p206
      %p208 = scmp.ne.s32.totalorder %s196, %s197
      %p209 = scmp.eq.s32.totalorder %s28, 3
      %p210 = por %p208, %p209
      %p212 = scmp.ne.s32.totalorder %s197, %s211
      %p213 = scmp.eq.s32.totalorder %s28, 0
      %p214 = por %p212, %p213
      %s216 = sadd.s32 %s215, 1
      %p219 = scmp.eq.s32.totalorder %s22, 3
      %p220 = scmp.ne.s32.totalorder %s215, %s217
      %p221 = scmp.eq.s32.totalorder %s22, 0
      %p222 = por %p220, %p221
      %p223 = scmp.ne.s32.totalorder %s215, %s217
      %p224 = scmp.eq.s32.totalorder %s27, 3
      %p225 = por %p223, %p224
      %p226 = scmp.ne.s32.totalorder %s217, %s218
      %p227 = scmp.eq.s32.totalorder %s27, 0
      %p228 = por %p226, %p227
      %p229 = scmp.ne.s32.totalorder %s217, %s218
      %p230 = scmp.eq.s32.totalorder %s28, 3
      %p231 = por %p229, %p230
      %p233 = scmp.ne.s32.totalorder %s218, %s232
      %p234 = scmp.eq.s32.totalorder %s28, 0
      %p235 = por %p233, %p234
      %s237 = sadd.s32 %s236, 1
      %p240 = scmp.eq.s32.totalorder %s22, 3
      %p241 = scmp.ne.s32.totalorder %s236, %s238
      %p242 = scmp.eq.s32.totalorder %s22, 0
      %p243 = por %p241, %p242
      %p244 = scmp.ne.s32.totalorder %s236, %s238
      %p245 = scmp.eq.s32.totalorder %s27, 3
      %p246 = por %p244, %p245
      %p247 = scmp.ne.s32.totalorder %s238, %s239
      %p248 = scmp.eq.s32.totalorder %s27, 0
      %p249 = por %p247, %p248
      %p250 = scmp.ne.s32.totalorder %s238, %s239
      %p251 = scmp.eq.s32.totalorder %s28, 3
      %p252 = por %p250, %p251
      %p254 = scmp.ne.s32.totalorder %s239, %s253
      %p255 = scmp.eq.s32.totalorder %s28, 0
      %p256 = por %p254, %p255
      %s257 = ssub.s32 %s29, %s41
      %s258 = ssub.s32 %s30, %s37
      %s259 = sor.u32 %s257, %s258
      %p260 = scmp.eq.s32.totalorder %s259, 0
      %s262 = sadd.s32 %s261, 1
      %s263 = scalar_select %p260, %s261, %s262
      %p266 = pneg %p260
      %p267 = scmp.eq.s32.totalorder %s22, 3
      %p268 = por %p266, %p267
      %p269 = scmp.ne.s32.totalorder %s261, %s264
      %p270 = scmp.eq.s32.totalorder %s22, 0
      %p271 = por %p269, %p270
      %p272 = scmp.ne.s32.totalorder %s261, %s264
      %p273 = scmp.eq.s32.totalorder %s27, 3
      %p274 = por %p272, %p273
      %p275 = scmp.ne.s32.totalorder %s264, %s265
      %p276 = scmp.eq.s32.totalorder %s27, 0
      %p277 = por %p275, %p276
      %p278 = scmp.ne.s32.totalorder %s264, %s265
      %p279 = scmp.eq.s32.totalorder %s28, 3
      %p280 = por %p278, %p279
      %p282 = scmp.ne.s32.totalorder %s265, %s281
      %p283 = scmp.eq.s32.totalorder %s28, 0
      %p284 = por %p282, %p283
      %p285 = scmp.le.s32.totalorder 1, %s22
      %p286 = scmp.lt.s32.totalorder %s22, 5
      %p287 = pnand %p285, %p286
      %p288 = pneg %p287
      // Predicated region
      $region9: #{tpu_custom_call.1} parent=5 // pred_check
        _
      $region10: #{tpu_custom_call.1} parent=5 // pred_check_branch
        %290 = sbr.rel (%p287) target = $region12
      $region11: #{tpu_custom_call.1} parent=5 // pred_region
        %s291 = ssub.s32 %s22, 1
        // Predicated region
        $region13: #{tpu_custom_call.1} parent=11 // pred_check
          %p292 = pneg %p81
        $region14: #{tpu_custom_call.1} parent=11 // pred_check_branch
          %294 = sbr.rel (%p292) target = $region16
        $region15: #{tpu_custom_call.1} parent=11 // pred_region
          _
        $region16: #{tpu_custom_call.1} parent=11 // pred_fallthru
          _
        // Predicated region
        $region17: #{tpu_custom_call.1} parent=11 // pred_check
          %p295 = pneg %p102
        $region18: #{tpu_custom_call.1} parent=11 // pred_check_branch
          %297 = sbr.rel (%p295) target = $region20
        $region19: #{tpu_custom_call.1} parent=11 // pred_region
          _
        $region20: #{tpu_custom_call.1} parent=11 // pred_fallthru
          _
        // Predicated region
        $region21: #{tpu_custom_call.1} parent=11 // pred_check
          %p298 = pneg %p123
        $region22: #{tpu_custom_call.1} parent=11 // pred_check_branch
          %300 = sbr.rel (%p298) target = $region24
        $region23: #{tpu_custom_call.1} parent=11 // pred_region
          _
        $region24: #{tpu_custom_call.1} parent=11 // pred_fallthru
          _
        // Predicated region
        $region25: #{tpu_custom_call.1} parent=11 // pred_check
          %p301 = pneg %p144
        $region26: #{tpu_custom_call.1} parent=11 // pred_check_branch
          %303 = sbr.rel (%p301) target = $region28
        $region27: #{tpu_custom_call.1} parent=11 // pred_region
          _
        $region28: #{tpu_custom_call.1} parent=11 // pred_fallthru
          _
        // Predicated region
        $region29: #{tpu_custom_call.1} parent=11 // pred_check
          %p304 = pneg %p165
        $region30: #{tpu_custom_call.1} parent=11 // pred_check_branch
          %306 = sbr.rel (%p304) target = $region32
        $region31: #{tpu_custom_call.1} parent=11 // pred_region
          _
        $region32: #{tpu_custom_call.1} parent=11 // pred_fallthru
          _
        // Predicated region
        $region33: #{tpu_custom_call.1} parent=11 // pred_check
          %p307 = pneg %p186
        $region34: #{tpu_custom_call.1} parent=11 // pred_check_branch
          %309 = sbr.rel (%p307) target = $region36
        $region35: #{tpu_custom_call.1} parent=11 // pred_region
          _
        $region36: #{tpu_custom_call.1} parent=11 // pred_fallthru
          _
        // Predicated region
        $region37: #{tpu_custom_call.1} parent=11 // pred_check
          %p310 = pneg %p207
        $region38: #{tpu_custom_call.1} parent=11 // pred_check_branch
          %312 = sbr.rel (%p310) target = $region40
        $region39: #{tpu_custom_call.1} parent=11 // pred_region
          _
        $region40: #{tpu_custom_call.1} parent=11 // pred_fallthru
          _
        // Predicated region
        $region41: #{tpu_custom_call.1} parent=11 // pred_check
          %p313 = pneg %p228
        $region42: #{tpu_custom_call.1} parent=11 // pred_check_branch
          %315 = sbr.rel (%p313) target = $region44
        $region43: #{tpu_custom_call.1} parent=11 // pred_region
          _
        $region44: #{tpu_custom_call.1} parent=11 // pred_fallthru
          _
        // Predicated region
        $region45: #{tpu_custom_call.1} parent=11 // pred_check
          %p316 = pneg %p249
        $region46: #{tpu_custom_call.1} parent=11 // pred_check_branch
          %318 = sbr.rel (%p316) target = $region48
        $region47: #{tpu_custom_call.1} parent=11 // pred_region
          _
        $region48: #{tpu_custom_call.1} parent=11 // pred_fallthru
          _
      $region12: #{tpu_custom_call.1} parent=5 // pred_fallthru
        _
      %p319 = scmp.lt.s32.totalorder %s22, 4
      // Predicated region
      $region49: #{tpu_custom_call.1} parent=5 // pred_check
        %p320 = pneg %p319
      $region50: #{tpu_custom_call.1} parent=5 // pred_check_branch
        %322 = sbr.rel (%p320) target = $region52
      $region51: #{tpu_custom_call.1} parent=5 // pred_region
        // Predicated region
        $region53: #{tpu_custom_call.1} parent=51 // pred_check
          %p323 = pneg %p54
        $region54: #{tpu_custom_call.1} parent=51 // pred_check_branch
          %325 = sbr.rel (%p323) target = $region56
        $region55: #{tpu_custom_call.1} parent=51 // pred_region
          %s326 = sand.u32 %s44, 1
          %s327 = scalar_lea.sflag [#allocation4], %s326
          %s328 = sand.u32 %s44, 1
          %s329 = smul.addr %s328, 256
          %s330 = scalar_lea.vmem [#allocation3], %s329
          %s332 = ssub.s32 4096, 4096
          %333 = vsyncadd %s327, %s332
          %s334 = smul.addr %s29, 32
          %s335 = smul.addr %s334, 128
          %s336 = scalar_lea.hbm %s0, %s335
          %s337 = sshll.u32 %s330, 4
          %s338 = int_to_ptr.vmem [resolvable:$true] %s337
          %343 = dma.hbm_to_vmem [thread:$0]  %s336, 4096, %s338, %s327, 128, 128, 8
        $region56: #{tpu_custom_call.1} parent=51 // pred_fallthru
          _
      $region52: #{tpu_custom_call.1} parent=5 // pred_fallthru
        _
      %p344 = scmp.le.s32.totalorder 1, %s22
      %p345 = scmp.lt.s32.totalorder %s22, 5
      %p346 = pnand %p344, %p345
      %p347 = pneg %p346
      // Predicated region
      $region57: #{tpu_custom_call.1} parent=5 // pred_check
        _
      $region58: #{tpu_custom_call.1} parent=5 // pred_check_branch
        %349 = sbr.rel (%p346) target = $region60
      $region59: #{tpu_custom_call.1} parent=5 // pred_region
        %s350 = ssub.s32 %s22, 1
        %s351 = sand.u32 %s47, 1
        %s352 = scalar_lea.sflag [#allocation4], %s351
        %s353 = sand.u32 %s47, 1
        %s354 = smul.addr %s353, 256
        %s355 = scalar_lea.vmem [#allocation3], %s354
        // Predicated region
        $region61: #{tpu_custom_call.1} parent=59 // pred_check
          %p356 = pneg %p60
        $region62: #{tpu_custom_call.1} parent=59 // pred_check_branch
          %358 = sbr.rel (%p356) target = $region64
        $region63: #{tpu_custom_call.1} parent=59 // pred_region
          %359 = dma.done %s352, 4096
        $region64: #{tpu_custom_call.1} parent=59 // pred_fallthru
          _
        %s360 = sand.u32 %s47, 1
        %s361 = scalar_lea.sflag [#allocation4], %s360
        %s362 = sand.u32 %s47, 1
        %s363 = smul.addr %s362, 256
        %s364 = scalar_lea.vmem [#allocation3], %s363
        %p365 = pneg %p60
        %p366 = pneg %p57
        %p367 = pneg %p81
        %p368 = pneg %p78
        %p369 = pneg %p102
        %p370 = pneg %p99
        %p371 = pneg %p123
        %p372 = pneg %p120
        %p373 = pneg %p144
        %p374 = pneg %p141
        %p375 = pneg %p165
        %p376 = pneg %p162
        %p377 = pneg %p186
        %p378 = pneg %p183
        %p379 = pneg %p207
        %p380 = pneg %p204
        %p381 = pneg %p228
        %p382 = pneg %p225
        %p383 = pneg %p249
        %p384 = pneg %p246
        %p385 = pneg %p277
        %p386 = pneg %p274
        %s387 = sand.u32 %s264, 1
        %s388 = scalar_lea.sflag [#allocation5], %s387
        %s389 = sand.u32 %s264, 1
        %s390 = smul.addr %s389, 128
        %s391 = scalar_lea.vmem [#allocation6], %s390
        %s392 = smul.u32 8, %s32
        %p393 = scmp.eq.s32.totalorder %s32, 0
        // Predicated region
        $region65: #{tpu_custom_call.1} parent=59 // pred_check
          %p394 = pneg %p393
        $region66: #{tpu_custom_call.1} parent=59 // pred_check_branch
          %396 = sbr.rel (%p394) target = $region68
        $region67: #{tpu_custom_call.1} parent=59 // pred_region
          %vm397 = vcmask 130048
          %398 = vst.msk [vmem:[#allocation2] sm:$0xff] %vm397, 0.0
          %399 = vst.msk [vmem:[#allocation2 + $0x8] sm:$0xff] %vm397, 0.0
          %vm400 = vcmask 128000
          %401 = vst.msk [vmem:[#allocation2 + $0x10] sm:$0x3f] %vm400, 0.0
          %402 = vst.msk [vmem:[#allocation2 + $0x18] sm:$0xff] %vm397, 0.0
          %403 = vst.msk [vmem:[#allocation2 + $0x20] sm:$0xff] %vm397, 0.0
          %404 = vst.msk [vmem:[#allocation2 + $0x28] sm:$0x3f] %vm400, 0.0
          %405 = vst.msk [vmem:[#allocation2 + $0x30] sm:$0xff] %vm397, 0.0
          %406 = vst.msk [vmem:[#allocation2 + $0x38] sm:$0xff] %vm397, 0.0
          %407 = vst.msk [vmem:[#allocation2 + $0x40] sm:$0x3f] %vm400, 0.0
          %408 = vst.msk [vmem:[#allocation2 + $0x48] sm:$0xff] %vm397, 0.0
          %409 = vst.msk [vmem:[#allocation2 + $0x50] sm:$0xff] %vm397, 0.0
          %410 = vst.msk [vmem:[#allocation2 + $0x58] sm:$0x3f] %vm400, 0.0
          %411 = vst.msk [vmem:[#allocation2 + $0x60] sm:$0xff] %vm397, 0.0
          %412 = vst.msk [vmem:[#allocation2 + $0x68] sm:$0xff] %vm397, 0.0
          %413 = vst.msk [vmem:[#allocation2 + $0x70] sm:$0x3f] %vm400, 0.0
          %414 = vst.msk [vmem:[#allocation2 + $0x78] sm:$0xff] %vm397, 0.0
          %415 = vst.msk [vmem:[#allocation2 + $0x80] sm:$0xff] %vm397, 0.0
          %416 = vst.msk [vmem:[#allocation2 + $0x88] sm:$0x3f] %vm400, 0.0
          %417 = vst.msk [vmem:[#allocation2 + $0x90] sm:$0xff] %vm397, 0.0
          %418 = vst.msk [vmem:[#allocation2 + $0x98] sm:$0xff] %vm397, 0.0
          %419 = vst.msk [vmem:[#allocation2 + $0xa0] sm:$0x3f] %vm400, 0.0
          %420 = vst.msk [vmem:[#allocation2 + $0xa8] sm:$0xff] %vm397, 0.0
          %421 = vst.msk [vmem:[#allocation2 + $0xb0] sm:$0xff] %vm397, 0.0
          %422 = vst.msk [vmem:[#allocation2 + $0xb8] sm:$0x3f] %vm400, 0.0
          %423 = vst.msk [vmem:[#allocation2 + $0xc0] sm:$0xff] %vm397, 0.0
          %424 = vst.msk [vmem:[#allocation2 + $0xc8] sm:$0xff] %vm397, 0.0
          %425 = vst.msk [vmem:[#allocation2 + $0xd0] sm:$0x3f] %vm400, 0.0
          %426 = vst.msk [vmem:[#allocation2 + $0xd8] sm:$0xff] %vm397, 0.0
          %427 = vst.msk [vmem:[#allocation2 + $0xe0] sm:$0xff] %vm397, 0.0
          %428 = vst.msk [vmem:[#allocation2 + $0xe8] sm:$0x3f] %vm400, 0.0
          %429 = vst.msk [vmem:[#allocation2 + $0xf0] sm:$0xff] %vm397, 0.0
          %430 = vst.msk [vmem:[#allocation2 + $0xf8] sm:$0xff] %vm397, 0.0
          %431 = vst.msk [vmem:[#allocation2 + $0x100] sm:$0x3f] %vm400, 0.0
          %432 = vst.msk [vmem:[#allocation2 + $0x108] sm:$0xff] %vm397, 0.0
          %433 = vst.msk [vmem:[#allocation2 + $0x110] sm:$0xff] %vm397, 0.0
          %434 = vst.msk [vmem:[#allocation2 + $0x118] sm:$0x3f] %vm400, 0.0
          %435 = vst.msk [vmem:[#allocation2 + $0x120] sm:$0xff] %vm397, 0.0
          %436 = vst.msk [vmem:[#allocation2 + $0x128] sm:$0xff] %vm397, 0.0
          %437 = vst.msk [vmem:[#allocation2 + $0x130] sm:$0x3f] %vm400, 0.0
          %438 = vst.msk [vmem:[#allocation2 + $0x138] sm:$0xff] %vm397, 0.0
          %439 = vst.msk [vmem:[#allocation2 + $0x140] sm:$0xff] %vm397, 0.0
          %440 = vst.msk [vmem:[#allocation2 + $0x148] sm:$0x3f] %vm400, 0.0
          %441 = vst.msk [vmem:[#allocation2 + $0x150] sm:$0xff] %vm397, 0.0
          %442 = vst.msk [vmem:[#allocation2 + $0x158] sm:$0xff] %vm397, 0.0
          %443 = vst.msk [vmem:[#allocation2 + $0x160] sm:$0x3f] %vm400, 0.0
          %444 = vst.msk [vmem:[#allocation2 + $0x168] sm:$0xff] %vm397, 0.0
          %445 = vst.msk [vmem:[#allocation2 + $0x170] sm:$0xff] %vm397, 0.0
          %446 = vst.msk [vmem:[#allocation2 + $0x178] sm:$0x3f] %vm400, 0.0
          %447 = vst.msk [vmem:[#allocation2 + $0x180] sm:$0xff] %vm397, 0.0
          %448 = vst.msk [vmem:[#allocation2 + $0x188] sm:$0xff] %vm397, 0.0
          %449 = vst.msk [vmem:[#allocation2 + $0x190] sm:$0x3f] %vm400, 0.0
          %450 = vst.msk [vmem:[#allocation2 + $0x198] sm:$0xff] %vm397, 0.0
          %451 = vst.msk [vmem:[#allocation2 + $0x1a0] sm:$0xff] %vm397, 0.0
          %452 = vst.msk [vmem:[#allocation2 + $0x1a8] sm:$0x3f] %vm400, 0.0
          %453 = vst.msk [vmem:[#allocation2 + $0x1b0] sm:$0xff] %vm397, 0.0
          %454 = vst.msk [vmem:[#allocation2 + $0x1b8] sm:$0xff] %vm397, 0.0
          %455 = vst.msk [vmem:[#allocation2 + $0x1c0] sm:$0x3f] %vm400, 0.0
          %456 = vst.msk [vmem:[#allocation2 + $0x1c8] sm:$0xff] %vm397, 0.0
          %457 = vst.msk [vmem:[#allocation2 + $0x1d0] sm:$0xff] %vm397, 0.0
          %458 = vst.msk [vmem:[#allocation2 + $0x1d8] sm:$0x3f] %vm400, 0.0
          %459 = vst.msk [vmem:[#allocation2 + $0x1e0] sm:$0xff] %vm397, 0.0
          %460 = vst.msk [vmem:[#allocation2 + $0x1e8] sm:$0xff] %vm397, 0.0
          %461 = vst.msk [vmem:[#allocation2 + $0x1f0] sm:$0x3f] %vm400, 0.0
          %462 = vst.msk [vmem:[#allocation2 + $0x1f8] sm:$0xff] %vm397, 0.0
          %463 = vst.msk [vmem:[#allocation2 + $0x200] sm:$0xff] %vm397, 0.0
          %464 = vst.msk [vmem:[#allocation2 + $0x208] sm:$0x3f] %vm400, 0.0
          %v465 = vld [vmem:[%s355] sm:$0xff]
          %v466 = vld [vmem:[%s355 + $0x8] sm:$0xff]
          %v467 = vld [vmem:[%s355 + $0x10] sm:$0xff]
          %v468 = vld [vmem:[%s355 + $0x18] sm:$0xff]
          %v469 = vld [vmem:[%s355 + $0x20] sm:$0xff]
          %v470 = vld [vmem:[%s355 + $0x28] sm:$0xff]
          %v471 = vld [vmem:[%s355 + $0x30] sm:$0xff]
          %v472 = vld [vmem:[%s355 + $0x38] sm:$0xff]
          %v473 = vld [vmem:[%s355 + $0x40] sm:$0xff]
          %v474 = vld [vmem:[%s355 + $0x48] sm:$0xff]
          %v475 = vld [vmem:[%s355 + $0x50] sm:$0xff]
          %v476 = vld [vmem:[%s355 + $0x58] sm:$0xff]
          %v477 = vld [vmem:[%s355 + $0x60] sm:$0xff]
          %v478 = vld [vmem:[%s355 + $0x68] sm:$0xff]
          %v479 = vld [vmem:[%s355 + $0x70] sm:$0xff]
          %v480 = vld [vmem:[%s355 + $0x78] sm:$0xff]
          %v481 = vld [vmem:[%s355 + $0x80] sm:$0xff]
          %v482 = vld [vmem:[%s355 + $0x88] sm:$0xff]
          %v483 = vld [vmem:[%s355 + $0x90] sm:$0xff]
          %v484 = vld [vmem:[%s355 + $0x98] sm:$0xff]
          %v485 = vld [vmem:[%s355 + $0xa0] sm:$0xff]
          %v486 = vld [vmem:[%s355 + $0xa8] sm:$0xff]
          %v487 = vld [vmem:[%s355 + $0xb0] sm:$0xff]
          %v488 = vld [vmem:[%s355 + $0xb8] sm:$0xff]
          %v489 = vld [vmem:[%s355 + $0xc0] sm:$0xff]
          %v490 = vld [vmem:[%s355 + $0xc8] sm:$0xff]
          %v491 = vld [vmem:[%s355 + $0xd0] sm:$0xff]
          %v492 = vld [vmem:[%s355 + $0xd8] sm:$0xff]
          %v493 = vld [vmem:[%s355 + $0xe0] sm:$0xff]
          %v494 = vld [vmem:[%s355 + $0xe8] sm:$0xff]
          %v495 = vld [vmem:[%s355 + $0xf0] sm:$0xff]
          %v496 = vld [vmem:[%s355 + $0xf8] sm:$0xff]
          %s497 = scalar_lea.vmem [#allocation2], 72
          %498 = vst.msk [vmem:[%s497 + $0x3] sm:$0xff] %vm397, %v465
          %499 = vst.msk [vmem:[%s497 + $0xb] sm:$0xff] %vm397, %v466
          %500 = vst.msk [vmem:[%s497 + $0x1b] sm:$0xff] %vm397, %v467
          %501 = vst.msk [vmem:[%s497 + $0x23] sm:$0xff] %vm397, %v468
          %502 = vst.msk [vmem:[%s497 + $0x33] sm:$0xff] %vm397, %v469
          %503 = vst.msk [vmem:[%s497 + $0x3b] sm:$0xff] %vm397, %v470
          %504 = vst.msk [vmem:[%s497 + $0x4b] sm:$0xff] %vm397, %v471
          %505 = vst.msk [vmem:[%s497 + $0x53] sm:$0xff] %vm397, %v472
          %506 = vst.msk [vmem:[%s497 + $0x63] sm:$0xff] %vm397, %v473
          %507 = vst.msk [vmem:[%s497 + $0x6b] sm:$0xff] %vm397, %v474
          %508 = vst.msk [vmem:[%s497 + $0x7b] sm:$0xff] %vm397, %v475
          %509 = vst.msk [vmem:[%s497 + $0x83] sm:$0xff] %vm397, %v476
          %510 = vst.msk [vmem:[%s497 + $0x93] sm:$0xff] %vm397, %v477
          %511 = vst.msk [vmem:[%s497 + $0x9b] sm:$0xff] %vm397, %v478
          %512 = vst.msk [vmem:[%s497 + $0xab] sm:$0xff] %vm397, %v479
          %513 = vst.msk [vmem:[%s497 + $0xb3] sm:$0xff] %vm397, %v480
          %514 = vst.msk [vmem:[%s497 + $0xc3] sm:$0xff] %vm397, %v481
          %515 = vst.msk [vmem:[%s497 + $0xcb] sm:$0xff] %vm397, %v482
          %516 = vst.msk [vmem:[%s497 + $0xdb] sm:$0xff] %vm397, %v483
          %517 = vst.msk [vmem:[%s497 + $0xe3] sm:$0xff] %vm397, %v484
          %518 = vst.msk [vmem:[%s497 + $0xf3] sm:$0xff] %vm397, %v485
          %519 = vst.msk [vmem:[%s497 + $0xfb] sm:$0xff] %vm397, %v486
          %520 = vst.msk [vmem:[%s497 + $0x10b] sm:$0xff] %vm397, %v487
          %521 = vst.msk [vmem:[%s497 + $0x113] sm:$0xff] %vm397, %v488
          %522 = vst.msk [vmem:[%s497 + $0x123] sm:$0xff] %vm397, %v489
          %523 = vst.msk [vmem:[%s497 + $0x12b] sm:$0xff] %vm397, %v490
          %524 = vst.msk [vmem:[%s497 + $0x13b] sm:$0xff] %vm397, %v491
          %525 = vst.msk [vmem:[%s497 + $0x143] sm:$0xff] %vm397, %v492
          %526 = vst.msk [vmem:[%s497 + $0x153] sm:$0xff] %vm397, %v493
          %527 = vst.msk [vmem:[%s497 + $0x15b] sm:$0xff] %vm397, %v494
          %528 = vst.msk [vmem:[%s497 + $0x16b] sm:$0xff] %vm397, %v495
          %529 = vst.msk [vmem:[%s497 + $0x173] sm:$0xff] %vm397, %v496
        $region68: #{tpu_custom_call.1} parent=59 // pred_fallthru
          _
        %s530 = smul.u32 %s32, 8
        %s531 = smul.u32 %s530, 24
        %s532 = scalar_lea.vmem [#allocation2], %s531
        %v533 = vld [vmem:[%s532] sm:$0xff]
        %v534 = vld [vmem:[%s532 + $0x8] sm:$0xff]
        %v535 = vld [vmem:[%s532 + $0x18] sm:$0xff]
        %v536 = vld [vmem:[%s532 + $0x20] sm:$0xff]
        %v537 = vld [vmem:[%s532 + $0x30] sm:$0xff]
        %v538 = vld [vmem:[%s532 + $0x38] sm:$0xff]
        %v539 = vld [vmem:[%s532 + $0x48] sm:$0xff]
        %v540 = vld [vmem:[%s532 + $0x50] sm:$0xff]
        %v541 = vld [vmem:[%s532 + $0x60] sm:$0xff]
        %v542 = vld [vmem:[%s532 + $0x68] sm:$0xff]
        %v543 = vld [vmem:[%s532 + $0x78] sm:$0xff]
        %v544 = vld [vmem:[%s532 + $0x80] sm:$0xff]
        %v545 = vld [vmem:[%s532 + $0x90] sm:$0xff]
        %v546 = vld [vmem:[%s532 + $0x98] sm:$0xff]
        %v547 = vld [vmem:[%s532 + $0xa8] sm:$0xff]
        %v548 = vld [vmem:[%s532 + $0xb0] sm:$0xff]
        %v549 = vld [vmem:[%s532 + $0xc0] sm:$0xff]
        %v550 = vld [vmem:[%s532 + $0xc8] sm:$0xff]
        %v551 = vld [vmem:[%s532 + $0xd8] sm:$0xff]
        %v552 = vld [vmem:[%s532 + $0xe0] sm:$0xff]
        %v553 = vld [vmem:[%s532 + $0xf0] sm:$0xff]
        %v554 = vld [vmem:[%s532 + $0xf8] sm:$0xff]
        %v555 = vld [vmem:[%s532 + $0x108] sm:$0xff]
        %v556 = vld [vmem:[%s532 + $0x110] sm:$0xff]
        %v557 = vld [vmem:[%s532 + $0x120] sm:$0xff]
        %v558 = vld [vmem:[%s532 + $0x128] sm:$0xff]
        %v559 = vld [vmem:[%s532 + $0x138] sm:$0xff]
        %v560 = vld [vmem:[%s532 + $0x140] sm:$0xff]
        %v561 = vld [vmem:[%s1] sm:$0x1]
        %v562 = vlaneseq
        %v563 = vshrl.u32 %v562, 7
        %v564 = vsub.s32 0, %v563
        %v565 = vrot.slane %v561, %v564
        %v566 = vmul.f32 %v533, %v565
        %v567 = vmul.f32 %v534, %v565
        %v568 = vmul.f32 %v535, %v565
        %v569 = vmul.f32 %v536, %v565
        %v570 = vmul.f32 %v537, %v565
        %v571 = vmul.f32 %v538, %v565
        %v572 = vmul.f32 %v539, %v565
        %v573 = vmul.f32 %v540, %v565
        %v574 = vmul.f32 %v541, %v565
        %v575 = vmul.f32 %v542, %v565
        %v576 = vmul.f32 %v543, %v565
        %v577 = vmul.f32 %v544, %v565
        %v578 = vmul.f32 %v545, %v565
        %v579 = vmul.f32 %v546, %v565
        %v580 = vmul.f32 %v547, %v565
        %v581 = vmul.f32 %v548, %v565
        %v582 = vadd.f32 %v566, 0.0
        %v583 = vadd.f32 %v567, 0.0
        %v584 = vadd.f32 %v568, 0.0
        %v585 = vadd.f32 %v569, 0.0
        %v586 = vadd.f32 %v570, 0.0
        %v587 = vadd.f32 %v571, 0.0
        %v588 = vadd.f32 %v572, 0.0
        %v589 = vadd.f32 %v573, 0.0
        %v590 = vadd.f32 %v574, 0.0
        %v591 = vadd.f32 %v575, 0.0
        %v592 = vadd.f32 %v576, 0.0
        %v593 = vadd.f32 %v577, 0.0
        %v594 = vadd.f32 %v578, 0.0
        %v595 = vadd.f32 %v579, 0.0
        %v596 = vadd.f32 %v580, 0.0
        %v597 = vadd.f32 %v581, 0.0
        %s598 = scalar_lea.vmem %s1, 8
        %v599 = vld [vmem:[%s598] sm:$0x1]
        %v600 = vlaneseq
        %v601 = vshrl.u32 %v600, 7
        %v602 = vsub.s32 0, %v601
        %v603 = vrot.slane %v599, %v602
        %v604 = vmul.f32 %v535, %v603
        %v605 = vmul.f32 %v536, %v603
        %v606 = vmul.f32 %v537, %v603
        %v607 = vmul.f32 %v538, %v603
        %v608 = vmul.f32 %v539, %v603
        %v609 = vmul.f32 %v540, %v603
        %v610 = vmul.f32 %v541, %v603
        %v611 = vmul.f32 %v542, %v603
        %v612 = vmul.f32 %v543, %v603
        %v613 = vmul.f32 %v544, %v603
        %v614 = vmul.f32 %v545, %v603
        %v615 = vmul.f32 %v546, %v603
        %v616 = vmul.f32 %v547, %v603
        %v617 = vmul.f32 %v548, %v603
        %v618 = vmul.f32 %v549, %v603
        %v619 = vmul.f32 %v550, %v603
        %v620 = vadd.f32 %v582, %v604
        %v621 = vadd.f32 %v583, %v605
        %v622 = vadd.f32 %v584, %v606
        %v623 = vadd.f32 %v585, %v607
        %v624 = vadd.f32 %v586, %v608
        %v625 = vadd.f32 %v587, %v609
        %v626 = vadd.f32 %v588, %v610
        %v627 = vadd.f32 %v589, %v611
        %v628 = vadd.f32 %v590, %v612
        %v629 = vadd.f32 %v591, %v613
        %v630 = vadd.f32 %v592, %v614
        %v631 = vadd.f32 %v593, %v615
        %v632 = vadd.f32 %v594, %v616
        %v633 = vadd.f32 %v595, %v617
        %v634 = vadd.f32 %v596, %v618
        %v635 = vadd.f32 %v597, %v619
        %s636 = scalar_lea.vmem %s1, 16
        %v637 = vld [vmem:[%s636] sm:$0x1]
        %v638 = vlaneseq
        %v639 = vshrl.u32 %v638, 7
        %v640 = vsub.s32 0, %v639
        %v641 = vrot.slane %v637, %v640
        %v642 = vmul.f32 %v537, %v641
        %v643 = vmul.f32 %v538, %v641
        %v644 = vmul.f32 %v539, %v641
        %v645 = vmul.f32 %v540, %v641
        %v646 = vmul.f32 %v541, %v641
        %v647 = vmul.f32 %v542, %v641
        %v648 = vmul.f32 %v543, %v641
        %v649 = vmul.f32 %v544, %v641
        %v650 = vmul.f32 %v545, %v641
        %v651 = vmul.f32 %v546, %v641
        %v652 = vmul.f32 %v547, %v641
        %v653 = vmul.f32 %v548, %v641
        %v654 = vmul.f32 %v549, %v641
        %v655 = vmul.f32 %v550, %v641
        %v656 = vmul.f32 %v551, %v641
        %v657 = vmul.f32 %v552, %v641
        %v658 = vadd.f32 %v620, %v642
        %v659 = vadd.f32 %v621, %v643
        %v660 = vadd.f32 %v622, %v644
        %v661 = vadd.f32 %v623, %v645
        %v662 = vadd.f32 %v624, %v646
        %v663 = vadd.f32 %v625, %v647
        %v664 = vadd.f32 %v626, %v648
        %v665 = vadd.f32 %v627, %v649
        %v666 = vadd.f32 %v628, %v650
        %v667 = vadd.f32 %v629, %v651
        %v668 = vadd.f32 %v630, %v652
        %v669 = vadd.f32 %v631, %v653
        %v670 = vadd.f32 %v632, %v654
        %v671 = vadd.f32 %v633, %v655
        %v672 = vadd.f32 %v634, %v656
        %v673 = vadd.f32 %v635, %v657
        %s674 = scalar_lea.vmem %s1, 24
        %v675 = vld [vmem:[%s674] sm:$0x1]
        %v676 = vlaneseq
        %v677 = vshrl.u32 %v676, 7
        %v678 = vsub.s32 0, %v677
        %v679 = vrot.slane %v675, %v678
        %v680 = vmul.f32 %v539, %v679
        %v681 = vmul.f32 %v540, %v679
        %v682 = vmul.f32 %v541, %v679
        %v683 = vmul.f32 %v542, %v679
        %v684 = vmul.f32 %v543, %v679
        %v685 = vmul.f32 %v544, %v679
        %v686 = vmul.f32 %v545, %v679
        %v687 = vmul.f32 %v546, %v679
        %v688 = vmul.f32 %v547, %v679
        %v689 = vmul.f32 %v548, %v679
        %v690 = vmul.f32 %v549, %v679
        %v691 = vmul.f32 %v550, %v679
        %v692 = vmul.f32 %v551, %v679
        %v693 = vmul.f32 %v552, %v679
        %v694 = vmul.f32 %v553, %v679
        %v695 = vmul.f32 %v554, %v679
        %v696 = vadd.f32 %v658, %v680
        %v697 = vadd.f32 %v659, %v681
        %v698 = vadd.f32 %v660, %v682
        %v699 = vadd.f32 %v661, %v683
        %v700 = vadd.f32 %v662, %v684
        %v701 = vadd.f32 %v663, %v685
        %v702 = vadd.f32 %v664, %v686
        %v703 = vadd.f32 %v665, %v687
        %v704 = vadd.f32 %v666, %v688
        %v705 = vadd.f32 %v667, %v689
        %v706 = vadd.f32 %v668, %v690
        %v707 = vadd.f32 %v669, %v691
        %v708 = vadd.f32 %v670, %v692
        %v709 = vadd.f32 %v671, %v693
        %v710 = vadd.f32 %v672, %v694
        %v711 = vadd.f32 %v673, %v695
        %s712 = scalar_lea.vmem %s1, 32
        %v713 = vld [vmem:[%s712] sm:$0x1]
        %v714 = vlaneseq
        %v715 = vshrl.u32 %v714, 7
        %v716 = vsub.s32 0, %v715
        %v717 = vrot.slane %v713, %v716
        %v718 = vmul.f32 %v541, %v717
        %v719 = vmul.f32 %v542, %v717
        %v720 = vmul.f32 %v543, %v717
        %v721 = vmul.f32 %v544, %v717
        %v722 = vmul.f32 %v545, %v717
        %v723 = vmul.f32 %v546, %v717
        %v724 = vmul.f32 %v547, %v717
        %v725 = vmul.f32 %v548, %v717
        %v726 = vmul.f32 %v549, %v717
        %v727 = vmul.f32 %v550, %v717
        %v728 = vmul.f32 %v551, %v717
        %v729 = vmul.f32 %v552, %v717
        %v730 = vmul.f32 %v553, %v717
        %v731 = vmul.f32 %v554, %v717
        %v732 = vmul.f32 %v555, %v717
        %v733 = vmul.f32 %v556, %v717
        %v734 = vadd.f32 %v696, %v718
        %v735 = vadd.f32 %v697, %v719
        %v736 = vadd.f32 %v698, %v720
        %v737 = vadd.f32 %v699, %v721
        %v738 = vadd.f32 %v700, %v722
        %v739 = vadd.f32 %v701, %v723
        %v740 = vadd.f32 %v702, %v724
        %v741 = vadd.f32 %v703, %v725
        %v742 = vadd.f32 %v704, %v726
        %v743 = vadd.f32 %v705, %v727
        %v744 = vadd.f32 %v706, %v728
        %v745 = vadd.f32 %v707, %v729
        %v746 = vadd.f32 %v708, %v730
        %v747 = vadd.f32 %v709, %v731
        %v748 = vadd.f32 %v710, %v732
        %v749 = vadd.f32 %v711, %v733
        %s750 = scalar_lea.vmem %s1, 40
        %v751 = vld [vmem:[%s750] sm:$0x1]
        %v752 = vlaneseq
        %v753 = vshrl.u32 %v752, 7
        %v754 = vsub.s32 0, %v753
        %v755 = vrot.slane %v751, %v754
        %v756 = vmul.f32 %v543, %v755
        %v757 = vmul.f32 %v544, %v755
        %v758 = vmul.f32 %v545, %v755
        %v759 = vmul.f32 %v546, %v755
        %v760 = vmul.f32 %v547, %v755
        %v761 = vmul.f32 %v548, %v755
        %v762 = vmul.f32 %v549, %v755
        %v763 = vmul.f32 %v550, %v755
        %v764 = vmul.f32 %v551, %v755
        %v765 = vmul.f32 %v552, %v755
        %v766 = vmul.f32 %v553, %v755
        %v767 = vmul.f32 %v554, %v755
        %v768 = vmul.f32 %v555, %v755
        %v769 = vmul.f32 %v556, %v755
        %v770 = vmul.f32 %v557, %v755
        %v771 = vmul.f32 %v558, %v755
        %v772 = vadd.f32 %v734, %v756
        %v773 = vadd.f32 %v735, %v757
        %v774 = vadd.f32 %v736, %v758
        %v775 = vadd.f32 %v737, %v759
        %v776 = vadd.f32 %v738, %v760
        %v777 = vadd.f32 %v739, %v761
        %v778 = vadd.f32 %v740, %v762
        %v779 = vadd.f32 %v741, %v763
        %v780 = vadd.f32 %v742, %v764
        %v781 = vadd.f32 %v743, %v765
        %v782 = vadd.f32 %v744, %v766
        %v783 = vadd.f32 %v745, %v767
        %v784 = vadd.f32 %v746, %v768
        %v785 = vadd.f32 %v747, %v769
        %v786 = vadd.f32 %v748, %v770
        %v787 = vadd.f32 %v749, %v771
        %s788 = scalar_lea.vmem %s1, 48
        %v789 = vld [vmem:[%s788] sm:$0x1]
        %v790 = vlaneseq
        %v791 = vshrl.u32 %v790, 7
        %v792 = vsub.s32 0, %v791
        %v793 = vrot.slane %v789, %v792
        %v794 = vmul.f32 %v545, %v793
        %v795 = vmul.f32 %v546, %v793
        %v796 = vmul.f32 %v547, %v793
        %v797 = vmul.f32 %v548, %v793
        %v798 = vmul.f32 %v549, %v793
        %v799 = vmul.f32 %v550, %v793
        %v800 = vmul.f32 %v551, %v793
        %v801 = vmul.f32 %v552, %v793
        %v802 = vmul.f32 %v553, %v793
        %v803 = vmul.f32 %v554, %v793
        %v804 = vmul.f32 %v555, %v793
        %v805 = vmul.f32 %v556, %v793
        %v806 = vmul.f32 %v557, %v793
        %v807 = vmul.f32 %v558, %v793
        %v808 = vmul.f32 %v559, %v793
        %v809 = vmul.f32 %v560, %v793
        %v810 = vadd.f32 %v772, %v794
        %v811 = vadd.f32 %v773, %v795
        %v812 = vadd.f32 %v774, %v796
        %v813 = vadd.f32 %v775, %v797
        %v814 = vadd.f32 %v776, %v798
        %v815 = vadd.f32 %v777, %v799
        %v816 = vadd.f32 %v778, %v800
        %v817 = vadd.f32 %v779, %v801
        %v818 = vadd.f32 %v780, %v802
        %v819 = vadd.f32 %v781, %v803
        %v820 = vadd.f32 %v782, %v804
        %v821 = vadd.f32 %v783, %v805
        %v822 = vadd.f32 %v784, %v806
        %v823 = vadd.f32 %v785, %v807
        %v824 = vadd.f32 %v786, %v808
        %v825 = vadd.f32 %v787, %v809
        %v826 = vld [vmem:[%s532 + $0x1] sm:$0xff]
        %v827 = vld [vmem:[%s532 + $0x9] sm:$0xff]
        %v828 = vld [vmem:[%s532 + $0x19] sm:$0xff]
        %v829 = vld [vmem:[%s532 + $0x21] sm:$0xff]
        %v830 = vld [vmem:[%s532 + $0x31] sm:$0xff]
        %v831 = vld [vmem:[%s532 + $0x39] sm:$0xff]
        %v832 = vld [vmem:[%s532 + $0x49] sm:$0xff]
        %v833 = vld [vmem:[%s532 + $0x51] sm:$0xff]
        %v834 = vld [vmem:[%s532 + $0x61] sm:$0xff]
        %v835 = vld [vmem:[%s532 + $0x69] sm:$0xff]
        %v836 = vld [vmem:[%s532 + $0x79] sm:$0xff]
        %v837 = vld [vmem:[%s532 + $0x81] sm:$0xff]
        %v838 = vld [vmem:[%s532 + $0x91] sm:$0xff]
        %v839 = vld [vmem:[%s532 + $0x99] sm:$0xff]
        %v840 = vld [vmem:[%s532 + $0xa9] sm:$0xff]
        %v841 = vld [vmem:[%s532 + $0xb1] sm:$0xff]
        %v842 = vld [vmem:[%s532 + $0xc1] sm:$0xff]
        %v843 = vld [vmem:[%s532 + $0xc9] sm:$0xff]
        %v844 = vld [vmem:[%s532 + $0xd9] sm:$0xff]
        %v845 = vld [vmem:[%s532 + $0xe1] sm:$0xff]
        %v846 = vld [vmem:[%s532 + $0xf1] sm:$0xff]
        %v847 = vld [vmem:[%s532 + $0xf9] sm:$0xff]
        %v848 = vld [vmem:[%s532 + $0x109] sm:$0xff]
        %v849 = vld [vmem:[%s532 + $0x111] sm:$0xff]
        %v850 = vld [vmem:[%s532 + $0x121] sm:$0xff]
        %v851 = vld [vmem:[%s532 + $0x129] sm:$0xff]
        %v852 = vld [vmem:[%s532 + $0x139] sm:$0xff]
        %v853 = vld [vmem:[%s532 + $0x141] sm:$0xff]
        %v854 = vld [vmem:[%s1 + $0x1] sm:$0x1]
        %v855 = vlaneseq
        %v856 = vshrl.u32 %v855, 7
        %v857 = vsub.s32 0, %v856
        %v858 = vrot.slane %v854, %v857
        %v859 = vmul.f32 %v826, %v858
        %v860 = vmul.f32 %v827, %v858
        %v861 = vmul.f32 %v828, %v858
        %v862 = vmul.f32 %v829, %v858
        %v863 = vmul.f32 %v830, %v858
        %v864 = vmul.f32 %v831, %v858
        %v865 = vmul.f32 %v832, %v858
        %v866 = vmul.f32 %v833, %v858
        %v867 = vmul.f32 %v834, %v858
        %v868 = vmul.f32 %v835, %v858
        %v869 = vmul.f32 %v836, %v858
        %v870 = vmul.f32 %v837, %v858
        %v871 = vmul.f32 %v838, %v858
        %v872 = vmul.f32 %v839, %v858
        %v873 = vmul.f32 %v840, %v858
        %v874 = vmul.f32 %v841, %v858
        %v875 = vadd.f32 %v810, %v859
        %v876 = vadd.f32 %v811, %v860
        %v877 = vadd.f32 %v812, %v861
        %v878 = vadd.f32 %v813, %v862
        %v879 = vadd.f32 %v814, %v863
        %v880 = vadd.f32 %v815, %v864
        %v881 = vadd.f32 %v816, %v865
        %v882 = vadd.f32 %v817, %v866
        %v883 = vadd.f32 %v818, %v867
        %v884 = vadd.f32 %v819, %v868
        %v885 = vadd.f32 %v820, %v869
        %v886 = vadd.f32 %v821, %v870
        %v887 = vadd.f32 %v822, %v871
        %v888 = vadd.f32 %v823, %v872
        %v889 = vadd.f32 %v824, %v873
        %v890 = vadd.f32 %v825, %v874
        %v891 = vld [vmem:[%s598 + $0x1] sm:$0x1]
        %v892 = vlaneseq
        %v893 = vshrl.u32 %v892, 7
        %v894 = vsub.s32 0, %v893
        %v895 = vrot.slane %v891, %v894
        %v896 = vmul.f32 %v828, %v895
        %v897 = vmul.f32 %v829, %v895
        %v898 = vmul.f32 %v830, %v895
        %v899 = vmul.f32 %v831, %v895
        %v900 = vmul.f32 %v832, %v895
        %v901 = vmul.f32 %v833, %v895
        %v902 = vmul.f32 %v834, %v895
        %v903 = vmul.f32 %v835, %v895
        %v904 = vmul.f32 %v836, %v895
        %v905 = vmul.f32 %v837, %v895
        %v906 = vmul.f32 %v838, %v895
        %v907 = vmul.f32 %v839, %v895
        %v908 = vmul.f32 %v840, %v895
        %v909 = vmul.f32 %v841, %v895
        %v910 = vmul.f32 %v842, %v895
        %v911 = vmul.f32 %v843, %v895
        %v912 = vadd.f32 %v875, %v896
        %v913 = vadd.f32 %v876, %v897
        %v914 = vadd.f32 %v877, %v898
        %v915 = vadd.f32 %v878, %v899
        %v916 = vadd.f32 %v879, %v900
        %v917 = vadd.f32 %v880, %v901
        %v918 = vadd.f32 %v881, %v902
        %v919 = vadd.f32 %v882, %v903
        %v920 = vadd.f32 %v883, %v904
        %v921 = vadd.f32 %v884, %v905
        %v922 = vadd.f32 %v885, %v906
        %v923 = vadd.f32 %v886, %v907
        %v924 = vadd.f32 %v887, %v908
        %v925 = vadd.f32 %v888, %v909
        %v926 = vadd.f32 %v889, %v910
        %v927 = vadd.f32 %v890, %v911
        %v928 = vld [vmem:[%s636 + $0x1] sm:$0x1]
        %v929 = vlaneseq
        %v930 = vshrl.u32 %v929, 7
        %v931 = vsub.s32 0, %v930
        %v932 = vrot.slane %v928, %v931
        %v933 = vmul.f32 %v830, %v932
        %v934 = vmul.f32 %v831, %v932
        %v935 = vmul.f32 %v832, %v932
        %v936 = vmul.f32 %v833, %v932
        %v937 = vmul.f32 %v834, %v932
        %v938 = vmul.f32 %v835, %v932
        %v939 = vmul.f32 %v836, %v932
        %v940 = vmul.f32 %v837, %v932
        %v941 = vmul.f32 %v838, %v932
        %v942 = vmul.f32 %v839, %v932
        %v943 = vmul.f32 %v840, %v932
        %v944 = vmul.f32 %v841, %v932
        %v945 = vmul.f32 %v842, %v932
        %v946 = vmul.f32 %v843, %v932
        %v947 = vmul.f32 %v844, %v932
        %v948 = vmul.f32 %v845, %v932
        %v949 = vadd.f32 %v912, %v933
        %v950 = vadd.f32 %v913, %v934
        %v951 = vadd.f32 %v914, %v935
        %v952 = vadd.f32 %v915, %v936
        %v953 = vadd.f32 %v916, %v937
        %v954 = vadd.f32 %v917, %v938
        %v955 = vadd.f32 %v918, %v939
        %v956 = vadd.f32 %v919, %v940
        %v957 = vadd.f32 %v920, %v941
        %v958 = vadd.f32 %v921, %v942
        %v959 = vadd.f32 %v922, %v943
        %v960 = vadd.f32 %v923, %v944
        %v961 = vadd.f32 %v924, %v945
        %v962 = vadd.f32 %v925, %v946
        %v963 = vadd.f32 %v926, %v947
        %v964 = vadd.f32 %v927, %v948
        %v965 = vld [vmem:[%s674 + $0x1] sm:$0x1]
        %v966 = vlaneseq
        %v967 = vshrl.u32 %v966, 7
        %v968 = vsub.s32 0, %v967
        %v969 = vrot.slane %v965, %v968
        %v970 = vmul.f32 %v832, %v969
        %v971 = vmul.f32 %v833, %v969
        %v972 = vmul.f32 %v834, %v969
        %v973 = vmul.f32 %v835, %v969
        %v974 = vmul.f32 %v836, %v969
        %v975 = vmul.f32 %v837, %v969
        %v976 = vmul.f32 %v838, %v969
        %v977 = vmul.f32 %v839, %v969
        %v978 = vmul.f32 %v840, %v969
        %v979 = vmul.f32 %v841, %v969
        %v980 = vmul.f32 %v842, %v969
        %v981 = vmul.f32 %v843, %v969
        %v982 = vmul.f32 %v844, %v969
        %v983 = vmul.f32 %v845, %v969
        %v984 = vmul.f32 %v846, %v969
        %v985 = vmul.f32 %v847, %v969
        %v986 = vadd.f32 %v949, %v970
        %v987 = vadd.f32 %v950, %v971
        %v988 = vadd.f32 %v951, %v972
        %v989 = vadd.f32 %v952, %v973
        %v990 = vadd.f32 %v953, %v974
        %v991 = vadd.f32 %v954, %v975
        %v992 = vadd.f32 %v955, %v976
        %v993 = vadd.f32 %v956, %v977
        %v994 = vadd.f32 %v957, %v978
        %v995 = vadd.f32 %v958, %v979
        %v996 = vadd.f32 %v959, %v980
        %v997 = vadd.f32 %v960, %v981
        %v998 = vadd.f32 %v961, %v982
        %v999 = vadd.f32 %v962, %v983
        %v1000 = vadd.f32 %v963, %v984
        %v1001 = vadd.f32 %v964, %v985
        %v1002 = vld [vmem:[%s712 + $0x1] sm:$0x1]
        %v1003 = vlaneseq
        %v1004 = vshrl.u32 %v1003, 7
        %v1005 = vsub.s32 0, %v1004
        %v1006 = vrot.slane %v1002, %v1005
        %v1007 = vmul.f32 %v834, %v1006
        %v1008 = vmul.f32 %v835, %v1006
        %v1009 = vmul.f32 %v836, %v1006
        %v1010 = vmul.f32 %v837, %v1006
        %v1011 = vmul.f32 %v838, %v1006
        %v1012 = vmul.f32 %v839, %v1006
        %v1013 = vmul.f32 %v840, %v1006
        %v1014 = vmul.f32 %v841, %v1006
        %v1015 = vmul.f32 %v842, %v1006
        %v1016 = vmul.f32 %v843, %v1006
        %v1017 = vmul.f32 %v844, %v1006
        %v1018 = vmul.f32 %v845, %v1006
        %v1019 = vmul.f32 %v846, %v1006
        %v1020 = vmul.f32 %v847, %v1006
        %v1021 = vmul.f32 %v848, %v1006
        %v1022 = vmul.f32 %v849, %v1006
        %v1023 = vadd.f32 %v986, %v1007
        %v1024 = vadd.f32 %v987, %v1008
        %v1025 = vadd.f32 %v988, %v1009
        %v1026 = vadd.f32 %v989, %v1010
        %v1027 = vadd.f32 %v990, %v1011
        %v1028 = vadd.f32 %v991, %v1012
        %v1029 = vadd.f32 %v992, %v1013
        %v1030 = vadd.f32 %v993, %v1014
        %v1031 = vadd.f32 %v994, %v1015
        %v1032 = vadd.f32 %v995, %v1016
        %v1033 = vadd.f32 %v996, %v1017
        %v1034 = vadd.f32 %v997, %v1018
        %v1035 = vadd.f32 %v998, %v1019
        %v1036 = vadd.f32 %v999, %v1020
        %v1037 = vadd.f32 %v1000, %v1021
        %v1038 = vadd.f32 %v1001, %v1022
        %v1039 = vld [vmem:[%s750 + $0x1] sm:$0x1]
        %v1040 = vlaneseq
        %v1041 = vshrl.u32 %v1040, 7
        %v1042 = vsub.s32 0, %v1041
        %v1043 = vrot.slane %v1039, %v1042
        %v1044 = vmul.f32 %v836, %v1043
        %v1045 = vmul.f32 %v837, %v1043
        %v1046 = vmul.f32 %v838, %v1043
        %v1047 = vmul.f32 %v839, %v1043
        %v1048 = vmul.f32 %v840, %v1043
        %v1049 = vmul.f32 %v841, %v1043
        %v1050 = vmul.f32 %v842, %v1043
        %v1051 = vmul.f32 %v843, %v1043
        %v1052 = vmul.f32 %v844, %v1043
        %v1053 = vmul.f32 %v845, %v1043
        %v1054 = vmul.f32 %v846, %v1043
        %v1055 = vmul.f32 %v847, %v1043
        %v1056 = vmul.f32 %v848, %v1043
        %v1057 = vmul.f32 %v849, %v1043
        %v1058 = vmul.f32 %v850, %v1043
        %v1059 = vmul.f32 %v851, %v1043
        %v1060 = vadd.f32 %v1023, %v1044
        %v1061 = vadd.f32 %v1024, %v1045
        %v1062 = vadd.f32 %v1025, %v1046
        %v1063 = vadd.f32 %v1026, %v1047
        %v1064 = vadd.f32 %v1027, %v1048
        %v1065 = vadd.f32 %v1028, %v1049
        %v1066 = vadd.f32 %v1029, %v1050
        %v1067 = vadd.f32 %v1030, %v1051
        %v1068 = vadd.f32 %v1031, %v1052
        %v1069 = vadd.f32 %v1032, %v1053
        %v1070 = vadd.f32 %v1033, %v1054
        %v1071 = vadd.f32 %v1034, %v1055
        %v1072 = vadd.f32 %v1035, %v1056
        %v1073 = vadd.f32 %v1036, %v1057
        %v1074 = vadd.f32 %v1037, %v1058
        %v1075 = vadd.f32 %v1038, %v1059
        %v1076 = vld [vmem:[%s788 + $0x1] sm:$0x1]
        %v1077 = vlaneseq
        %v1078 = vshrl.u32 %v1077, 7
        %v1079 = vsub.s32 0, %v1078
        %v1080 = vrot.slane %v1076, %v1079
        %v1081 = vmul.f32 %v838, %v1080
        %v1082 = vmul.f32 %v839, %v1080
        %v1083 = vmul.f32 %v840, %v1080
        %v1084 = vmul.f32 %v841, %v1080
        %v1085 = vmul.f32 %v842, %v1080
        %v1086 = vmul.f32 %v843, %v1080
        %v1087 = vmul.f32 %v844, %v1080
        %v1088 = vmul.f32 %v845, %v1080
        %v1089 = vmul.f32 %v846, %v1080
        %v1090 = vmul.f32 %v847, %v1080
        %v1091 = vmul.f32 %v848, %v1080
        %v1092 = vmul.f32 %v849, %v1080
        %v1093 = vmul.f32 %v850, %v1080
        %v1094 = vmul.f32 %v851, %v1080
        %v1095 = vmul.f32 %v852, %v1080
        %v1096 = vmul.f32 %v853, %v1080
        %v1097 = vadd.f32 %v1060, %v1081
        %v1098 = vadd.f32 %v1061, %v1082
        %v1099 = vadd.f32 %v1062, %v1083
        %v1100 = vadd.f32 %v1063, %v1084
        %v1101 = vadd.f32 %v1064, %v1085
        %v1102 = vadd.f32 %v1065, %v1086
        %v1103 = vadd.f32 %v1066, %v1087
        %v1104 = vadd.f32 %v1067, %v1088
        %v1105 = vadd.f32 %v1068, %v1089
        %v1106 = vadd.f32 %v1069, %v1090
        %v1107 = vadd.f32 %v1070, %v1091
        %v1108 = vadd.f32 %v1071, %v1092
        %v1109 = vadd.f32 %v1072, %v1093
        %v1110 = vadd.f32 %v1073, %v1094
        %v1111 = vadd.f32 %v1074, %v1095
        %v1112 = vadd.f32 %v1075, %v1096
        %v1113 = vld [vmem:[%s532 + $0x2] sm:$0xff]
        %v1114 = vld [vmem:[%s532 + $0xa] sm:$0xff]
        %v1115 = vld [vmem:[%s532 + $0x1a] sm:$0xff]
        %v1116 = vld [vmem:[%s532 + $0x22] sm:$0xff]
        %v1117 = vld [vmem:[%s532 + $0x32] sm:$0xff]
        %v1118 = vld [vmem:[%s532 + $0x3a] sm:$0xff]
        %v1119 = vld [vmem:[%s532 + $0x4a] sm:$0xff]
        %v1120 = vld [vmem:[%s532 + $0x52] sm:$0xff]
        %v1121 = vld [vmem:[%s532 + $0x62] sm:$0xff]
        %v1122 = vld [vmem:[%s532 + $0x6a] sm:$0xff]
        %v1123 = vld [vmem:[%s532 + $0x7a] sm:$0xff]
        %v1124 = vld [vmem:[%s532 + $0x82] sm:$0xff]
        %v1125 = vld [vmem:[%s532 + $0x92] sm:$0xff]
        %v1126 = vld [vmem:[%s532 + $0x9a] sm:$0xff]
        %v1127 = vld [vmem:[%s532 + $0xaa] sm:$0xff]
        %v1128 = vld [vmem:[%s532 + $0xb2] sm:$0xff]
        %v1129 = vld [vmem:[%s532 + $0xc2] sm:$0xff]
        %v1130 = vld [vmem:[%s532 + $0xca] sm:$0xff]
        %v1131 = vld [vmem:[%s532 + $0xda] sm:$0xff]
        %v1132 = vld [vmem:[%s532 + $0xe2] sm:$0xff]
        %v1133 = vld [vmem:[%s532 + $0xf2] sm:$0xff]
        %v1134 = vld [vmem:[%s532 + $0xfa] sm:$0xff]
        %v1135 = vld [vmem:[%s532 + $0x10a] sm:$0xff]
        %v1136 = vld [vmem:[%s532 + $0x112] sm:$0xff]
        %v1137 = vld [vmem:[%s532 + $0x122] sm:$0xff]
        %v1138 = vld [vmem:[%s532 + $0x12a] sm:$0xff]
        %v1139 = vld [vmem:[%s532 + $0x13a] sm:$0xff]
        %v1140 = vld [vmem:[%s532 + $0x142] sm:$0xff]
        %v1141 = vld [vmem:[%s1 + $0x2] sm:$0x1]
        %v1142 = vlaneseq
        %v1143 = vshrl.u32 %v1142, 7
        %v1144 = vsub.s32 0, %v1143
        %v1145 = vrot.slane %v1141, %v1144
        %v1146 = vmul.f32 %v1113, %v1145
        %v1147 = vmul.f32 %v1114, %v1145
        %v1148 = vmul.f32 %v1115, %v1145
        %v1149 = vmul.f32 %v1116, %v1145
        %v1150 = vmul.f32 %v1117, %v1145
        %v1151 = vmul.f32 %v1118, %v1145
        %v1152 = vmul.f32 %v1119, %v1145
        %v1153 = vmul.f32 %v1120, %v1145
        %v1154 = vmul.f32 %v1121, %v1145
        %v1155 = vmul.f32 %v1122, %v1145
        %v1156 = vmul.f32 %v1123, %v1145
        %v1157 = vmul.f32 %v1124, %v1145
        %v1158 = vmul.f32 %v1125, %v1145
        %v1159 = vmul.f32 %v1126, %v1145
        %v1160 = vmul.f32 %v1127, %v1145
        %v1161 = vmul.f32 %v1128, %v1145
        %v1162 = vadd.f32 %v1097, %v1146
        %v1163 = vadd.f32 %v1098, %v1147
        %v1164 = vadd.f32 %v1099, %v1148
        %v1165 = vadd.f32 %v1100, %v1149
        %v1166 = vadd.f32 %v1101, %v1150
        %v1167 = vadd.f32 %v1102, %v1151
        %v1168 = vadd.f32 %v1103, %v1152
        %v1169 = vadd.f32 %v1104, %v1153
        %v1170 = vadd.f32 %v1105, %v1154
        %v1171 = vadd.f32 %v1106, %v1155
        %v1172 = vadd.f32 %v1107, %v1156
        %v1173 = vadd.f32 %v1108, %v1157
        %v1174 = vadd.f32 %v1109, %v1158
        %v1175 = vadd.f32 %v1110, %v1159
        %v1176 = vadd.f32 %v1111, %v1160
        %v1177 = vadd.f32 %v1112, %v1161
        %v1178 = vld [vmem:[%s598 + $0x2] sm:$0x1]
        %v1179 = vlaneseq
        %v1180 = vshrl.u32 %v1179, 7
        %v1181 = vsub.s32 0, %v1180
        %v1182 = vrot.slane %v1178, %v1181
        %v1183 = vmul.f32 %v1115, %v1182
        %v1184 = vmul.f32 %v1116, %v1182
        %v1185 = vmul.f32 %v1117, %v1182
        %v1186 = vmul.f32 %v1118, %v1182
        %v1187 = vmul.f32 %v1119, %v1182
        %v1188 = vmul.f32 %v1120, %v1182
        %v1189 = vmul.f32 %v1121, %v1182
        %v1190 = vmul.f32 %v1122, %v1182
        %v1191 = vmul.f32 %v1123, %v1182
        %v1192 = vmul.f32 %v1124, %v1182
        %v1193 = vmul.f32 %v1125, %v1182
        %v1194 = vmul.f32 %v1126, %v1182
        %v1195 = vmul.f32 %v1127, %v1182
        %v1196 = vmul.f32 %v1128, %v1182
        %v1197 = vmul.f32 %v1129, %v1182
        %v1198 = vmul.f32 %v1130, %v1182
        %v1199 = vadd.f32 %v1162, %v1183
        %v1200 = vadd.f32 %v1163, %v1184
        %v1201 = vadd.f32 %v1164, %v1185
        %v1202 = vadd.f32 %v1165, %v1186
        %v1203 = vadd.f32 %v1166, %v1187
        %v1204 = vadd.f32 %v1167, %v1188
        %v1205 = vadd.f32 %v1168, %v1189
        %v1206 = vadd.f32 %v1169, %v1190
        %v1207 = vadd.f32 %v1170, %v1191
        %v1208 = vadd.f32 %v1171, %v1192
        %v1209 = vadd.f32 %v1172, %v1193
        %v1210 = vadd.f32 %v1173, %v1194
        %v1211 = vadd.f32 %v1174, %v1195
        %v1212 = vadd.f32 %v1175, %v1196
        %v1213 = vadd.f32 %v1176, %v1197
        %v1214 = vadd.f32 %v1177, %v1198
        %v1215 = vld [vmem:[%s636 + $0x2] sm:$0x1]
        %v1216 = vlaneseq
        %v1217 = vshrl.u32 %v1216, 7
        %v1218 = vsub.s32 0, %v1217
        %v1219 = vrot.slane %v1215, %v1218
        %v1220 = vmul.f32 %v1117, %v1219
        %v1221 = vmul.f32 %v1118, %v1219
        %v1222 = vmul.f32 %v1119, %v1219
        %v1223 = vmul.f32 %v1120, %v1219
        %v1224 = vmul.f32 %v1121, %v1219
        %v1225 = vmul.f32 %v1122, %v1219
        %v1226 = vmul.f32 %v1123, %v1219
        %v1227 = vmul.f32 %v1124, %v1219
        %v1228 = vmul.f32 %v1125, %v1219
        %v1229 = vmul.f32 %v1126, %v1219
        %v1230 = vmul.f32 %v1127, %v1219
        %v1231 = vmul.f32 %v1128, %v1219
        %v1232 = vmul.f32 %v1129, %v1219
        %v1233 = vmul.f32 %v1130, %v1219
        %v1234 = vmul.f32 %v1131, %v1219
        %v1235 = vmul.f32 %v1132, %v1219
        %v1236 = vadd.f32 %v1199, %v1220
        %v1237 = vadd.f32 %v1200, %v1221
        %v1238 = vadd.f32 %v1201, %v1222
        %v1239 = vadd.f32 %v1202, %v1223
        %v1240 = vadd.f32 %v1203, %v1224
        %v1241 = vadd.f32 %v1204, %v1225
        %v1242 = vadd.f32 %v1205, %v1226
        %v1243 = vadd.f32 %v1206, %v1227
        %v1244 = vadd.f32 %v1207, %v1228
        %v1245 = vadd.f32 %v1208, %v1229
        %v1246 = vadd.f32 %v1209, %v1230
        %v1247 = vadd.f32 %v1210, %v1231
        %v1248 = vadd.f32 %v1211, %v1232
        %v1249 = vadd.f32 %v1212, %v1233
        %v1250 = vadd.f32 %v1213, %v1234
        %v1251 = vadd.f32 %v1214, %v1235
        %v1252 = vld [vmem:[%s674 + $0x2] sm:$0x1]
        %v1253 = vlaneseq
        %v1254 = vshrl.u32 %v1253, 7
        %v1255 = vsub.s32 0, %v1254
        %v1256 = vrot.slane %v1252, %v1255
        %v1257 = vmul.f32 %v1119, %v1256
        %v1258 = vmul.f32 %v1120, %v1256
        %v1259 = vmul.f32 %v1121, %v1256
        %v1260 = vmul.f32 %v1122, %v1256
        %v1261 = vmul.f32 %v1123, %v1256
        %v1262 = vmul.f32 %v1124, %v1256
        %v1263 = vmul.f32 %v1125, %v1256
        %v1264 = vmul.f32 %v1126, %v1256
        %v1265 = vmul.f32 %v1127, %v1256
        %v1266 = vmul.f32 %v1128, %v1256
        %v1267 = vmul.f32 %v1129, %v1256
        %v1268 = vmul.f32 %v1130, %v1256
        %v1269 = vmul.f32 %v1131, %v1256
        %v1270 = vmul.f32 %v1132, %v1256
        %v1271 = vmul.f32 %v1133, %v1256
        %v1272 = vmul.f32 %v1134, %v1256
        %v1273 = vadd.f32 %v1236, %v1257
        %v1274 = vadd.f32 %v1237, %v1258
        %v1275 = vadd.f32 %v1238, %v1259
        %v1276 = vadd.f32 %v1239, %v1260
        %v1277 = vadd.f32 %v1240, %v1261
        %v1278 = vadd.f32 %v1241, %v1262
        %v1279 = vadd.f32 %v1242, %v1263
        %v1280 = vadd.f32 %v1243, %v1264
        %v1281 = vadd.f32 %v1244, %v1265
        %v1282 = vadd.f32 %v1245, %v1266
        %v1283 = vadd.f32 %v1246, %v1267
        %v1284 = vadd.f32 %v1247, %v1268
        %v1285 = vadd.f32 %v1248, %v1269
        %v1286 = vadd.f32 %v1249, %v1270
        %v1287 = vadd.f32 %v1250, %v1271
        %v1288 = vadd.f32 %v1251, %v1272
        %v1289 = vld [vmem:[%s712 + $0x2] sm:$0x1]
        %v1290 = vlaneseq
        %v1291 = vshrl.u32 %v1290, 7
        %v1292 = vsub.s32 0, %v1291
        %v1293 = vrot.slane %v1289, %v1292
        %v1294 = vmul.f32 %v1121, %v1293
        %v1295 = vmul.f32 %v1122, %v1293
        %v1296 = vmul.f32 %v1123, %v1293
        %v1297 = vmul.f32 %v1124, %v1293
        %v1298 = vmul.f32 %v1125, %v1293
        %v1299 = vmul.f32 %v1126, %v1293
        %v1300 = vmul.f32 %v1127, %v1293
        %v1301 = vmul.f32 %v1128, %v1293
        %v1302 = vmul.f32 %v1129, %v1293
        %v1303 = vmul.f32 %v1130, %v1293
        %v1304 = vmul.f32 %v1131, %v1293
        %v1305 = vmul.f32 %v1132, %v1293
        %v1306 = vmul.f32 %v1133, %v1293
        %v1307 = vmul.f32 %v1134, %v1293
        %v1308 = vmul.f32 %v1135, %v1293
        %v1309 = vmul.f32 %v1136, %v1293
        %v1310 = vadd.f32 %v1273, %v1294
        %v1311 = vadd.f32 %v1274, %v1295
        %v1312 = vadd.f32 %v1275, %v1296
        %v1313 = vadd.f32 %v1276, %v1297
        %v1314 = vadd.f32 %v1277, %v1298
        %v1315 = vadd.f32 %v1278, %v1299
        %v1316 = vadd.f32 %v1279, %v1300
        %v1317 = vadd.f32 %v1280, %v1301
        %v1318 = vadd.f32 %v1281, %v1302
        %v1319 = vadd.f32 %v1282, %v1303
        %v1320 = vadd.f32 %v1283, %v1304
        %v1321 = vadd.f32 %v1284, %v1305
        %v1322 = vadd.f32 %v1285, %v1306
        %v1323 = vadd.f32 %v1286, %v1307
        %v1324 = vadd.f32 %v1287, %v1308
        %v1325 = vadd.f32 %v1288, %v1309
        %v1326 = vld [vmem:[%s750 + $0x2] sm:$0x1]
        %v1327 = vlaneseq
        %v1328 = vshrl.u32 %v1327, 7
        %v1329 = vsub.s32 0, %v1328
        %v1330 = vrot.slane %v1326, %v1329
        %v1331 = vmul.f32 %v1123, %v1330
        %v1332 = vmul.f32 %v1124, %v1330
        %v1333 = vmul.f32 %v1125, %v1330
        %v1334 = vmul.f32 %v1126, %v1330
        %v1335 = vmul.f32 %v1127, %v1330
        %v1336 = vmul.f32 %v1128, %v1330
        %v1337 = vmul.f32 %v1129, %v1330
        %v1338 = vmul.f32 %v1130, %v1330
        %v1339 = vmul.f32 %v1131, %v1330
        %v1340 = vmul.f32 %v1132, %v1330
        %v1341 = vmul.f32 %v1133, %v1330
        %v1342 = vmul.f32 %v1134, %v1330
        %v1343 = vmul.f32 %v1135, %v1330
        %v1344 = vmul.f32 %v1136, %v1330
        %v1345 = vmul.f32 %v1137, %v1330
        %v1346 = vmul.f32 %v1138, %v1330
        %v1347 = vadd.f32 %v1310, %v1331
        %v1348 = vadd.f32 %v1311, %v1332
        %v1349 = vadd.f32 %v1312, %v1333
        %v1350 = vadd.f32 %v1313, %v1334
        %v1351 = vadd.f32 %v1314, %v1335
        %v1352 = vadd.f32 %v1315, %v1336
        %v1353 = vadd.f32 %v1316, %v1337
        %v1354 = vadd.f32 %v1317, %v1338
        %v1355 = vadd.f32 %v1318, %v1339
        %v1356 = vadd.f32 %v1319, %v1340
        %v1357 = vadd.f32 %v1320, %v1341
        %v1358 = vadd.f32 %v1321, %v1342
        %v1359 = vadd.f32 %v1322, %v1343
        %v1360 = vadd.f32 %v1323, %v1344
        %v1361 = vadd.f32 %v1324, %v1345
        %v1362 = vadd.f32 %v1325, %v1346
        %v1363 = vld [vmem:[%s788 + $0x2] sm:$0x1]
        %v1364 = vlaneseq
        %v1365 = vshrl.u32 %v1364, 7
        %v1366 = vsub.s32 0, %v1365
        %v1367 = vrot.slane %v1363, %v1366
        %v1368 = vmul.f32 %v1125, %v1367
        %v1369 = vmul.f32 %v1126, %v1367
        %v1370 = vmul.f32 %v1127, %v1367
        %v1371 = vmul.f32 %v1128, %v1367
        %v1372 = vmul.f32 %v1129, %v1367
        %v1373 = vmul.f32 %v1130, %v1367
        %v1374 = vmul.f32 %v1131, %v1367
        %v1375 = vmul.f32 %v1132, %v1367
        %v1376 = vmul.f32 %v1133, %v1367
        %v1377 = vmul.f32 %v1134, %v1367
        %v1378 = vmul.f32 %v1135, %v1367
        %v1379 = vmul.f32 %v1136, %v1367
        %v1380 = vmul.f32 %v1137, %v1367
        %v1381 = vmul.f32 %v1138, %v1367
        %v1382 = vmul.f32 %v1139, %v1367
        %v1383 = vmul.f32 %v1140, %v1367
        %v1384 = vadd.f32 %v1347, %v1368
        %v1385 = vadd.f32 %v1348, %v1369
        %v1386 = vadd.f32 %v1349, %v1370
        %v1387 = vadd.f32 %v1350, %v1371
        %v1388 = vadd.f32 %v1351, %v1372
        %v1389 = vadd.f32 %v1352, %v1373
        %v1390 = vadd.f32 %v1353, %v1374
        %v1391 = vadd.f32 %v1354, %v1375
        %v1392 = vadd.f32 %v1355, %v1376
        %v1393 = vadd.f32 %v1356, %v1377
        %v1394 = vadd.f32 %v1357, %v1378
        %v1395 = vadd.f32 %v1358, %v1379
        %v1396 = vadd.f32 %v1359, %v1380
        %v1397 = vadd.f32 %v1360, %v1381
        %v1398 = vadd.f32 %v1361, %v1382
        %v1399 = vadd.f32 %v1362, %v1383
        %v1400 = vld [vmem:[%s532 + $0x3] sm:$0xff]
        %v1401 = vld [vmem:[%s532 + $0xb] sm:$0xff]
        %v1402 = vld [vmem:[%s532 + $0x1b] sm:$0xff]
        %v1403 = vld [vmem:[%s532 + $0x23] sm:$0xff]
        %v1404 = vld [vmem:[%s532 + $0x33] sm:$0xff]
        %v1405 = vld [vmem:[%s532 + $0x3b] sm:$0xff]
        %v1406 = vld [vmem:[%s532 + $0x4b] sm:$0xff]
        %v1407 = vld [vmem:[%s532 + $0x53] sm:$0xff]
        %v1408 = vld [vmem:[%s532 + $0x63] sm:$0xff]
        %v1409 = vld [vmem:[%s532 + $0x6b] sm:$0xff]
        %v1410 = vld [vmem:[%s532 + $0x7b] sm:$0xff]
        %v1411 = vld [vmem:[%s532 + $0x83] sm:$0xff]
        %v1412 = vld [vmem:[%s532 + $0x93] sm:$0xff]
        %v1413 = vld [vmem:[%s532 + $0x9b] sm:$0xff]
        %v1414 = vld [vmem:[%s532 + $0xab] sm:$0xff]
        %v1415 = vld [vmem:[%s532 + $0xb3] sm:$0xff]
        %v1416 = vld [vmem:[%s532 + $0xc3] sm:$0xff]
        %v1417 = vld [vmem:[%s532 + $0xcb] sm:$0xff]
        %v1418 = vld [vmem:[%s532 + $0xdb] sm:$0xff]
        %v1419 = vld [vmem:[%s532 + $0xe3] sm:$0xff]
        %v1420 = vld [vmem:[%s532 + $0xf3] sm:$0xff]
        %v1421 = vld [vmem:[%s532 + $0xfb] sm:$0xff]
        %v1422 = vld [vmem:[%s532 + $0x10b] sm:$0xff]
        %v1423 = vld [vmem:[%s532 + $0x113] sm:$0xff]
        %v1424 = vld [vmem:[%s532 + $0x123] sm:$0xff]
        %v1425 = vld [vmem:[%s532 + $0x12b] sm:$0xff]
        %v1426 = vld [vmem:[%s532 + $0x13b] sm:$0xff]
        %v1427 = vld [vmem:[%s532 + $0x143] sm:$0xff]
        %v1428 = vld [vmem:[%s1 + $0x3] sm:$0x1]
        %v1429 = vlaneseq
        %v1430 = vshrl.u32 %v1429, 7
        %v1431 = vsub.s32 0, %v1430
        %v1432 = vrot.slane %v1428, %v1431
        %v1433 = vmul.f32 %v1400, %v1432
        %v1434 = vmul.f32 %v1401, %v1432
        %v1435 = vmul.f32 %v1402, %v1432
        %v1436 = vmul.f32 %v1403, %v1432
        %v1437 = vmul.f32 %v1404, %v1432
        %v1438 = vmul.f32 %v1405, %v1432
        %v1439 = vmul.f32 %v1406, %v1432
        %v1440 = vmul.f32 %v1407, %v1432
        %v1441 = vmul.f32 %v1408, %v1432
        %v1442 = vmul.f32 %v1409, %v1432
        %v1443 = vmul.f32 %v1410, %v1432
        %v1444 = vmul.f32 %v1411, %v1432
        %v1445 = vmul.f32 %v1412, %v1432
        %v1446 = vmul.f32 %v1413, %v1432
        %v1447 = vmul.f32 %v1414, %v1432
        %v1448 = vmul.f32 %v1415, %v1432
        %v1449 = vadd.f32 %v1384, %v1433
        %v1450 = vadd.f32 %v1385, %v1434
        %v1451 = vadd.f32 %v1386, %v1435
        %v1452 = vadd.f32 %v1387, %v1436
        %v1453 = vadd.f32 %v1388, %v1437
        %v1454 = vadd.f32 %v1389, %v1438
        %v1455 = vadd.f32 %v1390, %v1439
        %v1456 = vadd.f32 %v1391, %v1440
        %v1457 = vadd.f32 %v1392, %v1441
        %v1458 = vadd.f32 %v1393, %v1442
        %v1459 = vadd.f32 %v1394, %v1443
        %v1460 = vadd.f32 %v1395, %v1444
        %v1461 = vadd.f32 %v1396, %v1445
        %v1462 = vadd.f32 %v1397, %v1446
        %v1463 = vadd.f32 %v1398, %v1447
        %v1464 = vadd.f32 %v1399, %v1448
        %v1465 = vld [vmem:[%s598 + $0x3] sm:$0x1]
        %v1466 = vlaneseq
        %v1467 = vshrl.u32 %v1466, 7
        %v1468 = vsub.s32 0, %v1467
        %v1469 = vrot.slane %v1465, %v1468
        %v1470 = vmul.f32 %v1402, %v1469
        %v1471 = vmul.f32 %v1403, %v1469
        %v1472 = vmul.f32 %v1404, %v1469
        %v1473 = vmul.f32 %v1405, %v1469
        %v1474 = vmul.f32 %v1406, %v1469
        %v1475 = vmul.f32 %v1407, %v1469
        %v1476 = vmul.f32 %v1408, %v1469
        %v1477 = vmul.f32 %v1409, %v1469
        %v1478 = vmul.f32 %v1410, %v1469
        %v1479 = vmul.f32 %v1411, %v1469
        %v1480 = vmul.f32 %v1412, %v1469
        %v1481 = vmul.f32 %v1413, %v1469
        %v1482 = vmul.f32 %v1414, %v1469
        %v1483 = vmul.f32 %v1415, %v1469
        %v1484 = vmul.f32 %v1416, %v1469
        %v1485 = vmul.f32 %v1417, %v1469
        %v1486 = vadd.f32 %v1449, %v1470
        %v1487 = vadd.f32 %v1450, %v1471
        %v1488 = vadd.f32 %v1451, %v1472
        %v1489 = vadd.f32 %v1452, %v1473
        %v1490 = vadd.f32 %v1453, %v1474
        %v1491 = vadd.f32 %v1454, %v1475
        %v1492 = vadd.f32 %v1455, %v1476
        %v1493 = vadd.f32 %v1456, %v1477
        %v1494 = vadd.f32 %v1457, %v1478
        %v1495 = vadd.f32 %v1458, %v1479
        %v1496 = vadd.f32 %v1459, %v1480
        %v1497 = vadd.f32 %v1460, %v1481
        %v1498 = vadd.f32 %v1461, %v1482
        %v1499 = vadd.f32 %v1462, %v1483
        %v1500 = vadd.f32 %v1463, %v1484
        %v1501 = vadd.f32 %v1464, %v1485
        %v1502 = vld [vmem:[%s636 + $0x3] sm:$0x1]
        %v1503 = vlaneseq
        %v1504 = vshrl.u32 %v1503, 7
        %v1505 = vsub.s32 0, %v1504
        %v1506 = vrot.slane %v1502, %v1505
        %v1507 = vmul.f32 %v1404, %v1506
        %v1508 = vmul.f32 %v1405, %v1506
        %v1509 = vmul.f32 %v1406, %v1506
        %v1510 = vmul.f32 %v1407, %v1506
        %v1511 = vmul.f32 %v1408, %v1506
        %v1512 = vmul.f32 %v1409, %v1506
        %v1513 = vmul.f32 %v1410, %v1506
        %v1514 = vmul.f32 %v1411, %v1506
        %v1515 = vmul.f32 %v1412, %v1506
        %v1516 = vmul.f32 %v1413, %v1506
        %v1517 = vmul.f32 %v1414, %v1506
        %v1518 = vmul.f32 %v1415, %v1506
        %v1519 = vmul.f32 %v1416, %v1506
        %v1520 = vmul.f32 %v1417, %v1506
        %v1521 = vmul.f32 %v1418, %v1506
        %v1522 = vmul.f32 %v1419, %v1506
        %v1523 = vadd.f32 %v1486, %v1507
        %v1524 = vadd.f32 %v1487, %v1508
        %v1525 = vadd.f32 %v1488, %v1509
        %v1526 = vadd.f32 %v1489, %v1510
        %v1527 = vadd.f32 %v1490, %v1511
        %v1528 = vadd.f32 %v1491, %v1512
        %v1529 = vadd.f32 %v1492, %v1513
        %v1530 = vadd.f32 %v1493, %v1514
        %v1531 = vadd.f32 %v1494, %v1515
        %v1532 = vadd.f32 %v1495, %v1516
        %v1533 = vadd.f32 %v1496, %v1517
        %v1534 = vadd.f32 %v1497, %v1518
        %v1535 = vadd.f32 %v1498, %v1519
        %v1536 = vadd.f32 %v1499, %v1520
        %v1537 = vadd.f32 %v1500, %v1521
        %v1538 = vadd.f32 %v1501, %v1522
        %v1539 = vld [vmem:[%s674 + $0x3] sm:$0x1]
        %v1540 = vlaneseq
        %v1541 = vshrl.u32 %v1540, 7
        %v1542 = vsub.s32 0, %v1541
        %v1543 = vrot.slane %v1539, %v1542
        %v1544 = vmul.f32 %v1406, %v1543
        %v1545 = vmul.f32 %v1407, %v1543
        %v1546 = vmul.f32 %v1408, %v1543
        %v1547 = vmul.f32 %v1409, %v1543
        %v1548 = vmul.f32 %v1410, %v1543
        %v1549 = vmul.f32 %v1411, %v1543
        %v1550 = vmul.f32 %v1412, %v1543
        %v1551 = vmul.f32 %v1413, %v1543
        %v1552 = vmul.f32 %v1414, %v1543
        %v1553 = vmul.f32 %v1415, %v1543
        %v1554 = vmul.f32 %v1416, %v1543
        %v1555 = vmul.f32 %v1417, %v1543
        %v1556 = vmul.f32 %v1418, %v1543
        %v1557 = vmul.f32 %v1419, %v1543
        %v1558 = vmul.f32 %v1420, %v1543
        %v1559 = vmul.f32 %v1421, %v1543
        %v1560 = vadd.f32 %v1523, %v1544
        %v1561 = vadd.f32 %v1524, %v1545
        %v1562 = vadd.f32 %v1525, %v1546
        %v1563 = vadd.f32 %v1526, %v1547
        %v1564 = vadd.f32 %v1527, %v1548
        %v1565 = vadd.f32 %v1528, %v1549
        %v1566 = vadd.f32 %v1529, %v1550
        %v1567 = vadd.f32 %v1530, %v1551
        %v1568 = vadd.f32 %v1531, %v1552
        %v1569 = vadd.f32 %v1532, %v1553
        %v1570 = vadd.f32 %v1533, %v1554
        %v1571 = vadd.f32 %v1534, %v1555
        %v1572 = vadd.f32 %v1535, %v1556
        %v1573 = vadd.f32 %v1536, %v1557
        %v1574 = vadd.f32 %v1537, %v1558
        %v1575 = vadd.f32 %v1538, %v1559
        %v1576 = vld [vmem:[%s712 + $0x3] sm:$0x1]
        %v1577 = vlaneseq
        %v1578 = vshrl.u32 %v1577, 7
        %v1579 = vsub.s32 0, %v1578
        %v1580 = vrot.slane %v1576, %v1579
        %v1581 = vmul.f32 %v1408, %v1580
        %v1582 = vmul.f32 %v1409, %v1580
        %v1583 = vmul.f32 %v1410, %v1580
        %v1584 = vmul.f32 %v1411, %v1580
        %v1585 = vmul.f32 %v1412, %v1580
        %v1586 = vmul.f32 %v1413, %v1580
        %v1587 = vmul.f32 %v1414, %v1580
        %v1588 = vmul.f32 %v1415, %v1580
        %v1589 = vmul.f32 %v1416, %v1580
        %v1590 = vmul.f32 %v1417, %v1580
        %v1591 = vmul.f32 %v1418, %v1580
        %v1592 = vmul.f32 %v1419, %v1580
        %v1593 = vmul.f32 %v1420, %v1580
        %v1594 = vmul.f32 %v1421, %v1580
        %v1595 = vmul.f32 %v1422, %v1580
        %v1596 = vmul.f32 %v1423, %v1580
        %v1597 = vadd.f32 %v1560, %v1581
        %v1598 = vadd.f32 %v1561, %v1582
        %v1599 = vadd.f32 %v1562, %v1583
        %v1600 = vadd.f32 %v1563, %v1584
        %v1601 = vadd.f32 %v1564, %v1585
        %v1602 = vadd.f32 %v1565, %v1586
        %v1603 = vadd.f32 %v1566, %v1587
        %v1604 = vadd.f32 %v1567, %v1588
        %v1605 = vadd.f32 %v1568, %v1589
        %v1606 = vadd.f32 %v1569, %v1590
        %v1607 = vadd.f32 %v1570, %v1591
        %v1608 = vadd.f32 %v1571, %v1592
        %v1609 = vadd.f32 %v1572, %v1593
        %v1610 = vadd.f32 %v1573, %v1594
        %v1611 = vadd.f32 %v1574, %v1595
        %v1612 = vadd.f32 %v1575, %v1596
        %v1613 = vld [vmem:[%s750 + $0x3] sm:$0x1]
        %v1614 = vlaneseq
        %v1615 = vshrl.u32 %v1614, 7
        %v1616 = vsub.s32 0, %v1615
        %v1617 = vrot.slane %v1613, %v1616
        %v1618 = vmul.f32 %v1410, %v1617
        %v1619 = vmul.f32 %v1411, %v1617
        %v1620 = vmul.f32 %v1412, %v1617
        %v1621 = vmul.f32 %v1413, %v1617
        %v1622 = vmul.f32 %v1414, %v1617
        %v1623 = vmul.f32 %v1415, %v1617
        %v1624 = vmul.f32 %v1416, %v1617
        %v1625 = vmul.f32 %v1417, %v1617
        %v1626 = vmul.f32 %v1418, %v1617
        %v1627 = vmul.f32 %v1419, %v1617
        %v1628 = vmul.f32 %v1420, %v1617
        %v1629 = vmul.f32 %v1421, %v1617
        %v1630 = vmul.f32 %v1422, %v1617
        %v1631 = vmul.f32 %v1423, %v1617
        %v1632 = vmul.f32 %v1424, %v1617
        %v1633 = vmul.f32 %v1425, %v1617
        %v1634 = vadd.f32 %v1597, %v1618
        %v1635 = vadd.f32 %v1598, %v1619
        %v1636 = vadd.f32 %v1599, %v1620
        %v1637 = vadd.f32 %v1600, %v1621
        %v1638 = vadd.f32 %v1601, %v1622
        %v1639 = vadd.f32 %v1602, %v1623
        %v1640 = vadd.f32 %v1603, %v1624
        %v1641 = vadd.f32 %v1604, %v1625
        %v1642 = vadd.f32 %v1605, %v1626
        %v1643 = vadd.f32 %v1606, %v1627
        %v1644 = vadd.f32 %v1607, %v1628
        %v1645 = vadd.f32 %v1608, %v1629
        %v1646 = vadd.f32 %v1609, %v1630
        %v1647 = vadd.f32 %v1610, %v1631
        %v1648 = vadd.f32 %v1611, %v1632
        %v1649 = vadd.f32 %v1612, %v1633
        %v1650 = vld [vmem:[%s788 + $0x3] sm:$0x1]
        %v1651 = vlaneseq
        %v1652 = vshrl.u32 %v1651, 7
        %v1653 = vsub.s32 0, %v1652
        %v1654 = vrot.slane %v1650, %v1653
        %v1655 = vmul.f32 %v1412, %v1654
        %v1656 = vmul.f32 %v1413, %v1654
        %v1657 = vmul.f32 %v1414, %v1654
        %v1658 = vmul.f32 %v1415, %v1654
        %v1659 = vmul.f32 %v1416, %v1654
        %v1660 = vmul.f32 %v1417, %v1654
        %v1661 = vmul.f32 %v1418, %v1654
        %v1662 = vmul.f32 %v1419, %v1654
        %v1663 = vmul.f32 %v1420, %v1654
        %v1664 = vmul.f32 %v1421, %v1654
        %v1665 = vmul.f32 %v1422, %v1654
        %v1666 = vmul.f32 %v1423, %v1654
        %v1667 = vmul.f32 %v1424, %v1654
        %v1668 = vmul.f32 %v1425, %v1654
        %v1669 = vmul.f32 %v1426, %v1654
        %v1670 = vmul.f32 %v1427, %v1654
        %v1671 = vadd.f32 %v1634, %v1655
        %v1672 = vadd.f32 %v1635, %v1656
        %v1673 = vadd.f32 %v1636, %v1657
        %v1674 = vadd.f32 %v1637, %v1658
        %v1675 = vadd.f32 %v1638, %v1659
        %v1676 = vadd.f32 %v1639, %v1660
        %v1677 = vadd.f32 %v1640, %v1661
        %v1678 = vadd.f32 %v1641, %v1662
        %v1679 = vadd.f32 %v1642, %v1663
        %v1680 = vadd.f32 %v1643, %v1664
        %v1681 = vadd.f32 %v1644, %v1665
        %v1682 = vadd.f32 %v1645, %v1666
        %v1683 = vadd.f32 %v1646, %v1667
        %v1684 = vadd.f32 %v1647, %v1668
        %v1685 = vadd.f32 %v1648, %v1669
        %v1686 = vadd.f32 %v1649, %v1670
        %v1687 = vld [vmem:[%s532 + $0x4] sm:$0xff]
        %v1688 = vld [vmem:[%s532 + $0xc] sm:$0xff]
        %v1689 = vld [vmem:[%s532 + $0x1c] sm:$0xff]
        %v1690 = vld [vmem:[%s532 + $0x24] sm:$0xff]
        %v1691 = vld [vmem:[%s532 + $0x34] sm:$0xff]
        %v1692 = vld [vmem:[%s532 + $0x3c] sm:$0xff]
        %v1693 = vld [vmem:[%s532 + $0x4c] sm:$0xff]
        %v1694 = vld [vmem:[%s532 + $0x54] sm:$0xff]
        %v1695 = vld [vmem:[%s532 + $0x64] sm:$0xff]
        %v1696 = vld [vmem:[%s532 + $0x6c] sm:$0xff]
        %v1697 = vld [vmem:[%s532 + $0x7c] sm:$0xff]
        %v1698 = vld [vmem:[%s532 + $0x84] sm:$0xff]
        %v1699 = vld [vmem:[%s532 + $0x94] sm:$0xff]
        %v1700 = vld [vmem:[%s532 + $0x9c] sm:$0xff]
        %v1701 = vld [vmem:[%s532 + $0xac] sm:$0xff]
        %v1702 = vld [vmem:[%s532 + $0xb4] sm:$0xff]
        %v1703 = vld [vmem:[%s532 + $0xc4] sm:$0xff]
        %v1704 = vld [vmem:[%s532 + $0xcc] sm:$0xff]
        %v1705 = vld [vmem:[%s532 + $0xdc] sm:$0xff]
        %v1706 = vld [vmem:[%s532 + $0xe4] sm:$0xff]
        %v1707 = vld [vmem:[%s532 + $0xf4] sm:$0xff]
        %v1708 = vld [vmem:[%s532 + $0xfc] sm:$0xff]
        %v1709 = vld [vmem:[%s532 + $0x10c] sm:$0xff]
        %v1710 = vld [vmem:[%s532 + $0x114] sm:$0xff]
        %v1711 = vld [vmem:[%s532 + $0x124] sm:$0xff]
        %v1712 = vld [vmem:[%s532 + $0x12c] sm:$0xff]
        %v1713 = vld [vmem:[%s532 + $0x13c] sm:$0xff]
        %v1714 = vld [vmem:[%s532 + $0x144] sm:$0xff]
        %v1715 = vld [vmem:[%s1 + $0x4] sm:$0x1]
        %v1716 = vlaneseq
        %v1717 = vshrl.u32 %v1716, 7
        %v1718 = vsub.s32 0, %v1717
        %v1719 = vrot.slane %v1715, %v1718
        %v1720 = vmul.f32 %v1687, %v1719
        %v1721 = vmul.f32 %v1688, %v1719
        %v1722 = vmul.f32 %v1689, %v1719
        %v1723 = vmul.f32 %v1690, %v1719
        %v1724 = vmul.f32 %v1691, %v1719
        %v1725 = vmul.f32 %v1692, %v1719
        %v1726 = vmul.f32 %v1693, %v1719
        %v1727 = vmul.f32 %v1694, %v1719
        %v1728 = vmul.f32 %v1695, %v1719
        %v1729 = vmul.f32 %v1696, %v1719
        %v1730 = vmul.f32 %v1697, %v1719
        %v1731 = vmul.f32 %v1698, %v1719
        %v1732 = vmul.f32 %v1699, %v1719
        %v1733 = vmul.f32 %v1700, %v1719
        %v1734 = vmul.f32 %v1701, %v1719
        %v1735 = vmul.f32 %v1702, %v1719
        %v1736 = vadd.f32 %v1671, %v1720
        %v1737 = vadd.f32 %v1672, %v1721
        %v1738 = vadd.f32 %v1673, %v1722
        %v1739 = vadd.f32 %v1674, %v1723
        %v1740 = vadd.f32 %v1675, %v1724
        %v1741 = vadd.f32 %v1676, %v1725
        %v1742 = vadd.f32 %v1677, %v1726
        %v1743 = vadd.f32 %v1678, %v1727
        %v1744 = vadd.f32 %v1679, %v1728
        %v1745 = vadd.f32 %v1680, %v1729
        %v1746 = vadd.f32 %v1681, %v1730
        %v1747 = vadd.f32 %v1682, %v1731
        %v1748 = vadd.f32 %v1683, %v1732
        %v1749 = vadd.f32 %v1684, %v1733
        %v1750 = vadd.f32 %v1685, %v1734
        %v1751 = vadd.f32 %v1686, %v1735
        %v1752 = vld [vmem:[%s598 + $0x4] sm:$0x1]
        %v1753 = vlaneseq
        %v1754 = vshrl.u32 %v1753, 7
        %v1755 = vsub.s32 0, %v1754
        %v1756 = vrot.slane %v1752, %v1755
        %v1757 = vmul.f32 %v1689, %v1756
        %v1758 = vmul.f32 %v1690, %v1756
        %v1759 = vmul.f32 %v1691, %v1756
        %v1760 = vmul.f32 %v1692, %v1756
        %v1761 = vmul.f32 %v1693, %v1756
        %v1762 = vmul.f32 %v1694, %v1756
        %v1763 = vmul.f32 %v1695, %v1756
        %v1764 = vmul.f32 %v1696, %v1756
        %v1765 = vmul.f32 %v1697, %v1756
        %v1766 = vmul.f32 %v1698, %v1756
        %v1767 = vmul.f32 %v1699, %v1756
        %v1768 = vmul.f32 %v1700, %v1756
        %v1769 = vmul.f32 %v1701, %v1756
        %v1770 = vmul.f32 %v1702, %v1756
        %v1771 = vmul.f32 %v1703, %v1756
        %v1772 = vmul.f32 %v1704, %v1756
        %v1773 = vadd.f32 %v1736, %v1757
        %v1774 = vadd.f32 %v1737, %v1758
        %v1775 = vadd.f32 %v1738, %v1759
        %v1776 = vadd.f32 %v1739, %v1760
        %v1777 = vadd.f32 %v1740, %v1761
        %v1778 = vadd.f32 %v1741, %v1762
        %v1779 = vadd.f32 %v1742, %v1763
        %v1780 = vadd.f32 %v1743, %v1764
        %v1781 = vadd.f32 %v1744, %v1765
        %v1782 = vadd.f32 %v1745, %v1766
        %v1783 = vadd.f32 %v1746, %v1767
        %v1784 = vadd.f32 %v1747, %v1768
        %v1785 = vadd.f32 %v1748, %v1769
        %v1786 = vadd.f32 %v1749, %v1770
        %v1787 = vadd.f32 %v1750, %v1771
        %v1788 = vadd.f32 %v1751, %v1772
        %v1789 = vld [vmem:[%s636 + $0x4] sm:$0x1]
        %v1790 = vlaneseq
        %v1791 = vshrl.u32 %v1790, 7
        %v1792 = vsub.s32 0, %v1791
        %v1793 = vrot.slane %v1789, %v1792
        %v1794 = vmul.f32 %v1691, %v1793
        %v1795 = vmul.f32 %v1692, %v1793
        %v1796 = vmul.f32 %v1693, %v1793
        %v1797 = vmul.f32 %v1694, %v1793
        %v1798 = vmul.f32 %v1695, %v1793
        %v1799 = vmul.f32 %v1696, %v1793
        %v1800 = vmul.f32 %v1697, %v1793
        %v1801 = vmul.f32 %v1698, %v1793
        %v1802 = vmul.f32 %v1699, %v1793
        %v1803 = vmul.f32 %v1700, %v1793
        %v1804 = vmul.f32 %v1701, %v1793
        %v1805 = vmul.f32 %v1702, %v1793
        %v1806 = vmul.f32 %v1703, %v1793
        %v1807 = vmul.f32 %v1704, %v1793
        %v1808 = vmul.f32 %v1705, %v1793
        %v1809 = vmul.f32 %v1706, %v1793
        %v1810 = vadd.f32 %v1773, %v1794
        %v1811 = vadd.f32 %v1774, %v1795
        %v1812 = vadd.f32 %v1775, %v1796
        %v1813 = vadd.f32 %v1776, %v1797
        %v1814 = vadd.f32 %v1777, %v1798
        %v1815 = vadd.f32 %v1778, %v1799
        %v1816 = vadd.f32 %v1779, %v1800
        %v1817 = vadd.f32 %v1780, %v1801
        %v1818 = vadd.f32 %v1781, %v1802
        %v1819 = vadd.f32 %v1782, %v1803
        %v1820 = vadd.f32 %v1783, %v1804
        %v1821 = vadd.f32 %v1784, %v1805
        %v1822 = vadd.f32 %v1785, %v1806
        %v1823 = vadd.f32 %v1786, %v1807
        %v1824 = vadd.f32 %v1787, %v1808
        %v1825 = vadd.f32 %v1788, %v1809
        %v1826 = vld [vmem:[%s674 + $0x4] sm:$0x1]
        %v1827 = vlaneseq
        %v1828 = vshrl.u32 %v1827, 7
        %v1829 = vsub.s32 0, %v1828
        %v1830 = vrot.slane %v1826, %v1829
        %v1831 = vmul.f32 %v1693, %v1830
        %v1832 = vmul.f32 %v1694, %v1830
        %v1833 = vmul.f32 %v1695, %v1830
        %v1834 = vmul.f32 %v1696, %v1830
        %v1835 = vmul.f32 %v1697, %v1830
        %v1836 = vmul.f32 %v1698, %v1830
        %v1837 = vmul.f32 %v1699, %v1830
        %v1838 = vmul.f32 %v1700, %v1830
        %v1839 = vmul.f32 %v1701, %v1830
        %v1840 = vmul.f32 %v1702, %v1830
        %v1841 = vmul.f32 %v1703, %v1830
        %v1842 = vmul.f32 %v1704, %v1830
        %v1843 = vmul.f32 %v1705, %v1830
        %v1844 = vmul.f32 %v1706, %v1830
        %v1845 = vmul.f32 %v1707, %v1830
        %v1846 = vmul.f32 %v1708, %v1830
        %v1847 = vadd.f32 %v1810, %v1831
        %v1848 = vadd.f32 %v1811, %v1832
        %v1849 = vadd.f32 %v1812, %v1833
        %v1850 = vadd.f32 %v1813, %v1834
        %v1851 = vadd.f32 %v1814, %v1835
        %v1852 = vadd.f32 %v1815, %v1836
        %v1853 = vadd.f32 %v1816, %v1837
        %v1854 = vadd.f32 %v1817, %v1838
        %v1855 = vadd.f32 %v1818, %v1839
        %v1856 = vadd.f32 %v1819, %v1840
        %v1857 = vadd.f32 %v1820, %v1841
        %v1858 = vadd.f32 %v1821, %v1842
        %v1859 = vadd.f32 %v1822, %v1843
        %v1860 = vadd.f32 %v1823, %v1844
        %v1861 = vadd.f32 %v1824, %v1845
        %v1862 = vadd.f32 %v1825, %v1846
        %v1863 = vld [vmem:[%s712 + $0x4] sm:$0x1]
        %v1864 = vlaneseq
        %v1865 = vshrl.u32 %v1864, 7
        %v1866 = vsub.s32 0, %v1865
        %v1867 = vrot.slane %v1863, %v1866
        %v1868 = vmul.f32 %v1695, %v1867
        %v1869 = vmul.f32 %v1696, %v1867
        %v1870 = vmul.f32 %v1697, %v1867
        %v1871 = vmul.f32 %v1698, %v1867
        %v1872 = vmul.f32 %v1699, %v1867
        %v1873 = vmul.f32 %v1700, %v1867
        %v1874 = vmul.f32 %v1701, %v1867
        %v1875 = vmul.f32 %v1702, %v1867
        %v1876 = vmul.f32 %v1703, %v1867
        %v1877 = vmul.f32 %v1704, %v1867
        %v1878 = vmul.f32 %v1705, %v1867
        %v1879 = vmul.f32 %v1706, %v1867
        %v1880 = vmul.f32 %v1707, %v1867
        %v1881 = vmul.f32 %v1708, %v1867
        %v1882 = vmul.f32 %v1709, %v1867
        %v1883 = vmul.f32 %v1710, %v1867
        %v1884 = vadd.f32 %v1847, %v1868
        %v1885 = vadd.f32 %v1848, %v1869
        %v1886 = vadd.f32 %v1849, %v1870
        %v1887 = vadd.f32 %v1850, %v1871
        %v1888 = vadd.f32 %v1851, %v1872
        %v1889 = vadd.f32 %v1852, %v1873
        %v1890 = vadd.f32 %v1853, %v1874
        %v1891 = vadd.f32 %v1854, %v1875
        %v1892 = vadd.f32 %v1855, %v1876
        %v1893 = vadd.f32 %v1856, %v1877
        %v1894 = vadd.f32 %v1857, %v1878
        %v1895 = vadd.f32 %v1858, %v1879
        %v1896 = vadd.f32 %v1859, %v1880
        %v1897 = vadd.f32 %v1860, %v1881
        %v1898 = vadd.f32 %v1861, %v1882
        %v1899 = vadd.f32 %v1862, %v1883
        %v1900 = vld [vmem:[%s750 + $0x4] sm:$0x1]
        %v1901 = vlaneseq
        %v1902 = vshrl.u32 %v1901, 7
        %v1903 = vsub.s32 0, %v1902
        %v1904 = vrot.slane %v1900, %v1903
        %v1905 = vmul.f32 %v1697, %v1904
        %v1906 = vmul.f32 %v1698, %v1904
        %v1907 = vmul.f32 %v1699, %v1904
        %v1908 = vmul.f32 %v1700, %v1904
        %v1909 = vmul.f32 %v1701, %v1904
        %v1910 = vmul.f32 %v1702, %v1904
        %v1911 = vmul.f32 %v1703, %v1904
        %v1912 = vmul.f32 %v1704, %v1904
        %v1913 = vmul.f32 %v1705, %v1904
        %v1914 = vmul.f32 %v1706, %v1904
        %v1915 = vmul.f32 %v1707, %v1904
        %v1916 = vmul.f32 %v1708, %v1904
        %v1917 = vmul.f32 %v1709, %v1904
        %v1918 = vmul.f32 %v1710, %v1904
        %v1919 = vmul.f32 %v1711, %v1904
        %v1920 = vmul.f32 %v1712, %v1904
        %v1921 = vadd.f32 %v1884, %v1905
        %v1922 = vadd.f32 %v1885, %v1906
        %v1923 = vadd.f32 %v1886, %v1907
        %v1924 = vadd.f32 %v1887, %v1908
        %v1925 = vadd.f32 %v1888, %v1909
        %v1926 = vadd.f32 %v1889, %v1910
        %v1927 = vadd.f32 %v1890, %v1911
        %v1928 = vadd.f32 %v1891, %v1912
        %v1929 = vadd.f32 %v1892, %v1913
        %v1930 = vadd.f32 %v1893, %v1914
        %v1931 = vadd.f32 %v1894, %v1915
        %v1932 = vadd.f32 %v1895, %v1916
        %v1933 = vadd.f32 %v1896, %v1917
        %v1934 = vadd.f32 %v1897, %v1918
        %v1935 = vadd.f32 %v1898, %v1919
        %v1936 = vadd.f32 %v1899, %v1920
        %v1937 = vld [vmem:[%s788 + $0x4] sm:$0x1]
        %v1938 = vlaneseq
        %v1939 = vshrl.u32 %v1938, 7
        %v1940 = vsub.s32 0, %v1939
        %v1941 = vrot.slane %v1937, %v1940
        %v1942 = vmul.f32 %v1699, %v1941
        %v1943 = vmul.f32 %v1700, %v1941
        %v1944 = vmul.f32 %v1701, %v1941
        %v1945 = vmul.f32 %v1702, %v1941
        %v1946 = vmul.f32 %v1703, %v1941
        %v1947 = vmul.f32 %v1704, %v1941
        %v1948 = vmul.f32 %v1705, %v1941
        %v1949 = vmul.f32 %v1706, %v1941
        %v1950 = vmul.f32 %v1707, %v1941
        %v1951 = vmul.f32 %v1708, %v1941
        %v1952 = vmul.f32 %v1709, %v1941
        %v1953 = vmul.f32 %v1710, %v1941
        %v1954 = vmul.f32 %v1711, %v1941
        %v1955 = vmul.f32 %v1712, %v1941
        %v1956 = vmul.f32 %v1713, %v1941
        %v1957 = vmul.f32 %v1714, %v1941
        %v1958 = vadd.f32 %v1921, %v1942
        %v1959 = vadd.f32 %v1922, %v1943
        %v1960 = vadd.f32 %v1923, %v1944
        %v1961 = vadd.f32 %v1924, %v1945
        %v1962 = vadd.f32 %v1925, %v1946
        %v1963 = vadd.f32 %v1926, %v1947
        %v1964 = vadd.f32 %v1927, %v1948
        %v1965 = vadd.f32 %v1928, %v1949
        %v1966 = vadd.f32 %v1929, %v1950
        %v1967 = vadd.f32 %v1930, %v1951
        %v1968 = vadd.f32 %v1931, %v1952
        %v1969 = vadd.f32 %v1932, %v1953
        %v1970 = vadd.f32 %v1933, %v1954
        %v1971 = vadd.f32 %v1934, %v1955
        %v1972 = vadd.f32 %v1935, %v1956
        %v1973 = vadd.f32 %v1936, %v1957
        %v1974 = vld [vmem:[%s532 + $0x5] sm:$0xff]
        %v1975 = vld [vmem:[%s532 + $0xd] sm:$0xff]
        %v1976 = vld [vmem:[%s532 + $0x1d] sm:$0xff]
        %v1977 = vld [vmem:[%s532 + $0x25] sm:$0xff]
        %v1978 = vld [vmem:[%s532 + $0x35] sm:$0xff]
        %v1979 = vld [vmem:[%s532 + $0x3d] sm:$0xff]
        %v1980 = vld [vmem:[%s532 + $0x4d] sm:$0xff]
        %v1981 = vld [vmem:[%s532 + $0x55] sm:$0xff]
        %v1982 = vld [vmem:[%s532 + $0x65] sm:$0xff]
        %v1983 = vld [vmem:[%s532 + $0x6d] sm:$0xff]
        %v1984 = vld [vmem:[%s532 + $0x7d] sm:$0xff]
        %v1985 = vld [vmem:[%s532 + $0x85] sm:$0xff]
        %v1986 = vld [vmem:[%s532 + $0x95] sm:$0xff]
        %v1987 = vld [vmem:[%s532 + $0x9d] sm:$0xff]
        %v1988 = vld [vmem:[%s532 + $0xad] sm:$0xff]
        %v1989 = vld [vmem:[%s532 + $0xb5] sm:$0xff]
        %v1990 = vld [vmem:[%s532 + $0xc5] sm:$0xff]
        %v1991 = vld [vmem:[%s532 + $0xcd] sm:$0xff]
        %v1992 = vld [vmem:[%s532 + $0xdd] sm:$0xff]
        %v1993 = vld [vmem:[%s532 + $0xe5] sm:$0xff]
        %v1994 = vld [vmem:[%s532 + $0xf5] sm:$0xff]
        %v1995 = vld [vmem:[%s532 + $0xfd] sm:$0xff]
        %v1996 = vld [vmem:[%s532 + $0x10d] sm:$0xff]
        %v1997 = vld [vmem:[%s532 + $0x115] sm:$0xff]
        %v1998 = vld [vmem:[%s532 + $0x125] sm:$0xff]
        %v1999 = vld [vmem:[%s532 + $0x12d] sm:$0xff]
        %v2000 = vld [vmem:[%s532 + $0x13d] sm:$0xff]
        %v2001 = vld [vmem:[%s532 + $0x145] sm:$0xff]
        %v2002 = vld [vmem:[%s1 + $0x5] sm:$0x1]
        %v2003 = vlaneseq
        %v2004 = vshrl.u32 %v2003, 7
        %v2005 = vsub.s32 0, %v2004
        %v2006 = vrot.slane %v2002, %v2005
        %v2007 = vmul.f32 %v1974, %v2006
        %v2008 = vmul.f32 %v1975, %v2006
        %v2009 = vmul.f32 %v1976, %v2006
        %v2010 = vmul.f32 %v1977, %v2006
        %v2011 = vmul.f32 %v1978, %v2006
        %v2012 = vmul.f32 %v1979, %v2006
        %v2013 = vmul.f32 %v1980, %v2006
        %v2014 = vmul.f32 %v1981, %v2006
        %v2015 = vmul.f32 %v1982, %v2006
        %v2016 = vmul.f32 %v1983, %v2006
        %v2017 = vmul.f32 %v1984, %v2006
        %v2018 = vmul.f32 %v1985, %v2006
        %v2019 = vmul.f32 %v1986, %v2006
        %v2020 = vmul.f32 %v1987, %v2006
        %v2021 = vmul.f32 %v1988, %v2006
        %v2022 = vmul.f32 %v1989, %v2006
        %v2023 = vadd.f32 %v1958, %v2007
        %v2024 = vadd.f32 %v1959, %v2008
        %v2025 = vadd.f32 %v1960, %v2009
        %v2026 = vadd.f32 %v1961, %v2010
        %v2027 = vadd.f32 %v1962, %v2011
        %v2028 = vadd.f32 %v1963, %v2012
        %v2029 = vadd.f32 %v1964, %v2013
        %v2030 = vadd.f32 %v1965, %v2014
        %v2031 = vadd.f32 %v1966, %v2015
        %v2032 = vadd.f32 %v1967, %v2016
        %v2033 = vadd.f32 %v1968, %v2017
        %v2034 = vadd.f32 %v1969, %v2018
        %v2035 = vadd.f32 %v1970, %v2019
        %v2036 = vadd.f32 %v1971, %v2020
        %v2037 = vadd.f32 %v1972, %v2021
        %v2038 = vadd.f32 %v1973, %v2022
        %v2039 = vld [vmem:[%s598 + $0x5] sm:$0x1]
        %v2040 = vlaneseq
        %v2041 = vshrl.u32 %v2040, 7
        %v2042 = vsub.s32 0, %v2041
        %v2043 = vrot.slane %v2039, %v2042
        %v2044 = vmul.f32 %v1976, %v2043
        %v2045 = vmul.f32 %v1977, %v2043
        %v2046 = vmul.f32 %v1978, %v2043
        %v2047 = vmul.f32 %v1979, %v2043
        %v2048 = vmul.f32 %v1980, %v2043
        %v2049 = vmul.f32 %v1981, %v2043
        %v2050 = vmul.f32 %v1982, %v2043
        %v2051 = vmul.f32 %v1983, %v2043
        %v2052 = vmul.f32 %v1984, %v2043
        %v2053 = vmul.f32 %v1985, %v2043
        %v2054 = vmul.f32 %v1986, %v2043
        %v2055 = vmul.f32 %v1987, %v2043
        %v2056 = vmul.f32 %v1988, %v2043
        %v2057 = vmul.f32 %v1989, %v2043
        %v2058 = vmul.f32 %v1990, %v2043
        %v2059 = vmul.f32 %v1991, %v2043
        %v2060 = vadd.f32 %v2023, %v2044
        %v2061 = vadd.f32 %v2024, %v2045
        %v2062 = vadd.f32 %v2025, %v2046
        %v2063 = vadd.f32 %v2026, %v2047
        %v2064 = vadd.f32 %v2027, %v2048
        %v2065 = vadd.f32 %v2028, %v2049
        %v2066 = vadd.f32 %v2029, %v2050
        %v2067 = vadd.f32 %v2030, %v2051
        %v2068 = vadd.f32 %v2031, %v2052
        %v2069 = vadd.f32 %v2032, %v2053
        %v2070 = vadd.f32 %v2033, %v2054
        %v2071 = vadd.f32 %v2034, %v2055
        %v2072 = vadd.f32 %v2035, %v2056
        %v2073 = vadd.f32 %v2036, %v2057
        %v2074 = vadd.f32 %v2037, %v2058
        %v2075 = vadd.f32 %v2038, %v2059
        %v2076 = vld [vmem:[%s636 + $0x5] sm:$0x1]
        %v2077 = vlaneseq
        %v2078 = vshrl.u32 %v2077, 7
        %v2079 = vsub.s32 0, %v2078
        %v2080 = vrot.slane %v2076, %v2079
        %v2081 = vmul.f32 %v1978, %v2080
        %v2082 = vmul.f32 %v1979, %v2080
        %v2083 = vmul.f32 %v1980, %v2080
        %v2084 = vmul.f32 %v1981, %v2080
        %v2085 = vmul.f32 %v1982, %v2080
        %v2086 = vmul.f32 %v1983, %v2080
        %v2087 = vmul.f32 %v1984, %v2080
        %v2088 = vmul.f32 %v1985, %v2080
        %v2089 = vmul.f32 %v1986, %v2080
        %v2090 = vmul.f32 %v1987, %v2080
        %v2091 = vmul.f32 %v1988, %v2080
        %v2092 = vmul.f32 %v1989, %v2080
        %v2093 = vmul.f32 %v1990, %v2080
        %v2094 = vmul.f32 %v1991, %v2080
        %v2095 = vmul.f32 %v1992, %v2080
        %v2096 = vmul.f32 %v1993, %v2080
        %v2097 = vadd.f32 %v2060, %v2081
        %v2098 = vadd.f32 %v2061, %v2082
        %v2099 = vadd.f32 %v2062, %v2083
        %v2100 = vadd.f32 %v2063, %v2084
        %v2101 = vadd.f32 %v2064, %v2085
        %v2102 = vadd.f32 %v2065, %v2086
        %v2103 = vadd.f32 %v2066, %v2087
        %v2104 = vadd.f32 %v2067, %v2088
        %v2105 = vadd.f32 %v2068, %v2089
        %v2106 = vadd.f32 %v2069, %v2090
        %v2107 = vadd.f32 %v2070, %v2091
        %v2108 = vadd.f32 %v2071, %v2092
        %v2109 = vadd.f32 %v2072, %v2093
        %v2110 = vadd.f32 %v2073, %v2094
        %v2111 = vadd.f32 %v2074, %v2095
        %v2112 = vadd.f32 %v2075, %v2096
        %v2113 = vld [vmem:[%s674 + $0x5] sm:$0x1]
        %v2114 = vlaneseq
        %v2115 = vshrl.u32 %v2114, 7
        %v2116 = vsub.s32 0, %v2115
        %v2117 = vrot.slane %v2113, %v2116
        %v2118 = vmul.f32 %v1980, %v2117
        %v2119 = vmul.f32 %v1981, %v2117
        %v2120 = vmul.f32 %v1982, %v2117
        %v2121 = vmul.f32 %v1983, %v2117
        %v2122 = vmul.f32 %v1984, %v2117
        %v2123 = vmul.f32 %v1985, %v2117
        %v2124 = vmul.f32 %v1986, %v2117
        %v2125 = vmul.f32 %v1987, %v2117
        %v2126 = vmul.f32 %v1988, %v2117
        %v2127 = vmul.f32 %v1989, %v2117
        %v2128 = vmul.f32 %v1990, %v2117
        %v2129 = vmul.f32 %v1991, %v2117
        %v2130 = vmul.f32 %v1992, %v2117
        %v2131 = vmul.f32 %v1993, %v2117
        %v2132 = vmul.f32 %v1994, %v2117
        %v2133 = vmul.f32 %v1995, %v2117
        %v2134 = vadd.f32 %v2097, %v2118
        %v2135 = vadd.f32 %v2098, %v2119
        %v2136 = vadd.f32 %v2099, %v2120
        %v2137 = vadd.f32 %v2100, %v2121
        %v2138 = vadd.f32 %v2101, %v2122
        %v2139 = vadd.f32 %v2102, %v2123
        %v2140 = vadd.f32 %v2103, %v2124
        %v2141 = vadd.f32 %v2104, %v2125
        %v2142 = vadd.f32 %v2105, %v2126
        %v2143 = vadd.f32 %v2106, %v2127
        %v2144 = vadd.f32 %v2107, %v2128
        %v2145 = vadd.f32 %v2108, %v2129
        %v2146 = vadd.f32 %v2109, %v2130
        %v2147 = vadd.f32 %v2110, %v2131
        %v2148 = vadd.f32 %v2111, %v2132
        %v2149 = vadd.f32 %v2112, %v2133
        %v2150 = vld [vmem:[%s712 + $0x5] sm:$0x1]
        %v2151 = vlaneseq
        %v2152 = vshrl.u32 %v2151, 7
        %v2153 = vsub.s32 0, %v2152
        %v2154 = vrot.slane %v2150, %v2153
        %v2155 = vmul.f32 %v1982, %v2154
        %v2156 = vmul.f32 %v1983, %v2154
        %v2157 = vmul.f32 %v1984, %v2154
        %v2158 = vmul.f32 %v1985, %v2154
        %v2159 = vmul.f32 %v1986, %v2154
        %v2160 = vmul.f32 %v1987, %v2154
        %v2161 = vmul.f32 %v1988, %v2154
        %v2162 = vmul.f32 %v1989, %v2154
        %v2163 = vmul.f32 %v1990, %v2154
        %v2164 = vmul.f32 %v1991, %v2154
        %v2165 = vmul.f32 %v1992, %v2154
        %v2166 = vmul.f32 %v1993, %v2154
        %v2167 = vmul.f32 %v1994, %v2154
        %v2168 = vmul.f32 %v1995, %v2154
        %v2169 = vmul.f32 %v1996, %v2154
        %v2170 = vmul.f32 %v1997, %v2154
        %v2171 = vadd.f32 %v2134, %v2155
        %v2172 = vadd.f32 %v2135, %v2156
        %v2173 = vadd.f32 %v2136, %v2157
        %v2174 = vadd.f32 %v2137, %v2158
        %v2175 = vadd.f32 %v2138, %v2159
        %v2176 = vadd.f32 %v2139, %v2160
        %v2177 = vadd.f32 %v2140, %v2161
        %v2178 = vadd.f32 %v2141, %v2162
        %v2179 = vadd.f32 %v2142, %v2163
        %v2180 = vadd.f32 %v2143, %v2164
        %v2181 = vadd.f32 %v2144, %v2165
        %v2182 = vadd.f32 %v2145, %v2166
        %v2183 = vadd.f32 %v2146, %v2167
        %v2184 = vadd.f32 %v2147, %v2168
        %v2185 = vadd.f32 %v2148, %v2169
        %v2186 = vadd.f32 %v2149, %v2170
        %v2187 = vld [vmem:[%s750 + $0x5] sm:$0x1]
        %v2188 = vlaneseq
        %v2189 = vshrl.u32 %v2188, 7
        %v2190 = vsub.s32 0, %v2189
        %v2191 = vrot.slane %v2187, %v2190
        %v2192 = vmul.f32 %v1984, %v2191
        %v2193 = vmul.f32 %v1985, %v2191
        %v2194 = vmul.f32 %v1986, %v2191
        %v2195 = vmul.f32 %v1987, %v2191
        %v2196 = vmul.f32 %v1988, %v2191
        %v2197 = vmul.f32 %v1989, %v2191
        %v2198 = vmul.f32 %v1990, %v2191
        %v2199 = vmul.f32 %v1991, %v2191
        %v2200 = vmul.f32 %v1992, %v2191
        %v2201 = vmul.f32 %v1993, %v2191
        %v2202 = vmul.f32 %v1994, %v2191
        %v2203 = vmul.f32 %v1995, %v2191
        %v2204 = vmul.f32 %v1996, %v2191
        %v2205 = vmul.f32 %v1997, %v2191
        %v2206 = vmul.f32 %v1998, %v2191
        %v2207 = vmul.f32 %v1999, %v2191
        %v2208 = vadd.f32 %v2171, %v2192
        %v2209 = vadd.f32 %v2172, %v2193
        %v2210 = vadd.f32 %v2173, %v2194
        %v2211 = vadd.f32 %v2174, %v2195
        %v2212 = vadd.f32 %v2175, %v2196
        %v2213 = vadd.f32 %v2176, %v2197
        %v2214 = vadd.f32 %v2177, %v2198
        %v2215 = vadd.f32 %v2178, %v2199
        %v2216 = vadd.f32 %v2179, %v2200
        %v2217 = vadd.f32 %v2180, %v2201
        %v2218 = vadd.f32 %v2181, %v2202
        %v2219 = vadd.f32 %v2182, %v2203
        %v2220 = vadd.f32 %v2183, %v2204
        %v2221 = vadd.f32 %v2184, %v2205
        %v2222 = vadd.f32 %v2185, %v2206
        %v2223 = vadd.f32 %v2186, %v2207
        %v2224 = vld [vmem:[%s788 + $0x5] sm:$0x1]
        %v2225 = vlaneseq
        %v2226 = vshrl.u32 %v2225, 7
        %v2227 = vsub.s32 0, %v2226
        %v2228 = vrot.slane %v2224, %v2227
        %v2229 = vmul.f32 %v1986, %v2228
        %v2230 = vmul.f32 %v1987, %v2228
        %v2231 = vmul.f32 %v1988, %v2228
        %v2232 = vmul.f32 %v1989, %v2228
        %v2233 = vmul.f32 %v1990, %v2228
        %v2234 = vmul.f32 %v1991, %v2228
        %v2235 = vmul.f32 %v1992, %v2228
        %v2236 = vmul.f32 %v1993, %v2228
        %v2237 = vmul.f32 %v1994, %v2228
        %v2238 = vmul.f32 %v1995, %v2228
        %v2239 = vmul.f32 %v1996, %v2228
        %v2240 = vmul.f32 %v1997, %v2228
        %v2241 = vmul.f32 %v1998, %v2228
        %v2242 = vmul.f32 %v1999, %v2228
        %v2243 = vmul.f32 %v2000, %v2228
        %v2244 = vmul.f32 %v2001, %v2228
        %v2245 = vadd.f32 %v2208, %v2229
        %v2246 = vadd.f32 %v2209, %v2230
        %v2247 = vadd.f32 %v2210, %v2231
        %v2248 = vadd.f32 %v2211, %v2232
        %v2249 = vadd.f32 %v2212, %v2233
        %v2250 = vadd.f32 %v2213, %v2234
        %v2251 = vadd.f32 %v2214, %v2235
        %v2252 = vadd.f32 %v2215, %v2236
        %v2253 = vadd.f32 %v2216, %v2237
        %v2254 = vadd.f32 %v2217, %v2238
        %v2255 = vadd.f32 %v2218, %v2239
        %v2256 = vadd.f32 %v2219, %v2240
        %v2257 = vadd.f32 %v2220, %v2241
        %v2258 = vadd.f32 %v2221, %v2242
        %v2259 = vadd.f32 %v2222, %v2243
        %v2260 = vadd.f32 %v2223, %v2244
        %v2261 = vld [vmem:[%s532 + $0x6] sm:$0xff]
        %v2262 = vld [vmem:[%s532 + $0xe] sm:$0xff]
        %v2263 = vld [vmem:[%s532 + $0x1e] sm:$0xff]
        %v2264 = vld [vmem:[%s532 + $0x26] sm:$0xff]
        %v2265 = vld [vmem:[%s532 + $0x36] sm:$0xff]
        %v2266 = vld [vmem:[%s532 + $0x3e] sm:$0xff]
        %v2267 = vld [vmem:[%s532 + $0x4e] sm:$0xff]
        %v2268 = vld [vmem:[%s532 + $0x56] sm:$0xff]
        %v2269 = vld [vmem:[%s532 + $0x66] sm:$0xff]
        %v2270 = vld [vmem:[%s532 + $0x6e] sm:$0xff]
        %v2271 = vld [vmem:[%s532 + $0x7e] sm:$0xff]
        %v2272 = vld [vmem:[%s532 + $0x86] sm:$0xff]
        %v2273 = vld [vmem:[%s532 + $0x96] sm:$0xff]
        %v2274 = vld [vmem:[%s532 + $0x9e] sm:$0xff]
        %v2275 = vld [vmem:[%s532 + $0xae] sm:$0xff]
        %v2276 = vld [vmem:[%s532 + $0xb6] sm:$0xff]
        %v2277 = vld [vmem:[%s532 + $0xc6] sm:$0xff]
        %v2278 = vld [vmem:[%s532 + $0xce] sm:$0xff]
        %v2279 = vld [vmem:[%s532 + $0xde] sm:$0xff]
        %v2280 = vld [vmem:[%s532 + $0xe6] sm:$0xff]
        %v2281 = vld [vmem:[%s532 + $0xf6] sm:$0xff]
        %v2282 = vld [vmem:[%s532 + $0xfe] sm:$0xff]
        %v2283 = vld [vmem:[%s532 + $0x10e] sm:$0xff]
        %v2284 = vld [vmem:[%s532 + $0x116] sm:$0xff]
        %v2285 = vld [vmem:[%s532 + $0x126] sm:$0xff]
        %v2286 = vld [vmem:[%s532 + $0x12e] sm:$0xff]
        %v2287 = vld [vmem:[%s532 + $0x13e] sm:$0xff]
        %v2288 = vld [vmem:[%s532 + $0x146] sm:$0xff]
        %v2289 = vld [vmem:[%s1 + $0x6] sm:$0x1]
        %v2290 = vlaneseq
        %v2291 = vshrl.u32 %v2290, 7
        %v2292 = vsub.s32 0, %v2291
        %v2293 = vrot.slane %v2289, %v2292
        %v2294 = vmul.f32 %v2261, %v2293
        %v2295 = vmul.f32 %v2262, %v2293
        %v2296 = vmul.f32 %v2263, %v2293
        %v2297 = vmul.f32 %v2264, %v2293
        %v2298 = vmul.f32 %v2265, %v2293
        %v2299 = vmul.f32 %v2266, %v2293
        %v2300 = vmul.f32 %v2267, %v2293
        %v2301 = vmul.f32 %v2268, %v2293
        %v2302 = vmul.f32 %v2269, %v2293
        %v2303 = vmul.f32 %v2270, %v2293
        %v2304 = vmul.f32 %v2271, %v2293
        %v2305 = vmul.f32 %v2272, %v2293
        %v2306 = vmul.f32 %v2273, %v2293
        %v2307 = vmul.f32 %v2274, %v2293
        %v2308 = vmul.f32 %v2275, %v2293
        %v2309 = vmul.f32 %v2276, %v2293
        %v2310 = vadd.f32 %v2245, %v2294
        %v2311 = vadd.f32 %v2246, %v2295
        %v2312 = vadd.f32 %v2247, %v2296
        %v2313 = vadd.f32 %v2248, %v2297
        %v2314 = vadd.f32 %v2249, %v2298
        %v2315 = vadd.f32 %v2250, %v2299
        %v2316 = vadd.f32 %v2251, %v2300
        %v2317 = vadd.f32 %v2252, %v2301
        %v2318 = vadd.f32 %v2253, %v2302
        %v2319 = vadd.f32 %v2254, %v2303
        %v2320 = vadd.f32 %v2255, %v2304
        %v2321 = vadd.f32 %v2256, %v2305
        %v2322 = vadd.f32 %v2257, %v2306
        %v2323 = vadd.f32 %v2258, %v2307
        %v2324 = vadd.f32 %v2259, %v2308
        %v2325 = vadd.f32 %v2260, %v2309
        %v2326 = vld [vmem:[%s598 + $0x6] sm:$0x1]
        %v2327 = vlaneseq
        %v2328 = vshrl.u32 %v2327, 7
        %v2329 = vsub.s32 0, %v2328
        %v2330 = vrot.slane %v2326, %v2329
        %v2331 = vmul.f32 %v2263, %v2330
        %v2332 = vmul.f32 %v2264, %v2330
        %v2333 = vmul.f32 %v2265, %v2330
        %v2334 = vmul.f32 %v2266, %v2330
        %v2335 = vmul.f32 %v2267, %v2330
        %v2336 = vmul.f32 %v2268, %v2330
        %v2337 = vmul.f32 %v2269, %v2330
        %v2338 = vmul.f32 %v2270, %v2330
        %v2339 = vmul.f32 %v2271, %v2330
        %v2340 = vmul.f32 %v2272, %v2330
        %v2341 = vmul.f32 %v2273, %v2330
        %v2342 = vmul.f32 %v2274, %v2330
        %v2343 = vmul.f32 %v2275, %v2330
        %v2344 = vmul.f32 %v2276, %v2330
        %v2345 = vmul.f32 %v2277, %v2330
        %v2346 = vmul.f32 %v2278, %v2330
        %v2347 = vadd.f32 %v2310, %v2331
        %v2348 = vadd.f32 %v2311, %v2332
        %v2349 = vadd.f32 %v2312, %v2333
        %v2350 = vadd.f32 %v2313, %v2334
        %v2351 = vadd.f32 %v2314, %v2335
        %v2352 = vadd.f32 %v2315, %v2336
        %v2353 = vadd.f32 %v2316, %v2337
        %v2354 = vadd.f32 %v2317, %v2338
        %v2355 = vadd.f32 %v2318, %v2339
        %v2356 = vadd.f32 %v2319, %v2340
        %v2357 = vadd.f32 %v2320, %v2341
        %v2358 = vadd.f32 %v2321, %v2342
        %v2359 = vadd.f32 %v2322, %v2343
        %v2360 = vadd.f32 %v2323, %v2344
        %v2361 = vadd.f32 %v2324, %v2345
        %v2362 = vadd.f32 %v2325, %v2346
        %v2363 = vld [vmem:[%s636 + $0x6] sm:$0x1]
        %v2364 = vlaneseq
        %v2365 = vshrl.u32 %v2364, 7
        %v2366 = vsub.s32 0, %v2365
        %v2367 = vrot.slane %v2363, %v2366
        %v2368 = vmul.f32 %v2265, %v2367
        %v2369 = vmul.f32 %v2266, %v2367
        %v2370 = vmul.f32 %v2267, %v2367
        %v2371 = vmul.f32 %v2268, %v2367
        %v2372 = vmul.f32 %v2269, %v2367
        %v2373 = vmul.f32 %v2270, %v2367
        %v2374 = vmul.f32 %v2271, %v2367
        %v2375 = vmul.f32 %v2272, %v2367
        %v2376 = vmul.f32 %v2273, %v2367
        %v2377 = vmul.f32 %v2274, %v2367
        %v2378 = vmul.f32 %v2275, %v2367
        %v2379 = vmul.f32 %v2276, %v2367
        %v2380 = vmul.f32 %v2277, %v2367
        %v2381 = vmul.f32 %v2278, %v2367
        %v2382 = vmul.f32 %v2279, %v2367
        %v2383 = vmul.f32 %v2280, %v2367
        %v2384 = vadd.f32 %v2347, %v2368
        %v2385 = vadd.f32 %v2348, %v2369
        %v2386 = vadd.f32 %v2349, %v2370
        %v2387 = vadd.f32 %v2350, %v2371
        %v2388 = vadd.f32 %v2351, %v2372
        %v2389 = vadd.f32 %v2352, %v2373
        %v2390 = vadd.f32 %v2353, %v2374
        %v2391 = vadd.f32 %v2354, %v2375
        %v2392 = vadd.f32 %v2355, %v2376
        %v2393 = vadd.f32 %v2356, %v2377
        %v2394 = vadd.f32 %v2357, %v2378
        %v2395 = vadd.f32 %v2358, %v2379
        %v2396 = vadd.f32 %v2359, %v2380
        %v2397 = vadd.f32 %v2360, %v2381
        %v2398 = vadd.f32 %v2361, %v2382
        %v2399 = vadd.f32 %v2362, %v2383
        %v2400 = vld [vmem:[%s674 + $0x6] sm:$0x1]
        %v2401 = vlaneseq
        %v2402 = vshrl.u32 %v2401, 7
        %v2403 = vsub.s32 0, %v2402
        %v2404 = vrot.slane %v2400, %v2403
        %v2405 = vmul.f32 %v2267, %v2404
        %v2406 = vmul.f32 %v2268, %v2404
        %v2407 = vmul.f32 %v2269, %v2404
        %v2408 = vmul.f32 %v2270, %v2404
        %v2409 = vmul.f32 %v2271, %v2404
        %v2410 = vmul.f32 %v2272, %v2404
        %v2411 = vmul.f32 %v2273, %v2404
        %v2412 = vmul.f32 %v2274, %v2404
        %v2413 = vmul.f32 %v2275, %v2404
        %v2414 = vmul.f32 %v2276, %v2404
        %v2415 = vmul.f32 %v2277, %v2404
        %v2416 = vmul.f32 %v2278, %v2404
        %v2417 = vmul.f32 %v2279, %v2404
        %v2418 = vmul.f32 %v2280, %v2404
        %v2419 = vmul.f32 %v2281, %v2404
        %v2420 = vmul.f32 %v2282, %v2404
        %v2421 = vadd.f32 %v2384, %v2405
        %v2422 = vadd.f32 %v2385, %v2406
        %v2423 = vadd.f32 %v2386, %v2407
        %v2424 = vadd.f32 %v2387, %v2408
        %v2425 = vadd.f32 %v2388, %v2409
        %v2426 = vadd.f32 %v2389, %v2410
        %v2427 = vadd.f32 %v2390, %v2411
        %v2428 = vadd.f32 %v2391, %v2412
        %v2429 = vadd.f32 %v2392, %v2413
        %v2430 = vadd.f32 %v2393, %v2414
        %v2431 = vadd.f32 %v2394, %v2415
        %v2432 = vadd.f32 %v2395, %v2416
        %v2433 = vadd.f32 %v2396, %v2417
        %v2434 = vadd.f32 %v2397, %v2418
        %v2435 = vadd.f32 %v2398, %v2419
        %v2436 = vadd.f32 %v2399, %v2420
        %v2437 = vld [vmem:[%s712 + $0x6] sm:$0x1]
        %v2438 = vlaneseq
        %v2439 = vshrl.u32 %v2438, 7
        %v2440 = vsub.s32 0, %v2439
        %v2441 = vrot.slane %v2437, %v2440
        %v2442 = vmul.f32 %v2269, %v2441
        %v2443 = vmul.f32 %v2270, %v2441
        %v2444 = vmul.f32 %v2271, %v2441
        %v2445 = vmul.f32 %v2272, %v2441
        %v2446 = vmul.f32 %v2273, %v2441
        %v2447 = vmul.f32 %v2274, %v2441
        %v2448 = vmul.f32 %v2275, %v2441
        %v2449 = vmul.f32 %v2276, %v2441
        %v2450 = vmul.f32 %v2277, %v2441
        %v2451 = vmul.f32 %v2278, %v2441
        %v2452 = vmul.f32 %v2279, %v2441
        %v2453 = vmul.f32 %v2280, %v2441
        %v2454 = vmul.f32 %v2281, %v2441
        %v2455 = vmul.f32 %v2282, %v2441
        %v2456 = vmul.f32 %v2283, %v2441
        %v2457 = vmul.f32 %v2284, %v2441
        %v2458 = vadd.f32 %v2421, %v2442
        %v2459 = vadd.f32 %v2422, %v2443
        %v2460 = vadd.f32 %v2423, %v2444
        %v2461 = vadd.f32 %v2424, %v2445
        %v2462 = vadd.f32 %v2425, %v2446
        %v2463 = vadd.f32 %v2426, %v2447
        %v2464 = vadd.f32 %v2427, %v2448
        %v2465 = vadd.f32 %v2428, %v2449
        %v2466 = vadd.f32 %v2429, %v2450
        %v2467 = vadd.f32 %v2430, %v2451
        %v2468 = vadd.f32 %v2431, %v2452
        %v2469 = vadd.f32 %v2432, %v2453
        %v2470 = vadd.f32 %v2433, %v2454
        %v2471 = vadd.f32 %v2434, %v2455
        %v2472 = vadd.f32 %v2435, %v2456
        %v2473 = vadd.f32 %v2436, %v2457
        %v2474 = vld [vmem:[%s750 + $0x6] sm:$0x1]
        %v2475 = vlaneseq
        %v2476 = vshrl.u32 %v2475, 7
        %v2477 = vsub.s32 0, %v2476
        %v2478 = vrot.slane %v2474, %v2477
        %v2479 = vmul.f32 %v2271, %v2478
        %v2480 = vmul.f32 %v2272, %v2478
        %v2481 = vmul.f32 %v2273, %v2478
        %v2482 = vmul.f32 %v2274, %v2478
        %v2483 = vmul.f32 %v2275, %v2478
        %v2484 = vmul.f32 %v2276, %v2478
        %v2485 = vmul.f32 %v2277, %v2478
        %v2486 = vmul.f32 %v2278, %v2478
        %v2487 = vmul.f32 %v2279, %v2478
        %v2488 = vmul.f32 %v2280, %v2478
        %v2489 = vmul.f32 %v2281, %v2478
        %v2490 = vmul.f32 %v2282, %v2478
        %v2491 = vmul.f32 %v2283, %v2478
        %v2492 = vmul.f32 %v2284, %v2478
        %v2493 = vmul.f32 %v2285, %v2478
        %v2494 = vmul.f32 %v2286, %v2478
        %v2495 = vadd.f32 %v2458, %v2479
        %v2496 = vadd.f32 %v2459, %v2480
        %v2497 = vadd.f32 %v2460, %v2481
        %v2498 = vadd.f32 %v2461, %v2482
        %v2499 = vadd.f32 %v2462, %v2483
        %v2500 = vadd.f32 %v2463, %v2484
        %v2501 = vadd.f32 %v2464, %v2485
        %v2502 = vadd.f32 %v2465, %v2486
        %v2503 = vadd.f32 %v2466, %v2487
        %v2504 = vadd.f32 %v2467, %v2488
        %v2505 = vadd.f32 %v2468, %v2489
        %v2506 = vadd.f32 %v2469, %v2490
        %v2507 = vadd.f32 %v2470, %v2491
        %v2508 = vadd.f32 %v2471, %v2492
        %v2509 = vadd.f32 %v2472, %v2493
        %v2510 = vadd.f32 %v2473, %v2494
        %v2511 = vld [vmem:[%s788 + $0x6] sm:$0x1]
        %v2512 = vlaneseq
        %v2513 = vshrl.u32 %v2512, 7
        %v2514 = vsub.s32 0, %v2513
        %v2515 = vrot.slane %v2511, %v2514
        %v2516 = vmul.f32 %v2273, %v2515
        %v2517 = vmul.f32 %v2274, %v2515
        %v2518 = vmul.f32 %v2275, %v2515
        %v2519 = vmul.f32 %v2276, %v2515
        %v2520 = vmul.f32 %v2277, %v2515
        %v2521 = vmul.f32 %v2278, %v2515
        %v2522 = vmul.f32 %v2279, %v2515
        %v2523 = vmul.f32 %v2280, %v2515
        %v2524 = vmul.f32 %v2281, %v2515
        %v2525 = vmul.f32 %v2282, %v2515
        %v2526 = vmul.f32 %v2283, %v2515
        %v2527 = vmul.f32 %v2284, %v2515
        %v2528 = vmul.f32 %v2285, %v2515
        %v2529 = vmul.f32 %v2286, %v2515
        %v2530 = vmul.f32 %v2287, %v2515
        %v2531 = vmul.f32 %v2288, %v2515
        %v2532 = vadd.f32 %v2495, %v2516
        %v2533 = vadd.f32 %v2496, %v2517
        %v2534 = vadd.f32 %v2497, %v2518
        %v2535 = vadd.f32 %v2498, %v2519
        %v2536 = vadd.f32 %v2499, %v2520
        %v2537 = vadd.f32 %v2500, %v2521
        %v2538 = vadd.f32 %v2501, %v2522
        %v2539 = vadd.f32 %v2502, %v2523
        %v2540 = vadd.f32 %v2503, %v2524
        %v2541 = vadd.f32 %v2504, %v2525
        %v2542 = vadd.f32 %v2505, %v2526
        %v2543 = vadd.f32 %v2506, %v2527
        %v2544 = vadd.f32 %v2507, %v2528
        %v2545 = vadd.f32 %v2508, %v2529
        %v2546 = vadd.f32 %v2509, %v2530
        %v2547 = vadd.f32 %v2510, %v2531
        %v2548 = vld [vmem:[%s2] sm:$0x1]
        %v2550 = vlaneseq
        %v2551 = vshrl.u32 %v2550, 7
        %v2552 = vsub.s32 0, %v2551
        %v2553 = vrot.slane %v2548, %v2552
        %v2555 = vadd.f32 %v2532, %v2553
        %v2556 = vadd.f32 %v2533, %v2553
        %v2557 = vadd.f32 %v2534, %v2553
        %v2558 = vadd.f32 %v2535, %v2553
        %v2559 = vadd.f32 %v2536, %v2553
        %v2560 = vadd.f32 %v2537, %v2553
        %v2561 = vadd.f32 %v2538, %v2553
        %v2562 = vadd.f32 %v2539, %v2553
        %v2563 = vadd.f32 %v2540, %v2553
        %v2564 = vadd.f32 %v2541, %v2553
        %v2565 = vadd.f32 %v2542, %v2553
        %v2566 = vadd.f32 %v2543, %v2553
        %v2567 = vadd.f32 %v2544, %v2553
        %v2568 = vadd.f32 %v2545, %v2553
        %v2569 = vadd.f32 %v2546, %v2553
        %v2570 = vadd.f32 %v2547, %v2553
        %vm2571 = vcmask 130048
        %v2572 = vsel %vm2571, %v2555, 0.0
        %2573 = vadd.xlane.f32.xlu0 %v2572
        %v2574 = vpop.xlane.xlu0 %2573
        %v2575 = vsel %vm2571, %v2556, 0.0
        %2576 = vadd.xlane.f32.xlu0 %v2575
        %v2577 = vpop.xlane.xlu0 %2576
        %v2578 = vsel %vm2571, %v2557, 0.0
        %2579 = vadd.xlane.f32.xlu0 %v2578
        %v2580 = vpop.xlane.xlu0 %2579
        %v2581 = vsel %vm2571, %v2558, 0.0
        %2582 = vadd.xlane.f32.xlu0 %v2581
        %v2583 = vpop.xlane.xlu0 %2582
        %v2584 = vsel %vm2571, %v2559, 0.0
        %2585 = vadd.xlane.f32.xlu0 %v2584
        %v2586 = vpop.xlane.xlu0 %2585
        %v2587 = vsel %vm2571, %v2560, 0.0
        %2588 = vadd.xlane.f32.xlu0 %v2587
        %v2589 = vpop.xlane.xlu0 %2588
        %v2590 = vsel %vm2571, %v2561, 0.0
        %2591 = vadd.xlane.f32.xlu0 %v2590
        %v2592 = vpop.xlane.xlu0 %2591
        %v2593 = vsel %vm2571, %v2562, 0.0
        %2594 = vadd.xlane.f32.xlu0 %v2593
        %v2595 = vpop.xlane.xlu0 %2594
        %v2596 = vsel %vm2571, %v2563, 0.0
        %2597 = vadd.xlane.f32.xlu0 %v2596
        %v2598 = vpop.xlane.xlu0 %2597
        %v2599 = vsel %vm2571, %v2564, 0.0
        %2600 = vadd.xlane.f32.xlu0 %v2599
        %v2601 = vpop.xlane.xlu0 %2600
        %v2602 = vsel %vm2571, %v2565, 0.0
        %2603 = vadd.xlane.f32.xlu0 %v2602
        %v2604 = vpop.xlane.xlu0 %2603
        %v2605 = vsel %vm2571, %v2566, 0.0
        %2606 = vadd.xlane.f32.xlu0 %v2605
        %v2607 = vpop.xlane.xlu0 %2606
        %v2608 = vsel %vm2571, %v2567, 0.0
        %2609 = vadd.xlane.f32.xlu0 %v2608
        %v2610 = vpop.xlane.xlu0 %2609
        %v2611 = vsel %vm2571, %v2568, 0.0
        %2612 = vadd.xlane.f32.xlu0 %v2611
        %v2613 = vpop.xlane.xlu0 %2612
        %v2614 = vsel %vm2571, %v2569, 0.0
        %2615 = vadd.xlane.f32.xlu0 %v2614
        %v2616 = vpop.xlane.xlu0 %2615
        %v2617 = vsel %vm2571, %v2570, 0.0
        %2618 = vadd.xlane.f32.xlu0 %v2617
        %v2619 = vpop.xlane.xlu0 %2618
        %v2620 = vrcp.pop 16.0
        %v2621 = vmul.f32 %v2574, %v2620
        %v2622 = vmul.f32 %v2577, %v2620
        %v2623 = vmul.f32 %v2580, %v2620
        %v2624 = vmul.f32 %v2583, %v2620
        %v2625 = vmul.f32 %v2586, %v2620
        %v2626 = vmul.f32 %v2589, %v2620
        %v2627 = vmul.f32 %v2592, %v2620
        %v2628 = vmul.f32 %v2595, %v2620
        %v2629 = vmul.f32 %v2598, %v2620
        %v2630 = vmul.f32 %v2601, %v2620
        %v2631 = vmul.f32 %v2604, %v2620
        %v2632 = vmul.f32 %v2607, %v2620
        %v2633 = vmul.f32 %v2610, %v2620
        %v2634 = vmul.f32 %v2613, %v2620
        %v2635 = vmul.f32 %v2616, %v2620
        %v2636 = vmul.f32 %v2619, %v2620
        %v2637 = vsub.f32 %v2555, %v2621
        %v2638 = vsub.f32 %v2556, %v2622
        %v2639 = vsub.f32 %v2557, %v2623
        %v2640 = vsub.f32 %v2558, %v2624
        %v2641 = vsub.f32 %v2559, %v2625
        %v2642 = vsub.f32 %v2560, %v2626
        %v2643 = vsub.f32 %v2561, %v2627
        %v2644 = vsub.f32 %v2562, %v2628
        %v2645 = vsub.f32 %v2563, %v2629
        %v2646 = vsub.f32 %v2564, %v2630
        %v2647 = vsub.f32 %v2565, %v2631
        %v2648 = vsub.f32 %v2566, %v2632
        %v2649 = vsub.f32 %v2567, %v2633
        %v2650 = vsub.f32 %v2568, %v2634
        %v2651 = vsub.f32 %v2569, %v2635
        %v2652 = vsub.f32 %v2570, %v2636
        %v2653 = vmul.f32 %v2637, %v2637
        %v2654 = vmul.f32 %v2638, %v2638
        %v2655 = vmul.f32 %v2639, %v2639
        %v2656 = vmul.f32 %v2640, %v2640
        %v2657 = vmul.f32 %v2641, %v2641
        %v2658 = vmul.f32 %v2642, %v2642
        %v2659 = vmul.f32 %v2643, %v2643
        %v2660 = vmul.f32 %v2644, %v2644
        %v2661 = vmul.f32 %v2645, %v2645
        %v2662 = vmul.f32 %v2646, %v2646
        %v2663 = vmul.f32 %v2647, %v2647
        %v2664 = vmul.f32 %v2648, %v2648
        %v2665 = vmul.f32 %v2649, %v2649
        %v2666 = vmul.f32 %v2650, %v2650
        %v2667 = vmul.f32 %v2651, %v2651
        %v2668 = vmul.f32 %v2652, %v2652
        %v2669 = vsel %vm2571, %v2653, 0.0
        %2670 = vadd.xlane.f32.xlu0 %v2669
        %v2671 = vpop.xlane.xlu0 %2670
        %v2672 = vsel %vm2571, %v2654, 0.0
        %2673 = vadd.xlane.f32.xlu0 %v2672
        %v2674 = vpop.xlane.xlu0 %2673
        %v2675 = vsel %vm2571, %v2655, 0.0
        %2676 = vadd.xlane.f32.xlu0 %v2675
        %v2677 = vpop.xlane.xlu0 %2676
        %v2678 = vsel %vm2571, %v2656, 0.0
        %2679 = vadd.xlane.f32.xlu0 %v2678
        %v2680 = vpop.xlane.xlu0 %2679
        %v2681 = vsel %vm2571, %v2657, 0.0
        %2682 = vadd.xlane.f32.xlu0 %v2681
        %v2683 = vpop.xlane.xlu0 %2682
        %v2684 = vsel %vm2571, %v2658, 0.0
        %2685 = vadd.xlane.f32.xlu0 %v2684
        %v2686 = vpop.xlane.xlu0 %2685
        %v2687 = vsel %vm2571, %v2659, 0.0
        %2688 = vadd.xlane.f32.xlu0 %v2687
        %v2689 = vpop.xlane.xlu0 %2688
        %v2690 = vsel %vm2571, %v2660, 0.0
        %2691 = vadd.xlane.f32.xlu0 %v2690
        %v2692 = vpop.xlane.xlu0 %2691
        %v2693 = vsel %vm2571, %v2661, 0.0
        %2694 = vadd.xlane.f32.xlu0 %v2693
        %v2695 = vpop.xlane.xlu0 %2694
        %v2696 = vsel %vm2571, %v2662, 0.0
        %2697 = vadd.xlane.f32.xlu0 %v2696
        %v2698 = vpop.xlane.xlu0 %2697
        %v2699 = vsel %vm2571, %v2663, 0.0
        %2700 = vadd.xlane.f32.xlu0 %v2699
        %v2701 = vpop.xlane.xlu0 %2700
        %v2702 = vsel %vm2571, %v2664, 0.0
        %2703 = vadd.xlane.f32.xlu0 %v2702
        %v2704 = vpop.xlane.xlu0 %2703
        %v2705 = vsel %vm2571, %v2665, 0.0
        %2706 = vadd.xlane.f32.xlu0 %v2705
        %v2707 = vpop.xlane.xlu0 %2706
        %v2708 = vsel %vm2571, %v2666, 0.0
        %2709 = vadd.xlane.f32.xlu0 %v2708
        %v2710 = vpop.xlane.xlu0 %2709
        %v2711 = vsel %vm2571, %v2667, 0.0
        %2712 = vadd.xlane.f32.xlu0 %v2711
        %v2713 = vpop.xlane.xlu0 %2712
        %v2714 = vsel %vm2571, %v2668, 0.0
        %2715 = vadd.xlane.f32.xlu0 %v2714
        %v2716 = vpop.xlane.xlu0 %2715
        %v2717 = vmul.f32 %v2671, %v2620
        %v2718 = vmul.f32 %v2674, %v2620
        %v2719 = vmul.f32 %v2677, %v2620
        %v2720 = vmul.f32 %v2680, %v2620
        %v2721 = vmul.f32 %v2683, %v2620
        %v2722 = vmul.f32 %v2686, %v2620
        %v2723 = vmul.f32 %v2689, %v2620
        %v2724 = vmul.f32 %v2692, %v2620
        %v2725 = vmul.f32 %v2695, %v2620
        %v2726 = vmul.f32 %v2698, %v2620
        %v2727 = vmul.f32 %v2701, %v2620
        %v2728 = vmul.f32 %v2704, %v2620
        %v2729 = vmul.f32 %v2707, %v2620
        %v2730 = vmul.f32 %v2710, %v2620
        %v2731 = vmul.f32 %v2713, %v2620
        %v2732 = vmul.f32 %v2716, %v2620
        %v2733 = vadd.f32 %v2717, 1e-06
        %v2734 = vadd.f32 %v2718, 1e-06
        %v2735 = vadd.f32 %v2719, 1e-06
        %v2736 = vadd.f32 %v2720, 1e-06
        %v2737 = vadd.f32 %v2721, 1e-06
        %v2738 = vadd.f32 %v2722, 1e-06
        %v2739 = vadd.f32 %v2723, 1e-06
        %v2740 = vadd.f32 %v2724, 1e-06
        %v2741 = vadd.f32 %v2725, 1e-06
        %v2742 = vadd.f32 %v2726, 1e-06
        %v2743 = vadd.f32 %v2727, 1e-06
        %v2744 = vadd.f32 %v2728, 1e-06
        %v2745 = vadd.f32 %v2729, 1e-06
        %v2746 = vadd.f32 %v2730, 1e-06
        %v2747 = vadd.f32 %v2731, 1e-06
        %v2748 = vadd.f32 %v2732, 1e-06
        %v2749 = vrsqrt.pop %v2733
        %v2750 = vrsqrt.pop %v2734
        %v2751 = vrsqrt.pop %v2735
        %v2752 = vrsqrt.pop %v2736
        %v2753 = vrsqrt.pop %v2737
        %v2754 = vrsqrt.pop %v2738
        %v2755 = vrsqrt.pop %v2739
        %v2756 = vrsqrt.pop %v2740
        %v2757 = vrsqrt.pop %v2741
        %v2758 = vrsqrt.pop %v2742
        %v2759 = vrsqrt.pop %v2743
        %v2760 = vrsqrt.pop %v2744
        %v2761 = vrsqrt.pop %v2745
        %v2762 = vrsqrt.pop %v2746
        %v2763 = vrsqrt.pop %v2747
        %v2764 = vrsqrt.pop %v2748
        %v2765 = vmul.f32 %v2637, %v2749
        %v2766 = vmul.f32 %v2638, %v2750
        %v2767 = vmul.f32 %v2639, %v2751
        %v2768 = vmul.f32 %v2640, %v2752
        %v2769 = vmul.f32 %v2641, %v2753
        %v2770 = vmul.f32 %v2642, %v2754
        %v2771 = vmul.f32 %v2643, %v2755
        %v2772 = vmul.f32 %v2644, %v2756
        %v2773 = vmul.f32 %v2645, %v2757
        %v2774 = vmul.f32 %v2646, %v2758
        %v2775 = vmul.f32 %v2647, %v2759
        %v2776 = vmul.f32 %v2648, %v2760
        %v2777 = vmul.f32 %v2649, %v2761
        %v2778 = vmul.f32 %v2650, %v2762
        %v2779 = vmul.f32 %v2651, %v2763
        %v2780 = vmul.f32 %v2652, %v2764
        %v2781 = vld [vmem:[%s3] sm:$0x1]
        %v2783 = vlaneseq
        %v2784 = vshrl.u32 %v2783, 7
        %v2785 = vsub.s32 0, %v2784
        %v2786 = vrot.slane %v2781, %v2785
        %v2788 = vmul.f32 %v2765, %v2786
        %v2789 = vmul.f32 %v2766, %v2786
        %v2790 = vmul.f32 %v2767, %v2786
        %v2791 = vmul.f32 %v2768, %v2786
        %v2792 = vmul.f32 %v2769, %v2786
        %v2793 = vmul.f32 %v2770, %v2786
        %v2794 = vmul.f32 %v2771, %v2786
        %v2795 = vmul.f32 %v2772, %v2786
        %v2796 = vmul.f32 %v2773, %v2786
        %v2797 = vmul.f32 %v2774, %v2786
        %v2798 = vmul.f32 %v2775, %v2786
        %v2799 = vmul.f32 %v2776, %v2786
        %v2800 = vmul.f32 %v2777, %v2786
        %v2801 = vmul.f32 %v2778, %v2786
        %v2802 = vmul.f32 %v2779, %v2786
        %v2803 = vmul.f32 %v2780, %v2786
        %v2804 = vld [vmem:[%s4] sm:$0x1]
        %v2806 = vlaneseq
        %v2807 = vshrl.u32 %v2806, 7
        %v2808 = vsub.s32 0, %v2807
        %v2809 = vrot.slane %v2804, %v2808
        %v2811 = vadd.f32 %v2788, %v2809
        %v2812 = vadd.f32 %v2789, %v2809
        %v2813 = vadd.f32 %v2790, %v2809
        %v2814 = vadd.f32 %v2791, %v2809
        %v2815 = vadd.f32 %v2792, %v2809
        %v2816 = vadd.f32 %v2793, %v2809
        %v2817 = vadd.f32 %v2794, %v2809
        %v2818 = vadd.f32 %v2795, %v2809
        %v2819 = vadd.f32 %v2796, %v2809
        %v2820 = vadd.f32 %v2797, %v2809
        %v2821 = vadd.f32 %v2798, %v2809
        %v2822 = vadd.f32 %v2799, %v2809
        %v2823 = vadd.f32 %v2800, %v2809
        %v2824 = vadd.f32 %v2801, %v2809
        %v2825 = vadd.f32 %v2802, %v2809
        %v2826 = vadd.f32 %v2803, %v2809
        %v2827 = vld [vmem:[%s5] sm:$0xff]
        %v2828 = vld [vmem:[%s5 + $0x8] sm:$0xff]
        %v2829 = vld [vmem:[%s6] sm:$0x1]
        %v2831 = vlaneseq
        %v2832 = vshrl.u32 %v2831, 7
        %v2833 = vsub.s32 0, %v2832
        %v2834 = vrot.slane %v2829, %v2833
        %v2837 = vsel %vm2571, %v2811, 0
        %v2840 = vsel %vm2571, %v2812, 0
        %v2843 = vsel %vm2571, %v2813, 0
        %v2846 = vsel %vm2571, %v2814, 0
        %v2849 = vsel %vm2571, %v2815, 0
        %v2852 = vsel %vm2571, %v2816, 0
        %v2855 = vsel %vm2571, %v2817, 0
        %v2858 = vsel %vm2571, %v2818, 0
        %v2861 = vsel %vm2571, %v2819, 0
        %v2864 = vsel %vm2571, %v2820, 0
        %v2867 = vsel %vm2571, %v2821, 0
        %v2870 = vsel %vm2571, %v2822, 0
        %v2873 = vsel %vm2571, %v2823, 0
        %v2876 = vsel %vm2571, %v2824, 0
        %v2879 = vsel %vm2571, %v2825, 0
        %v2882 = vsel %vm2571, %v2826, 0
        %2884 = vmatprep.subr.mxu0 0.0
        %2885 = vmatpush1.msra.mxu0 %v2827
        %2886 = vmatprep.subr.mxu0 0.0
        %2887 = vmatpush1.msra.mxu0 %v2828
        %2888 = vmatprep.subr.mxu0 0.0
        %2889 = vmatpush1.msra.mxu0 0.0
        %2890 = vmatprep.subr.mxu0 0.0
        %2891 = vmatpush1.msra.mxu0 0.0
        %2892 = vmatprep.subr.mxu0 0.0
        %2893 = vmatpush1.msra.mxu0 0.0
        %2894 = vmatprep.subr.mxu0 0.0
        %2895 = vmatpush1.msra.mxu0 0.0
        %2896 = vmatprep.subr.mxu0 0.0
        %2897 = vmatpush1.msra.mxu0 0.0
        %2898 = vmatprep.subr.mxu0 0.0
        %2899 = vmatpush1.msra.mxu0 0.0
        %2900 = vmatprep.subr.mxu0 0.0
        %2901 = vmatpush1.msra.mxu0 0.0
        %2902 = vmatprep.subr.mxu0 0.0
        %2903 = vmatpush1.msra.mxu0 0.0
        %2904 = vmatprep.subr.mxu0 0.0
        %2905 = vmatpush1.msra.mxu0 0.0
        %2906 = vmatprep.subr.mxu0 0.0
        %2907 = vmatpush1.msra.mxu0 0.0
        %2908 = vmatprep.subr.mxu0 0.0
        %2909 = vmatpush1.msra.mxu0 0.0
        %2910 = vmatprep.subr.mxu0 0.0
        %2911 = vmatpush1.msra.mxu0 0.0
        %2912 = vmatprep.subr.mxu0 0.0
        %2913 = vmatpush1.msra.mxu0 0.0
        %2914 = vmatprep.subr.mxu0 0.0
        %2915 = vmatpush1.msra.mxu0 0.0
        %2916 = vmatprep.subr.mxu0 0.0
        %2917 = vmatpush1.msra.mxu0 0.0
        %2918 = vmatprep.subr.mxu0 0.0
        %2919 = vmatpush1.msra.mxu0 0.0
        %2920 = vmatprep.subr.mxu0 0.0
        %2921 = vmatpush1.msra.mxu0 0.0
        %2922 = vmatprep.subr.mxu0 0.0
        %2923 = vmatpush1.msra.mxu0 0.0
        %2924 = vmatprep.subr.mxu0 0.0
        %2925 = vmatpush1.msra.mxu0 0.0
        %2926 = vmatprep.subr.mxu0 0.0
        %2927 = vmatpush1.msra.mxu0 0.0
        %2928 = vmatprep.subr.mxu0 0.0
        %2929 = vmatpush1.msra.mxu0 0.0
        %2930 = vmatprep.subr.mxu0 0.0
        %2931 = vmatpush1.msra.mxu0 0.0
        %2932 = vmatprep.subr.mxu0 0.0
        %2933 = vmatpush1.msra.mxu0 0.0
        %2934 = vmatprep.subr.mxu0 0.0
        %2935 = vmatpush1.msra.mxu0 0.0
        %2936 = vmatprep.subr.mxu0 0.0
        %2937 = vmatpush1.msra.mxu0 0.0
        %2938 = vmatprep.subr.mxu0 0.0
        %2939 = vmatpush1.msra.mxu0 0.0
        %2940 = vmatprep.subr.mxu0 0.0
        %2941 = vmatpush1.msra.mxu0 0.0
        %2942 = vmatprep.subr.mxu0 0.0
        %2943 = vmatpush1.msra.mxu0 0.0
        %2944 = vmatprep.subr.mxu0 0.0
        %2945 = vmatpush1.msra.mxu0 0.0
        %2946 = vmatprep.subr.mxu0 0.0
        %2947 = vmatpush1.msra.mxu0 0.0
        %2948 = vmatprep.mubr.f32.mxu0 0.0
        %2949 = vmatmul.mubr.f32.gmra.mrb[0].mxu0 %v2837
        %v2950 = vpop.f32.mrb[0].mxu0
        %v2951 = vadd.f32 %v2834, %v2950
        %v2952 = vpop.f32.mrb[0].mxu0
        %2953 = vmatprep.mubr.f32.mxu0 0.0
        %2954 = vmatmul.mubr.f32.gmra.mrb[0].mxu0 %v2840
        %v2955 = vpop.f32.mrb[0].mxu0
        %v2956 = vadd.f32 %v2834, %v2955
        %v2957 = vpop.f32.mrb[0].mxu0
        %2958 = vmatprep.mubr.f32.mxu0 0.0
        %2959 = vmatmul.mubr.f32.gmra.mrb[0].mxu0 %v2843
        %v2960 = vpop.f32.mrb[0].mxu0
        %v2961 = vadd.f32 %v2834, %v2960
        %v2962 = vpop.f32.mrb[0].mxu0
        %2963 = vmatprep.mubr.f32.mxu0 0.0
        %2964 = vmatmul.mubr.f32.gmra.mrb[0].mxu0 %v2846
        %v2965 = vpop.f32.mrb[0].mxu0
        %v2966 = vadd.f32 %v2834, %v2965
        %v2967 = vpop.f32.mrb[0].mxu0
        %2968 = vmatprep.mubr.f32.mxu0 0.0
        %2969 = vmatmul.mubr.f32.gmra.mrb[0].mxu0 %v2849
        %v2970 = vpop.f32.mrb[0].mxu0
        %v2971 = vadd.f32 %v2834, %v2970
        %v2972 = vpop.f32.mrb[0].mxu0
        %2973 = vmatprep.mubr.f32.mxu0 0.0
        %2974 = vmatmul.mubr.f32.gmra.mrb[0].mxu0 %v2852
        %v2975 = vpop.f32.mrb[0].mxu0
        %v2976 = vadd.f32 %v2834, %v2975
        %v2977 = vpop.f32.mrb[0].mxu0
        %2978 = vmatprep.mubr.f32.mxu0 0.0
        %2979 = vmatmul.mubr.f32.gmra.mrb[0].mxu0 %v2855
        %v2980 = vpop.f32.mrb[0].mxu0
        %v2981 = vadd.f32 %v2834, %v2980
        %v2982 = vpop.f32.mrb[0].mxu0
        %2983 = vmatprep.mubr.f32.mxu0 0.0
        %2984 = vmatmul.mubr.f32.gmra.mrb[0].mxu0 %v2858
        %v2985 = vpop.f32.mrb[0].mxu0
        %v2986 = vadd.f32 %v2834, %v2985
        %v2987 = vpop.f32.mrb[0].mxu0
        %2988 = vmatprep.mubr.f32.mxu0 0.0
        %2989 = vmatmul.mubr.f32.gmra.mrb[0].mxu0 %v2861
        %v2990 = vpop.f32.mrb[0].mxu0
        %v2991 = vadd.f32 %v2834, %v2990
        %v2992 = vpop.f32.mrb[0].mxu0
        %2993 = vmatprep.mubr.f32.mxu0 0.0
        %2994 = vmatmul.mubr.f32.gmra.mrb[0].mxu0 %v2864
        %v2995 = vpop.f32.mrb[0].mxu0
        %v2996 = vadd.f32 %v2834, %v2995
        %v2997 = vpop.f32.mrb[0].mxu0
        %2998 = vmatprep.mubr.f32.mxu0 0.0
        %2999 = vmatmul.mubr.f32.gmra.mrb[0].mxu0 %v2867
        %v3000 = vpop.f32.mrb[0].mxu0
        %v3001 = vadd.f32 %v2834, %v3000
        %v3002 = vpop.f32.mrb[0].mxu0
        %3003 = vmatprep.mubr.f32.mxu0 0.0
        %3004 = vmatmul.mubr.f32.gmra.mrb[0].mxu0 %v2870
        %v3005 = vpop.f32.mrb[0].mxu0
        %v3006 = vadd.f32 %v2834, %v3005
        %v3007 = vpop.f32.mrb[0].mxu0
        %3008 = vmatprep.mubr.f32.mxu0 0.0
        %3009 = vmatmul.mubr.f32.gmra.mrb[0].mxu0 %v2873
        %v3010 = vpop.f32.mrb[0].mxu0
        %v3011 = vadd.f32 %v2834, %v3010
        %v3012 = vpop.f32.mrb[0].mxu0
        %3013 = vmatprep.mubr.f32.mxu0 0.0
        %3014 = vmatmul.mubr.f32.gmra.mrb[0].mxu0 %v2876
        %v3015 = vpop.f32.mrb[0].mxu0
        %v3016 = vadd.f32 %v2834, %v3015
        %v3017 = vpop.f32.mrb[0].mxu0
        %3018 = vmatprep.mubr.f32.mxu0 0.0
        %3019 = vmatmul.mubr.f32.gmra.mrb[0].mxu0 %v2879
        %v3020 = vpop.f32.mrb[0].mxu0
        %v3021 = vadd.f32 %v2834, %v3020
        %v3022 = vpop.f32.mrb[0].mxu0
        %3023 = vmatprep.mubr.f32.mxu0 0.0
        %3024 = vmatmul.mubr.f32.gmra.mrb[0].mxu0 %v2882
        %v3025 = vpop.f32.mrb[0].mxu0
        %v3026 = vadd.f32 %v2834, %v3025
        %v3027 = vpop.f32.mrb[0].mxu0
        %3028 = vdwg.mxu0
        %v3029 = vmul.f32 %v2951, 0.5
        %v3030 = vmul.f32 %v2956, 0.5
        %v3031 = vmul.f32 %v2961, 0.5
        %v3032 = vmul.f32 %v2966, 0.5
        %v3033 = vmul.f32 %v2971, 0.5
        %v3034 = vmul.f32 %v2976, 0.5
        %v3035 = vmul.f32 %v2981, 0.5
        %v3036 = vmul.f32 %v2986, 0.5
        %v3037 = vmul.f32 %v2991, 0.5
        %v3038 = vmul.f32 %v2996, 0.5
        %v3039 = vmul.f32 %v3001, 0.5
        %v3040 = vmul.f32 %v3006, 0.5
        %v3041 = vmul.f32 %v3011, 0.5
        %v3042 = vmul.f32 %v3016, 0.5
        %v3043 = vmul.f32 %v3021, 0.5
        %v3044 = vmul.f32 %v3026, 0.5
        %v3045 = vmul.f32 %v2951, 0.70710677
        %v3046 = vmul.f32 %v2956, 0.70710677
        %v3047 = vmul.f32 %v2961, 0.70710677
        %v3048 = vmul.f32 %v2966, 0.70710677
        %v3049 = vmul.f32 %v2971, 0.70710677
        %v3050 = vmul.f32 %v2976, 0.70710677
        %v3051 = vmul.f32 %v2981, 0.70710677
        %v3052 = vmul.f32 %v2986, 0.70710677
        %v3053 = vmul.f32 %v2991, 0.70710677
        %v3054 = vmul.f32 %v2996, 0.70710677
        %v3055 = vmul.f32 %v3001, 0.70710677
        %v3056 = vmul.f32 %v3006, 0.70710677
        %v3057 = vmul.f32 %v3011, 0.70710677
        %v3058 = vmul.f32 %v3016, 0.70710677
        %v3059 = vmul.f32 %v3021, 0.70710677
        %v3060 = vmul.f32 %v3026, 0.70710677
        %v3061 = verf.f32.pop %v3045
        %v3062 = verf.f32.pop %v3046
        %v3063 = verf.f32.pop %v3047
        %v3064 = verf.f32.pop %v3048
        %v3065 = verf.f32.pop %v3049
        %v3066 = verf.f32.pop %v3050
        %v3067 = verf.f32.pop %v3051
        %v3068 = verf.f32.pop %v3052
        %v3069 = verf.f32.pop %v3053
        %v3070 = verf.f32.pop %v3054
        %v3071 = verf.f32.pop %v3055
        %v3072 = verf.f32.pop %v3056
        %v3073 = verf.f32.pop %v3057
        %v3074 = verf.f32.pop %v3058
        %v3075 = verf.f32.pop %v3059
        %v3076 = verf.f32.pop %v3060
        %v3077 = vadd.f32 %v3061, 1.0
        %v3078 = vadd.f32 %v3062, 1.0
        %v3079 = vadd.f32 %v3063, 1.0
        %v3080 = vadd.f32 %v3064, 1.0
        %v3081 = vadd.f32 %v3065, 1.0
        %v3082 = vadd.f32 %v3066, 1.0
        %v3083 = vadd.f32 %v3067, 1.0
        %v3084 = vadd.f32 %v3068, 1.0
        %v3085 = vadd.f32 %v3069, 1.0
        %v3086 = vadd.f32 %v3070, 1.0
        %v3087 = vadd.f32 %v3071, 1.0
        %v3088 = vadd.f32 %v3072, 1.0
        %v3089 = vadd.f32 %v3073, 1.0
        %v3090 = vadd.f32 %v3074, 1.0
        %v3091 = vadd.f32 %v3075, 1.0
        %v3092 = vadd.f32 %v3076, 1.0
        %v3093 = vmul.f32 %v3029, %v3077
        %v3094 = vmul.f32 %v3030, %v3078
        %v3095 = vmul.f32 %v3031, %v3079
        %v3096 = vmul.f32 %v3032, %v3080
        %v3097 = vmul.f32 %v3033, %v3081
        %v3098 = vmul.f32 %v3034, %v3082
        %v3099 = vmul.f32 %v3035, %v3083
        %v3100 = vmul.f32 %v3036, %v3084
        %v3101 = vmul.f32 %v3037, %v3085
        %v3102 = vmul.f32 %v3038, %v3086
        %v3103 = vmul.f32 %v3039, %v3087
        %v3104 = vmul.f32 %v3040, %v3088
        %v3105 = vmul.f32 %v3041, %v3089
        %v3106 = vmul.f32 %v3042, %v3090
        %v3107 = vmul.f32 %v3043, %v3091
        %v3108 = vmul.f32 %v3044, %v3092
        %v3109 = vld [vmem:[%s7] sm:$0xff]
        %v3110 = vld [vmem:[%s7 + $0x8] sm:$0xff]
        %v3111 = vld [vmem:[%s7 + $0x10] sm:$0xff]
        %v3112 = vld [vmem:[%s7 + $0x18] sm:$0xff]
        %v3113 = vld [vmem:[%s7 + $0x20] sm:$0xff]
        %v3114 = vld [vmem:[%s7 + $0x28] sm:$0xff]
        %v3115 = vld [vmem:[%s7 + $0x30] sm:$0xff]
        %v3116 = vld [vmem:[%s7 + $0x38] sm:$0xff]
        %v3117 = vld [vmem:[%s8] sm:$0x1]
        %v3119 = vlaneseq
        %v3120 = vshrl.u32 %v3119, 7
        %v3121 = vsub.s32 0, %v3120
        %v3122 = vrot.slane %v3117, %v3121
        %vm3124 = vcmask 523264
        %v3126 = vsel %vm3124, %v3093, 0
        %v3129 = vsel %vm3124, %v3094, 0
        %v3132 = vsel %vm3124, %v3095, 0
        %v3135 = vsel %vm3124, %v3096, 0
        %v3138 = vsel %vm3124, %v3097, 0
        %v3141 = vsel %vm3124, %v3098, 0
        %v3144 = vsel %vm3124, %v3099, 0
        %v3147 = vsel %vm3124, %v3100, 0
        %v3150 = vsel %vm3124, %v3101, 0
        %v3153 = vsel %vm3124, %v3102, 0
        %v3156 = vsel %vm3124, %v3103, 0
        %v3159 = vsel %vm3124, %v3104, 0
        %v3162 = vsel %vm3124, %v3105, 0
        %v3165 = vsel %vm3124, %v3106, 0
        %v3168 = vsel %vm3124, %v3107, 0
        %v3171 = vsel %vm3124, %v3108, 0
        %3173 = vmatprep.subr.mxu0 0.0
        %3174 = vmatpush1.msra.mxu0 %v3109
        %3175 = vmatprep.subr.mxu0 0.0
        %3176 = vmatpush1.msra.mxu0 %v3110
        %3177 = vmatprep.subr.mxu0 0.0
        %3178 = vmatpush1.msra.mxu0 %v3111
        %3179 = vmatprep.subr.mxu0 0.0
        %3180 = vmatpush1.msra.mxu0 %v3112
        %3181 = vmatprep.subr.mxu0 0.0
        %3182 = vmatpush1.msra.mxu0 %v3113
        %3183 = vmatprep.subr.mxu0 0.0
        %3184 = vmatpush1.msra.mxu0 %v3114
        %3185 = vmatprep.subr.mxu0 0.0
        %3186 = vmatpush1.msra.mxu0 %v3115
        %3187 = vmatprep.subr.mxu0 0.0
        %3188 = vmatpush1.msra.mxu0 %v3116
        %3189 = vmatprep.subr.mxu0 0.0
        %3190 = vmatpush1.msra.mxu0 0.0
        %3191 = vmatprep.subr.mxu0 0.0
        %3192 = vmatpush1.msra.mxu0 0.0
        %3193 = vmatprep.subr.mxu0 0.0
        %3194 = vmatpush1.msra.mxu0 0.0
        %3195 = vmatprep.subr.mxu0 0.0
        %3196 = vmatpush1.msra.mxu0 0.0
        %3197 = vmatprep.subr.mxu0 0.0
        %3198 = vmatpush1.msra.mxu0 0.0
        %3199 = vmatprep.subr.mxu0 0.0
        %3200 = vmatpush1.msra.mxu0 0.0
        %3201 = vmatprep.subr.mxu0 0.0
        %3202 = vmatpush1.msra.mxu0 0.0
        %3203 = vmatprep.subr.mxu0 0.0
        %3204 = vmatpush1.msra.mxu0 0.0
        %3205 = vmatprep.subr.mxu0 0.0
        %3206 = vmatpush1.msra.mxu0 0.0
        %3207 = vmatprep.subr.mxu0 0.0
        %3208 = vmatpush1.msra.mxu0 0.0
        %3209 = vmatprep.subr.mxu0 0.0
        %3210 = vmatpush1.msra.mxu0 0.0
        %3211 = vmatprep.subr.mxu0 0.0
        %3212 = vmatpush1.msra.mxu0 0.0
        %3213 = vmatprep.subr.mxu0 0.0
        %3214 = vmatpush1.msra.mxu0 0.0
        %3215 = vmatprep.subr.mxu0 0.0
        %3216 = vmatpush1.msra.mxu0 0.0
        %3217 = vmatprep.subr.mxu0 0.0
        %3218 = vmatpush1.msra.mxu0 0.0
        %3219 = vmatprep.subr.mxu0 0.0
        %3220 = vmatpush1.msra.mxu0 0.0
        %3221 = vmatprep.subr.mxu0 0.0
        %3222 = vmatpush1.msra.mxu0 0.0
        %3223 = vmatprep.subr.mxu0 0.0
        %3224 = vmatpush1.msra.mxu0 0.0
        %3225 = vmatprep.subr.mxu0 0.0
        %3226 = vmatpush1.msra.mxu0 0.0
        %3227 = vmatprep.subr.mxu0 0.0
        %3228 = vmatpush1.msra.mxu0 0.0
        %3229 = vmatprep.subr.mxu0 0.0
        %3230 = vmatpush1.msra.mxu0 0.0
        %3231 = vmatprep.subr.mxu0 0.0
        %3232 = vmatpush1.msra.mxu0 0.0
        %3233 = vmatprep.subr.mxu0 0.0
        %3234 = vmatpush1.msra.mxu0 0.0
        %3235 = vmatprep.subr.mxu0 0.0
        %3236 = vmatpush1.msra.mxu0 0.0
        %3237 = vmatprep.mubr.f32.mxu0 0.0
        %3238 = vmatmul.mubr.f32.gmra.mrb[0].mxu0 %v3126
        %v3239 = vpop.f32.mrb[0].mxu0
        %v3240 = vadd.f32 %v3122, %v3239
        %v3241 = vpop.f32.mrb[0].mxu0
        %3242 = vmatprep.mubr.f32.mxu0 0.0
        %3243 = vmatmul.mubr.f32.gmra.mrb[0].mxu0 %v3129
        %v3244 = vpop.f32.mrb[0].mxu0
        %v3245 = vadd.f32 %v3122, %v3244
        %v3246 = vpop.f32.mrb[0].mxu0
        %3247 = vmatprep.mubr.f32.mxu0 0.0
        %3248 = vmatmul.mubr.f32.gmra.mrb[0].mxu0 %v3132
        %v3249 = vpop.f32.mrb[0].mxu0
        %v3250 = vadd.f32 %v3122, %v3249
        %v3251 = vpop.f32.mrb[0].mxu0
        %3252 = vmatprep.mubr.f32.mxu0 0.0
        %3253 = vmatmul.mubr.f32.gmra.mrb[0].mxu0 %v3135
        %v3254 = vpop.f32.mrb[0].mxu0
        %v3255 = vadd.f32 %v3122, %v3254
        %v3256 = vpop.f32.mrb[0].mxu0
        %3257 = vmatprep.mubr.f32.mxu0 0.0
        %3258 = vmatmul.mubr.f32.gmra.mrb[0].mxu0 %v3138
        %v3259 = vpop.f32.mrb[0].mxu0
        %v3260 = vadd.f32 %v3122, %v3259
        %v3261 = vpop.f32.mrb[0].mxu0
        %3262 = vmatprep.mubr.f32.mxu0 0.0
        %3263 = vmatmul.mubr.f32.gmra.mrb[0].mxu0 %v3141
        %v3264 = vpop.f32.mrb[0].mxu0
        %v3265 = vadd.f32 %v3122, %v3264
        %v3266 = vpop.f32.mrb[0].mxu0
        %3267 = vmatprep.mubr.f32.mxu0 0.0
        %3268 = vmatmul.mubr.f32.gmra.mrb[0].mxu0 %v3144
        %v3269 = vpop.f32.mrb[0].mxu0
        %v3270 = vadd.f32 %v3122, %v3269
        %v3271 = vpop.f32.mrb[0].mxu0
        %3272 = vmatprep.mubr.f32.mxu0 0.0
        %3273 = vmatmul.mubr.f32.gmra.mrb[0].mxu0 %v3147
        %v3274 = vpop.f32.mrb[0].mxu0
        %v3275 = vadd.f32 %v3122, %v3274
        %v3276 = vpop.f32.mrb[0].mxu0
        %3277 = vmatprep.mubr.f32.mxu0 0.0
        %3278 = vmatmul.mubr.f32.gmra.mrb[0].mxu0 %v3150
        %v3279 = vpop.f32.mrb[0].mxu0
        %v3280 = vadd.f32 %v3122, %v3279
        %v3281 = vpop.f32.mrb[0].mxu0
        %3282 = vmatprep.mubr.f32.mxu0 0.0
        %3283 = vmatmul.mubr.f32.gmra.mrb[0].mxu0 %v3153
        %v3284 = vpop.f32.mrb[0].mxu0
        %v3285 = vadd.f32 %v3122, %v3284
        %v3286 = vpop.f32.mrb[0].mxu0
        %3287 = vmatprep.mubr.f32.mxu0 0.0
        %3288 = vmatmul.mubr.f32.gmra.mrb[0].mxu0 %v3156
        %v3289 = vpop.f32.mrb[0].mxu0
        %v3290 = vadd.f32 %v3122, %v3289
        %v3291 = vpop.f32.mrb[0].mxu0
        %3292 = vmatprep.mubr.f32.mxu0 0.0
        %3293 = vmatmul.mubr.f32.gmra.mrb[0].mxu0 %v3159
        %v3294 = vpop.f32.mrb[0].mxu0
        %v3295 = vadd.f32 %v3122, %v3294
        %v3296 = vpop.f32.mrb[0].mxu0
        %3297 = vmatprep.mubr.f32.mxu0 0.0
        %3298 = vmatmul.mubr.f32.gmra.mrb[0].mxu0 %v3162
        %v3299 = vpop.f32.mrb[0].mxu0
        %v3300 = vadd.f32 %v3122, %v3299
        %v3301 = vpop.f32.mrb[0].mxu0
        %3302 = vmatprep.mubr.f32.mxu0 0.0
        %3303 = vmatmul.mubr.f32.gmra.mrb[0].mxu0 %v3165
        %v3304 = vpop.f32.mrb[0].mxu0
        %v3305 = vadd.f32 %v3122, %v3304
        %v3306 = vpop.f32.mrb[0].mxu0
        %3307 = vmatprep.mubr.f32.mxu0 0.0
        %3308 = vmatmul.mubr.f32.gmra.mrb[0].mxu0 %v3168
        %v3309 = vpop.f32.mrb[0].mxu0
        %v3310 = vadd.f32 %v3122, %v3309
        %v3311 = vpop.f32.mrb[0].mxu0
        %3312 = vmatprep.mubr.f32.mxu0 0.0
        %3313 = vmatmul.mubr.f32.gmra.mrb[0].mxu0 %v3171
        %v3314 = vpop.f32.mrb[0].mxu0
        %v3315 = vadd.f32 %v3122, %v3314
        %v3316 = vpop.f32.mrb[0].mxu0
        %3317 = vdwg.mxu0
        %v3318 = vld [vmem:[%s9] sm:$0x1]
        %v3320 = vlaneseq
        %v3321 = vshrl.u32 %v3320, 7
        %v3322 = vsub.s32 0, %v3321
        %v3323 = vrot.slane %v3318, %v3322
        %v3325 = vmul.f32 %v3240, %v3323
        %v3326 = vmul.f32 %v3245, %v3323
        %v3327 = vmul.f32 %v3250, %v3323
        %v3328 = vmul.f32 %v3255, %v3323
        %v3329 = vmul.f32 %v3260, %v3323
        %v3330 = vmul.f32 %v3265, %v3323
        %v3331 = vmul.f32 %v3270, %v3323
        %v3332 = vmul.f32 %v3275, %v3323
        %v3333 = vmul.f32 %v3280, %v3323
        %v3334 = vmul.f32 %v3285, %v3323
        %v3335 = vmul.f32 %v3290, %v3323
        %v3336 = vmul.f32 %v3295, %v3323
        %v3337 = vmul.f32 %v3300, %v3323
        %v3338 = vmul.f32 %v3305, %v3323
        %v3339 = vmul.f32 %v3310, %v3323
        %v3340 = vmul.f32 %v3315, %v3323
        %v3341 = vmul.f32 %v3325, 2.0
        %v3342 = vmul.f32 %v3326, 2.0
        %v3343 = vmul.f32 %v3327, 2.0
        %v3344 = vmul.f32 %v3328, 2.0
        %v3345 = vmul.f32 %v3329, 2.0
        %v3346 = vmul.f32 %v3330, 2.0
        %v3347 = vmul.f32 %v3331, 2.0
        %v3348 = vmul.f32 %v3332, 2.0
        %v3349 = vmul.f32 %v3333, 2.0
        %v3350 = vmul.f32 %v3334, 2.0
        %v3351 = vmul.f32 %v3335, 2.0
        %v3352 = vmul.f32 %v3336, 2.0
        %v3353 = vmul.f32 %v3337, 2.0
        %v3354 = vmul.f32 %v3338, 2.0
        %v3355 = vmul.f32 %v3339, 2.0
        %v3356 = vmul.f32 %v3340, 2.0
        %3357 = vst.msk [vmem:[%s391] sm:$0xff] %vm2571, %v3341
        %3358 = vst.msk [vmem:[%s391 + $0x8] sm:$0xff] %vm2571, %v3342
        %3359 = vst.msk [vmem:[%s391 + $0x10] sm:$0xff] %vm2571, %v3343
        %3360 = vst.msk [vmem:[%s391 + $0x18] sm:$0xff] %vm2571, %v3344
        %3361 = vst.msk [vmem:[%s391 + $0x20] sm:$0xff] %vm2571, %v3345
        %3362 = vst.msk [vmem:[%s391 + $0x28] sm:$0xff] %vm2571, %v3346
        %3363 = vst.msk [vmem:[%s391 + $0x30] sm:$0xff] %vm2571, %v3347
        %3364 = vst.msk [vmem:[%s391 + $0x38] sm:$0xff] %vm2571, %v3348
        %3365 = vst.msk [vmem:[%s391 + $0x40] sm:$0xff] %vm2571, %v3349
        %3366 = vst.msk [vmem:[%s391 + $0x48] sm:$0xff] %vm2571, %v3350
        %3367 = vst.msk [vmem:[%s391 + $0x50] sm:$0xff] %vm2571, %v3351
        %3368 = vst.msk [vmem:[%s391 + $0x58] sm:$0xff] %vm2571, %v3352
        %3369 = vst.msk [vmem:[%s391 + $0x60] sm:$0xff] %vm2571, %v3353
        %3370 = vst.msk [vmem:[%s391 + $0x68] sm:$0xff] %vm2571, %v3354
        %3371 = vst.msk [vmem:[%s391 + $0x70] sm:$0xff] %vm2571, %v3355
        %3372 = vst.msk [vmem:[%s391 + $0x78] sm:$0xff] %vm2571, %v3356
        %s3373 = sand.u32 %s264, 1
        %s3374 = scalar_lea.sflag [#allocation5], %s3373
        %s3375 = sand.u32 %s264, 1
        %s3376 = smul.addr %s3375, 128
        %s3377 = scalar_lea.vmem [#allocation6], %s3376
        // Predicated region
        $region69: #{tpu_custom_call.1} parent=59 // pred_check
          %p3378 = pneg %p274
        $region70: #{tpu_custom_call.1} parent=59 // pred_check_branch
          %3380 = sbr.rel (%p3378) target = $region72
        $region71: #{tpu_custom_call.1} parent=59 // pred_region
          %s3381 = smul.u32 8, %s32
          %s3383 = ssub.s32 2048, 2048
          %3384 = vsyncadd %s3374, %s3383
          %s3385 = smul.addr %s3381, 2
          %s3386 = smul.addr %s31, 32
          %s3387 = sadd.s32 %s3385, %s3386
          %s3388 = smul.addr %s3387, 128
          %s3389 = scalar_lea.hbm %s10, %s3388
          %s3390 = sshll.u32 %s3377, 4
          %s3391 = int_to_ptr.vmem [resolvable:$true] %s3390
          %3396 = dma.vmem_to_hbm [thread:$0]  %s3391, 2048, %s3389, %s3374, 128, 128, 8
        $region72: #{tpu_custom_call.1} parent=59 // pred_fallthru
          _
      $region60: #{tpu_custom_call.1} parent=5 // pred_fallthru
        _
      %p3397 = scmp.le.s32.totalorder 2, %s22
      // Predicated region
      $region73: #{tpu_custom_call.1} parent=5 // pred_check
        %p3398 = pneg %p3397
      $region74: #{tpu_custom_call.1} parent=5 // pred_check_branch
        %3400 = sbr.rel (%p3398) target = $region76
      $region75: #{tpu_custom_call.1} parent=5 // pred_region
        %s3401 = ssub.s32 %s22, 2
        // Predicated region
        $region77: #{tpu_custom_call.1} parent=75 // pred_check
          %p3402 = pneg %p280
        $region78: #{tpu_custom_call.1} parent=75 // pred_check_branch
          %3404 = sbr.rel (%p3402) target = $region80
        $region79: #{tpu_custom_call.1} parent=75 // pred_region
          %s3405 = sand.u32 %s265, 1
          %s3406 = scalar_lea.sflag [#allocation5], %s3405
          %s3407 = sand.u32 %s265, 1
          %s3408 = smul.addr %s3407, 128
          %s3409 = scalar_lea.vmem [#allocation6], %s3408
          %3410 = dma.done %s3406, 2048
        $region80: #{tpu_custom_call.1} parent=75 // pred_fallthru
          _
      $region76: #{tpu_custom_call.1} parent=5 // pred_fallthru
        _
    $region6: #{tpu_custom_call.1} parent=1 // loop_footer
      %s26 = sadd.s32 1, %s22
    $region7: #{tpu_custom_call.1} parent=1 // loop_footer_branch
      %21 = sbr.rel target = $region3
    $region8: #{tpu_custom_call.1} parent=1 // loop_exit
      _
    %3411 = vsyncpa [#allocation4], 1
    %s3412 = scalar_lea.sflag [#allocation4], 1
    %3413 = vsyncpa %s3412, 1
    %3414 = vsyncpa [#allocation5], 1
    %s3415 = scalar_lea.sflag [#allocation5], 1
    %3416 = vsyncpa %s3415, 1

</llo_original>
